<compile_context>
chip_gen: v7x
topology: tpu7x:2x2x1
jax: 0.10.0
libtpu: 0.0.40
codegen_flags: <defaults>
</compile_context>

<pallas_src>
import functools

import jax
import jax.numpy as jnp
import numpy as np
from jax.experimental import pallas as pl
from jax.experimental.pallas import tpu as pltpu

N_POINTS = 1568   # fixed by fc1 = nn.Linear(1568, 128)
H1 = 128
H2 = 32


def _lkn_kernel(S, x0_ref, x1_ref, x2_ref, w1t_ref, w0_ref, beff_ref,
                w2t_ref, b2_ref, w3b_ref, b3t_ref, out_ref):
    tb = x0_ref.shape[0]

    # fc1 (with fc0 folded in): three (TB, 1568) @ (1568, 128) bf16 matmuls,
    # f32 accumulation, contraction on the last axis of both operands.
    y0 = jnp.dot(x0_ref[...], w1t_ref[...], preferred_element_type=jnp.float32)
    y1 = jnp.dot(x1_ref[...], w1t_ref[...], preferred_element_type=jnp.float32)
    y2 = jnp.dot(x2_ref[...], w1t_ref[...], preferred_element_type=jnp.float32)

    w0 = w0_ref[...]       # (S, 3)    f32
    beff = beff_ref[...]   # (S, 128)  f32  (folded fc0/fc1 bias)
    w2t = w2t_ref[...]     # (128, 32) f32
    b2 = b2_ref[...]       # (1, 32)   f32

    acc = jnp.zeros((tb, H2 * H2), jnp.float32)
    for s in range(S):     # S is small and static -> unrolled
        # fc0 fold + ReLU: pure VPU broadcast FMAs on (TB, 128) tiles.
        h1 = (y0 * w0[s:s + 1, 0:1] + y1 * w0[s:s + 1, 1:2]
              + y2 * w0[s:s + 1, 2:3] + beff[s:s + 1, :])
        h1 = jnp.maximum(h1, 0.0)
        # fc2 + ReLU: (TB, 128) @ (128, 32), f32.
        h2 = jnp.dot(h1, w2t, preferred_element_type=jnp.float32) + b2
        h2 = jnp.maximum(h2, 0.0)
        # permute + fc3, lane-dense: (TB, 32) @ (32, 1024) accumulated over s.
        acc = acc + jnp.dot(h2, w3b_ref[s * H2:(s + 1) * H2, :],
                            preferred_element_type=jnp.float32)

    out_ref[...] = jnp.maximum(acc + b3t_ref[...], 0.0)


def _pick_tb(batch, target):
    """Batch-block size: whole batch if small, else a multiple of 8 dividing it."""
    if batch <= target:
        return batch
    tb = None
    for cand in range(8, target + 1, 8):
        if batch % cand == 0:
            tb = cand
    return tb if tb is not None else batch


def linear_kernel_network(x, params, *, tb_target=256):
    """x: (B, 1568, 3) f32; params = (w0, b0, w1, b1, w2, b2, w3, b3) PyTorch layout."""
    w0, b0, w1, b1, w2, b2, w3, b3 = params
    B, n_pts, n_coord = x.shape
    S = w0.shape[0]
    assert n_pts == N_POINTS and n_coord == 3
    assert w1.shape == (H1, N_POINTS) and w2.shape == (H2, H1)
    assert w3.shape == (H2, S), "forward pass requires num_of_modes == size_in"

    TB = _pick_tb(B, tb_target)
    assert B % TB == 0
    grid = (B // TB,)

    # ---- host-side (XLA) layout / parameter prep (cheap, outside the kernel) ----
    xt = jnp.transpose(x, (0, 2, 1))                       # (B, 3, N)
    x0 = xt[:, 0, :].astype(jnp.bfloat16)                  # (B, N)
    x1 = xt[:, 1, :].astype(jnp.bfloat16)
    x2 = xt[:, 2, :].astype(jnp.bfloat16)

    w1t = jnp.transpose(w1).astype(jnp.bfloat16)           # (N, 128)
    w0f = w0.astype(jnp.float32)                           # (S, 3)
    # fc0 folded into fc1: effective bias  b0[s] * sum_n w1[o, n] + b1[o]
    beff = (b0[:, None] * jnp.sum(w1, axis=1)[None, :]
            + b1[None, :]).astype(jnp.float32)             # (S, 128)

    w2t = jnp.transpose(w2).astype(jnp.float32)            # (128, 32)
    b2r = b2.reshape(1, H2).astype(jnp.float32)

    # permute + fc3 as a block-structured matmul:
    #   W3big[s*32 + i, k*32 + j] = w3[j, s] * (i == k)
    w3big = jnp.einsum('js,ik->sikj', w3.astype(jnp.float32),
                       jnp.eye(H2, dtype=jnp.float32)).reshape(S * H2, H2 * H2)
    b3t = jnp.tile(b3.astype(jnp.float32), (H2,)).reshape(1, H2 * H2)

    const = lambda shape: pl.BlockSpec(shape, lambda g, _s=len(shape): (0,) * _s)

    out_flat = pl.pallas_call(
        functools.partial(_lkn_kernel, S),
        out_shape=jax.ShapeDtypeStruct((B, H2 * H2), jnp.float32),
        grid_spec=pltpu.PrefetchScalarGridSpec(
            num_scalar_prefetch=0,
            grid=grid,
            in_specs=[
                pl.BlockSpec((TB, N_POINTS), lambda g: (g, 0)),   # x0
                pl.BlockSpec((TB, N_POINTS), lambda g: (g, 0)),   # x1
                pl.BlockSpec((TB, N_POINTS), lambda g: (g, 0)),   # x2
                const((N_POINTS, H1)),                            # w1^T (bf16)
                const((S, 3)),                                    # w0
                const((S, H1)),                                   # folded bias
                const((H1, H2)),                                  # w2^T
                const((1, H2)),                                   # b2
                const((S * H2, H2 * H2)),                         # W3big
                const((1, H2 * H2)),                              # b3 tiled
            ],
            out_specs=pl.BlockSpec((TB, H2 * H2), lambda g: (g, 0)),
        ),
        compiler_params=pltpu.CompilerParams(
            dimension_semantics=("parallel",)),
    )(x0, x1, x2, w1t, w0f, beff, w2t, b2r, w3big, b3t)

    return out_flat.reshape(B, H2, H2)


def _init_linear(key, out_f, in_f):
    """PyTorch-style uniform(-1/sqrt(fan_in), +1/sqrt(fan_in)) init."""
    kw, kb = jax.random.split(key)
    bound = 1.0 / np.sqrt(in_f)
    w = jax.random.uniform(kw, (out_f, in_f), jnp.float32, -bound, bound)
    b = jax.random.uniform(kb, (out_f,), jnp.float32, -bound, bound)
    return w, b


def _reference(x, params):
    w0, b0, w1, b1, w2, b2, w3, b3 = params
    h = x @ w0.T + b0                       # (B, N, S)
    h = jnp.transpose(h, (0, 2, 1))         # (B, S, N)
    h = jax.nn.relu(h @ w1.T + b1)          # (B, S, 128)
    h = jax.nn.relu(h @ w2.T + b2)          # (B, S, 32)
    h = jnp.transpose(h, (0, 2, 1))         # (B, 32, S)
    return jax.nn.relu(h @ w3.T + b3)       # (B, 32, 32)


if __name__ == "__main__":
    B = 16
    SIZE_IN = 8
    MODES = SIZE_IN      # forward pass requires num_of_modes == size_in

    key = jax.random.PRNGKey(0)
    kx, k0, k1, k2, k3 = jax.random.split(key, 5)

    x = jax.random.normal(kx, (B, N_POINTS, 3), jnp.float32)
    w0, b0 = _init_linear(k0, SIZE_IN, 3)        # fc0: Linear(3, size_in)
    w1, b1 = _init_linear(k1, H1, N_POINTS)      # fc1: Linear(1568, 128)
    w2, b2 = _init_linear(k2, H2, H1)            # fc2: Linear(128, 32)
    w3, b3 = _init_linear(k3, H2, MODES)         # fc3: Linear(modes, 32)
    params = (w0, b0, w1, b1, w2, b2, w3, b3)

    # tb_target=8 -> TB=8, grid=(2,) so the batch-blocked pipeline is exercised.
    fwd = jax.jit(functools.partial(linear_kernel_network, tb_target=8))
    out = jax.block_until_ready(fwd(x, params))
    ref = jax.block_until_ready(_reference(x, params))

    assert out.shape == (B, H2, H2)
    # fc1 runs with bf16 operands (f32 accumulation) -> relaxed tolerance.
    np.testing.assert_allclose(np.asarray(out), np.asarray(ref),
                               rtol=2e-2, atol=2e-2)
    print("KERNEL_OK")
</pallas_src>

<mosaic_0001>
module attributes {stable_mosaic.version = 11 : i64} {
  func.func @_lkn_kernel(%arg0: i32, %arg1: memref<8x1568xbf16, #tpu.memory_space<vmem>>, %arg2: memref<8x1568xbf16, #tpu.memory_space<vmem>>, %arg3: memref<8x1568xbf16, #tpu.memory_space<vmem>>, %arg4: memref<1568x128xbf16, #tpu.memory_space<vmem>>, %arg5: memref<8x3xf32, #tpu.memory_space<vmem>>, %arg6: memref<8x128xf32, #tpu.memory_space<vmem>>, %arg7: memref<128x32xf32, #tpu.memory_space<vmem>>, %arg8: memref<1x32xf32, #tpu.memory_space<vmem>>, %arg9: memref<256x1024xf32, #tpu.memory_space<vmem>>, %arg10: memref<1x1024xf32, #tpu.memory_space<vmem>>, %arg11: memref<8x1024xf32, #tpu.memory_space<vmem>>) attributes {dimension_semantics = [#tpu.dimension_semantics<parallel>], iteration_bounds = array<i64: 2>, scalar_prefetch = 0 : i64, scratch_operands = 0 : i64, tpu.core_type = #tpu.core_type<tc>, window_params = [{transform_indices = @transform_0, window_bounds = array<i64: 8, 1568>}, {transform_indices = @transform_1, window_bounds = array<i64: 8, 1568>}, {transform_indices = @transform_2, window_bounds = array<i64: 8, 1568>}, {pipeline_mode = #tpu.pipeline_mode<synchronous>, transform_indices = @transform_3, window_bounds = array<i64: 1568, 128>}, {pipeline_mode = #tpu.pipeline_mode<synchronous>, transform_indices = @transform_4, window_bounds = array<i64: 8, 3>}, {pipeline_mode = #tpu.pipeline_mode<synchronous>, transform_indices = @transform_5, window_bounds = array<i64: 8, 128>}, {pipeline_mode = #tpu.pipeline_mode<synchronous>, transform_indices = @transform_6, window_bounds = array<i64: 128, 32>}, {pipeline_mode = #tpu.pipeline_mode<synchronous>, transform_indices = @transform_7, window_bounds = array<i64: 1, 32>}, {pipeline_mode = #tpu.pipeline_mode<synchronous>, transform_indices = @transform_8, window_bounds = array<i64: 256, 1024>}, {pipeline_mode = #tpu.pipeline_mode<synchronous>, transform_indices = @transform_9, window_bounds = array<i64: 1, 1024>}, {transform_indices = @transform_10, window_bounds = array<i64: 8, 1024>}]} {
    %c0 = arith.constant 0 : index
    %c0_0 = arith.constant 0 : index
    %0 = vector.load %arg1[%c0, %c0_0] : memref<8x1568xbf16, #tpu.memory_space<vmem>>, vector<8x1568xbf16>
    %c0_1 = arith.constant 0 : index
    %c0_2 = arith.constant 0 : index
    %1 = vector.load %arg4[%c0_1, %c0_2] : memref<1568x128xbf16, #tpu.memory_space<vmem>>, vector<1568x128xbf16>
    %cst = arith.constant dense<0.000000e+00> : vector<8x128xf32>
    %2 = tpu.matmul %0, %1, %cst {dimension_numbers = #tpu.dot_dimension_numbers<[1], [0], [0], [1], [0, 0, 1, 1], [], []>} : vector<8x1568xbf16>, vector<1568x128xbf16>, vector<8x128xf32> -> vector<8x128xf32>
    %c0_3 = arith.constant 0 : index
    %c0_4 = arith.constant 0 : index
    %3 = vector.load %arg2[%c0_3, %c0_4] : memref<8x1568xbf16, #tpu.memory_space<vmem>>, vector<8x1568xbf16>
    %c0_5 = arith.constant 0 : index
    %c0_6 = arith.constant 0 : index
    %4 = vector.load %arg4[%c0_5, %c0_6] : memref<1568x128xbf16, #tpu.memory_space<vmem>>, vector<1568x128xbf16>
    %cst_7 = arith.constant dense<0.000000e+00> : vector<8x128xf32>
    %5 = tpu.matmul %3, %4, %cst_7 {dimension_numbers = #tpu.dot_dimension_numbers<[1], [0], [0], [1], [0, 0, 1, 1], [], []>} : vector<8x1568xbf16>, vector<1568x128xbf16>, vector<8x128xf32> -> vector<8x128xf32>
    %c0_8 = arith.constant 0 : index
    %c0_9 = arith.constant 0 : index
    %6 = vector.load %arg3[%c0_8, %c0_9] : memref<8x1568xbf16, #tpu.memory_space<vmem>>, vector<8x1568xbf16>
    %c0_10 = arith.constant 0 : index
    %c0_11 = arith.constant 0 : index
    %7 = vector.load %arg4[%c0_10, %c0_11] : memref<1568x128xbf16, #tpu.memory_space<vmem>>, vector<1568x128xbf16>
    %cst_12 = arith.constant dense<0.000000e+00> : vector<8x128xf32>
    %8 = tpu.matmul %6, %7, %cst_12 {dimension_numbers = #tpu.dot_dimension_numbers<[1], [0], [0], [1], [0, 0, 1, 1], [], []>} : vector<8x1568xbf16>, vector<1568x128xbf16>, vector<8x128xf32> -> vector<8x128xf32>
    %c0_13 = arith.constant 0 : index
    %c0_14 = arith.constant 0 : index
    %9 = vector.load %arg5[%c0_13, %c0_14] : memref<8x3xf32, #tpu.memory_space<vmem>>, vector<8x3xf32>
    %c0_15 = arith.constant 0 : index
    %c0_16 = arith.constant 0 : index
    %10 = vector.load %arg6[%c0_15, %c0_16] : memref<8x128xf32, #tpu.memory_space<vmem>>, vector<8x128xf32>
    %c0_17 = arith.constant 0 : index
    %c0_18 = arith.constant 0 : index
    %11 = vector.load %arg7[%c0_17, %c0_18] : memref<128x32xf32, #tpu.memory_space<vmem>>, vector<128x32xf32>
    %c0_19 = arith.constant 0 : index
    %c0_20 = arith.constant 0 : index
    %12 = vector.load %arg8[%c0_19, %c0_20] : memref<1x32xf32, #tpu.memory_space<vmem>>, vector<1x32xf32>
    %cst_21 = arith.constant 0.000000e+00 : f32
    %13 = vector.broadcast %cst_21 : f32 to vector<8x1024xf32>
    %14 = vector.extract_strided_slice %9 {offsets = [0, 0], sizes = [1, 1], strides = [1, 1]} : vector<8x3xf32> to vector<1x1xf32>
    %15 = vector.broadcast %14 : vector<1x1xf32> to vector<8x128xf32>
    %16 = arith.mulf %2, %15 : vector<8x128xf32>
    %17 = vector.extract_strided_slice %9 {offsets = [0, 1], sizes = [1, 1], strides = [1, 1]} : vector<8x3xf32> to vector<1x1xf32>
    %18 = vector.broadcast %17 : vector<1x1xf32> to vector<8x128xf32>
    %19 = arith.mulf %5, %18 : vector<8x128xf32>
    %20 = arith.addf %16, %19 : vector<8x128xf32>
    %21 = vector.extract_strided_slice %9 {offsets = [0, 2], sizes = [1, 1], strides = [1, 1]} : vector<8x3xf32> to vector<1x1xf32>
    %22 = vector.broadcast %21 : vector<1x1xf32> to vector<8x128xf32>
    %23 = arith.mulf %8, %22 : vector<8x128xf32>
    %24 = arith.addf %20, %23 : vector<8x128xf32>
    %25 = vector.extract_strided_slice %10 {offsets = [0, 0], sizes = [1, 128], strides = [1, 1]} : vector<8x128xf32> to vector<1x128xf32>
    %26 = vector.broadcast %25 : vector<1x128xf32> to vector<8x128xf32>
    %27 = arith.addf %24, %26 : vector<8x128xf32>
    %cst_22 = arith.constant 0.000000e+00 : f32
    %28 = vector.broadcast %cst_22 : f32 to vector<8x128xf32>
    %29 = arith.maximumf %27, %28 : vector<8x128xf32>
    %cst_23 = arith.constant dense<0.000000e+00> : vector<8x32xf32>
    %30 = tpu.matmul %29, %11, %cst_23 {dimension_numbers = #tpu.dot_dimension_numbers<[1], [0], [0], [1], [0, 0, 1, 1], [], []>} : vector<8x128xf32>, vector<128x32xf32>, vector<8x32xf32> -> vector<8x32xf32>
    %31 = vector.broadcast %12 : vector<1x32xf32> to vector<8x32xf32>
    %32 = arith.addf %30, %31 : vector<8x32xf32>
    %cst_24 = arith.constant 0.000000e+00 : f32
    %33 = vector.broadcast %cst_24 : f32 to vector<8x32xf32>
    %34 = arith.maximumf %32, %33 : vector<8x32xf32>
    %c0_25 = arith.constant 0 : index
    %c0_26 = arith.constant 0 : index
    %35 = vector.load %arg9[%c0_25, %c0_26] : memref<256x1024xf32, #tpu.memory_space<vmem>>, vector<32x1024xf32>
    %cst_27 = arith.constant dense<0.000000e+00> : vector<8x1024xf32>
    %36 = tpu.matmul %34, %35, %cst_27 {dimension_numbers = #tpu.dot_dimension_numbers<[1], [0], [0], [1], [0, 0, 1, 1], [], []>} : vector<8x32xf32>, vector<32x1024xf32>, vector<8x1024xf32> -> vector<8x1024xf32>
    %37 = arith.addf %13, %36 : vector<8x1024xf32>
    %38 = vector.extract_strided_slice %9 {offsets = [1, 0], sizes = [1, 1], strides = [1, 1]} : vector<8x3xf32> to vector<1x1xf32>
    %39 = vector.broadcast %38 : vector<1x1xf32> to vector<8x128xf32>
    %40 = arith.mulf %2, %39 : vector<8x128xf32>
    %41 = vector.extract_strided_slice %9 {offsets = [1, 1], sizes = [1, 1], strides = [1, 1]} : vector<8x3xf32> to vector<1x1xf32>
    %42 = vector.broadcast %41 : vector<1x1xf32> to vector<8x128xf32>
    %43 = arith.mulf %5, %42 : vector<8x128xf32>
    %44 = arith.addf %40, %43 : vector<8x128xf32>
    %45 = vector.extract_strided_slice %9 {offsets = [1, 2], sizes = [1, 1], strides = [1, 1]} : vector<8x3xf32> to vector<1x1xf32>
    %46 = vector.broadcast %45 : vector<1x1xf32> to vector<8x128xf32>
    %47 = arith.mulf %8, %46 : vector<8x128xf32>
    %48 = arith.addf %44, %47 : vector<8x128xf32>
    %49 = vector.extract_strided_slice %10 {offsets = [1, 0], sizes = [1, 128], strides = [1, 1]} : vector<8x128xf32> to vector<1x128xf32>
    %50 = vector.broadcast %49 : vector<1x128xf32> to vector<8x128xf32>
    %51 = arith.addf %48, %50 : vector<8x128xf32>
    %cst_28 = arith.constant 0.000000e+00 : f32
    %52 = vector.broadcast %cst_28 : f32 to vector<8x128xf32>
    %53 = arith.maximumf %51, %52 : vector<8x128xf32>
    %cst_29 = arith.constant dense<0.000000e+00> : vector<8x32xf32>
    %54 = tpu.matmul %53, %11, %cst_29 {dimension_numbers = #tpu.dot_dimension_numbers<[1], [0], [0], [1], [0, 0, 1, 1], [], []>} : vector<8x128xf32>, vector<128x32xf32>, vector<8x32xf32> -> vector<8x32xf32>
    %55 = vector.broadcast %12 : vector<1x32xf32> to vector<8x32xf32>
    %56 = arith.addf %54, %55 : vector<8x32xf32>
    %cst_30 = arith.constant 0.000000e+00 : f32
    %57 = vector.broadcast %cst_30 : f32 to vector<8x32xf32>
    %58 = arith.maximumf %56, %57 : vector<8x32xf32>
    %c32 = arith.constant 32 : index
    %c0_31 = arith.constant 0 : index
    %59 = vector.load %arg9[%c32, %c0_31] : memref<256x1024xf32, #tpu.memory_space<vmem>>, vector<32x1024xf32>
    %cst_32 = arith.constant dense<0.000000e+00> : vector<8x1024xf32>
    %60 = tpu.matmul %58, %59, %cst_32 {dimension_numbers = #tpu.dot_dimension_numbers<[1], [0], [0], [1], [0, 0, 1, 1], [], []>} : vector<8x32xf32>, vector<32x1024xf32>, vector<8x1024xf32> -> vector<8x1024xf32>
    %61 = arith.addf %37, %60 : vector<8x1024xf32>
    %62 = vector.extract_strided_slice %9 {offsets = [2, 0], sizes = [1, 1], strides = [1, 1]} : vector<8x3xf32> to vector<1x1xf32>
    %63 = vector.broadcast %62 : vector<1x1xf32> to vector<8x128xf32>
    %64 = arith.mulf %2, %63 : vector<8x128xf32>
    %65 = vector.extract_strided_slice %9 {offsets = [2, 1], sizes = [1, 1], strides = [1, 1]} : vector<8x3xf32> to vector<1x1xf32>
    %66 = vector.broadcast %65 : vector<1x1xf32> to vector<8x128xf32>
    %67 = arith.mulf %5, %66 : vector<8x128xf32>
    %68 = arith.addf %64, %67 : vector<8x128xf32>
    %69 = vector.extract_strided_slice %9 {offsets = [2, 2], sizes = [1, 1], strides = [1, 1]} : vector<8x3xf32> to vector<1x1xf32>
    %70 = vector.broadcast %69 : vector<1x1xf32> to vector<8x128xf32>
    %71 = arith.mulf %8, %70 : vector<8x128xf32>
    %72 = arith.addf %68, %71 : vector<8x128xf32>
    %73 = vector.extract_strided_slice %10 {offsets = [2, 0], sizes = [1, 128], strides = [1, 1]} : vector<8x128xf32> to vector<1x128xf32>
    %74 = vector.broadcast %73 : vector<1x128xf32> to vector<8x128xf32>
    %75 = arith.addf %72, %74 : vector<8x128xf32>
    %cst_33 = arith.constant 0.000000e+00 : f32
    %76 = vector.broadcast %cst_33 : f32 to vector<8x128xf32>
    %77 = arith.maximumf %75, %76 : vector<8x128xf32>
    %cst_34 = arith.constant dense<0.000000e+00> : vector<8x32xf32>
    %78 = tpu.matmul %77, %11, %cst_34 {dimension_numbers = #tpu.dot_dimension_numbers<[1], [0], [0], [1], [0, 0, 1, 1], [], []>} : vector<8x128xf32>, vector<128x32xf32>, vector<8x32xf32> -> vector<8x32xf32>
    %79 = vector.broadcast %12 : vector<1x32xf32> to vector<8x32xf32>
    %80 = arith.addf %78, %79 : vector<8x32xf32>
    %cst_35 = arith.constant 0.000000e+00 : f32
    %81 = vector.broadcast %cst_35 : f32 to vector<8x32xf32>
    %82 = arith.maximumf %80, %81 : vector<8x32xf32>
    %c64 = arith.constant 64 : index
    %c0_36 = arith.constant 0 : index
    %83 = vector.load %arg9[%c64, %c0_36] : memref<256x1024xf32, #tpu.memory_space<vmem>>, vector<32x1024xf32>
    %cst_37 = arith.constant dense<0.000000e+00> : vector<8x1024xf32>
    %84 = tpu.matmul %82, %83, %cst_37 {dimension_numbers = #tpu.dot_dimension_numbers<[1], [0], [0], [1], [0, 0, 1, 1], [], []>} : vector<8x32xf32>, vector<32x1024xf32>, vector<8x1024xf32> -> vector<8x1024xf32>
    %85 = arith.addf %61, %84 : vector<8x1024xf32>
    %86 = vector.extract_strided_slice %9 {offsets = [3, 0], sizes = [1, 1], strides = [1, 1]} : vector<8x3xf32> to vector<1x1xf32>
    %87 = vector.broadcast %86 : vector<1x1xf32> to vector<8x128xf32>
    %88 = arith.mulf %2, %87 : vector<8x128xf32>
    %89 = vector.extract_strided_slice %9 {offsets = [3, 1], sizes = [1, 1], strides = [1, 1]} : vector<8x3xf32> to vector<1x1xf32>
    %90 = vector.broadcast %89 : vector<1x1xf32> to vector<8x128xf32>
    %91 = arith.mulf %5, %90 : vector<8x128xf32>
    %92 = arith.addf %88, %91 : vector<8x128xf32>
    %93 = vector.extract_strided_slice %9 {offsets = [3, 2], sizes = [1, 1], strides = [1, 1]} : vector<8x3xf32> to vector<1x1xf32>
    %94 = vector.broadcast %93 : vector<1x1xf32> to vector<8x128xf32>
    %95 = arith.mulf %8, %94 : vector<8x128xf32>
    %96 = arith.addf %92, %95 : vector<8x128xf32>
    %97 = vector.extract_strided_slice %10 {offsets = [3, 0], sizes = [1, 128], strides = [1, 1]} : vector<8x128xf32> to vector<1x128xf32>
    %98 = vector.broadcast %97 : vector<1x128xf32> to vector<8x128xf32>
    %99 = arith.addf %96, %98 : vector<8x128xf32>
    %cst_38 = arith.constant 0.000000e+00 : f32
    %100 = vector.broadcast %cst_38 : f32 to vector<8x128xf32>
    %101 = arith.maximumf %99, %100 : vector<8x128xf32>
    %cst_39 = arith.constant dense<0.000000e+00> : vector<8x32xf32>
    %102 = tpu.matmul %101, %11, %cst_39 {dimension_numbers = #tpu.dot_dimension_numbers<[1], [0], [0], [1], [0, 0, 1, 1], [], []>} : vector<8x128xf32>, vector<128x32xf32>, vector<8x32xf32> -> vector<8x32xf32>
    %103 = vector.broadcast %12 : vector<1x32xf32> to vector<8x32xf32>
    %104 = arith.addf %102, %103 : vector<8x32xf32>
    %cst_40 = arith.constant 0.000000e+00 : f32
    %105 = vector.broadcast %cst_40 : f32 to vector<8x32xf32>
    %106 = arith.maximumf %104, %105 : vector<8x32xf32>
    %c96 = arith.constant 96 : index
    %c0_41 = arith.constant 0 : index
    %107 = vector.load %arg9[%c96, %c0_41] : memref<256x1024xf32, #tpu.memory_space<vmem>>, vector<32x1024xf32>
    %cst_42 = arith.constant dense<0.000000e+00> : vector<8x1024xf32>
    %108 = tpu.matmul %106, %107, %cst_42 {dimension_numbers = #tpu.dot_dimension_numbers<[1], [0], [0], [1], [0, 0, 1, 1], [], []>} : vector<8x32xf32>, vector<32x1024xf32>, vector<8x1024xf32> -> vector<8x1024xf32>
    %109 = arith.addf %85, %108 : vector<8x1024xf32>
    %110 = vector.extract_strided_slice %9 {offsets = [4, 0], sizes = [1, 1], strides = [1, 1]} : vector<8x3xf32> to vector<1x1xf32>
    %111 = vector.broadcast %110 : vector<1x1xf32> to vector<8x128xf32>
    %112 = arith.mulf %2, %111 : vector<8x128xf32>
    %113 = vector.extract_strided_slice %9 {offsets = [4, 1], sizes = [1, 1], strides = [1, 1]} : vector<8x3xf32> to vector<1x1xf32>
    %114 = vector.broadcast %113 : vector<1x1xf32> to vector<8x128xf32>
    %115 = arith.mulf %5, %114 : vector<8x128xf32>
    %116 = arith.addf %112, %115 : vector<8x128xf32>
    %117 = vector.extract_strided_slice %9 {offsets = [4, 2], sizes = [1, 1], strides = [1, 1]} : vector<8x3xf32> to vector<1x1xf32>
    %118 = vector.broadcast %117 : vector<1x1xf32> to vector<8x128xf32>
    %119 = arith.mulf %8, %118 : vector<8x128xf32>
    %120 = arith.addf %116, %119 : vector<8x128xf32>
    %121 = vector.extract_strided_slice %10 {offsets = [4, 0], sizes = [1, 128], strides = [1, 1]} : vector<8x128xf32> to vector<1x128xf32>
    %122 = vector.broadcast %121 : vector<1x128xf32> to vector<8x128xf32>
    %123 = arith.addf %120, %122 : vector<8x128xf32>
    %cst_43 = arith.constant 0.000000e+00 : f32
    %124 = vector.broadcast %cst_43 : f32 to vector<8x128xf32>
    %125 = arith.maximumf %123, %124 : vector<8x128xf32>
    %cst_44 = arith.constant dense<0.000000e+00> : vector<8x32xf32>
    %126 = tpu.matmul %125, %11, %cst_44 {dimension_numbers = #tpu.dot_dimension_numbers<[1], [0], [0], [1], [0, 0, 1, 1], [], []>} : vector<8x128xf32>, vector<128x32xf32>, vector<8x32xf32> -> vector<8x32xf32>
    %127 = vector.broadcast %12 : vector<1x32xf32> to vector<8x32xf32>
    %128 = arith.addf %126, %127 : vector<8x32xf32>
    %cst_45 = arith.constant 0.000000e+00 : f32
    %129 = vector.broadcast %cst_45 : f32 to vector<8x32xf32>
    %130 = arith.maximumf %128, %129 : vector<8x32xf32>
    %c128 = arith.constant 128 : index
    %c0_46 = arith.constant 0 : index
    %131 = vector.load %arg9[%c128, %c0_46] : memref<256x1024xf32, #tpu.memory_space<vmem>>, vector<32x1024xf32>
    %cst_47 = arith.constant dense<0.000000e+00> : vector<8x1024xf32>
    %132 = tpu.matmul %130, %131, %cst_47 {dimension_numbers = #tpu.dot_dimension_numbers<[1], [0], [0], [1], [0, 0, 1, 1], [], []>} : vector<8x32xf32>, vector<32x1024xf32>, vector<8x1024xf32> -> vector<8x1024xf32>
    %133 = arith.addf %109, %132 : vector<8x1024xf32>
    %134 = vector.extract_strided_slice %9 {offsets = [5, 0], sizes = [1, 1], strides = [1, 1]} : vector<8x3xf32> to vector<1x1xf32>
    %135 = vector.broadcast %134 : vector<1x1xf32> to vector<8x128xf32>
    %136 = arith.mulf %2, %135 : vector<8x128xf32>
    %137 = vector.extract_strided_slice %9 {offsets = [5, 1], sizes = [1, 1], strides = [1, 1]} : vector<8x3xf32> to vector<1x1xf32>
    %138 = vector.broadcast %137 : vector<1x1xf32> to vector<8x128xf32>
    %139 = arith.mulf %5, %138 : vector<8x128xf32>
    %140 = arith.addf %136, %139 : vector<8x128xf32>
    %141 = vector.extract_strided_slice %9 {offsets = [5, 2], sizes = [1, 1], strides = [1, 1]} : vector<8x3xf32> to vector<1x1xf32>
    %142 = vector.broadcast %141 : vector<1x1xf32> to vector<8x128xf32>
    %143 = arith.mulf %8, %142 : vector<8x128xf32>
    %144 = arith.addf %140, %143 : vector<8x128xf32>
    %145 = vector.extract_strided_slice %10 {offsets = [5, 0], sizes = [1, 128], strides = [1, 1]} : vector<8x128xf32> to vector<1x128xf32>
    %146 = vector.broadcast %145 : vector<1x128xf32> to vector<8x128xf32>
    %147 = arith.addf %144, %146 : vector<8x128xf32>
    %cst_48 = arith.constant 0.000000e+00 : f32
    %148 = vector.broadcast %cst_48 : f32 to vector<8x128xf32>
    %149 = arith.maximumf %147, %148 : vector<8x128xf32>
    %cst_49 = arith.constant dense<0.000000e+00> : vector<8x32xf32>
    %150 = tpu.matmul %149, %11, %cst_49 {dimension_numbers = #tpu.dot_dimension_numbers<[1], [0], [0], [1], [0, 0, 1, 1], [], []>} : vector<8x128xf32>, vector<128x32xf32>, vector<8x32xf32> -> vector<8x32xf32>
    %151 = vector.broadcast %12 : vector<1x32xf32> to vector<8x32xf32>
    %152 = arith.addf %150, %151 : vector<8x32xf32>
    %cst_50 = arith.constant 0.000000e+00 : f32
    %153 = vector.broadcast %cst_50 : f32 to vector<8x32xf32>
    %154 = arith.maximumf %152, %153 : vector<8x32xf32>
    %c160 = arith.constant 160 : index
    %c0_51 = arith.constant 0 : index
    %155 = vector.load %arg9[%c160, %c0_51] : memref<256x1024xf32, #tpu.memory_space<vmem>>, vector<32x1024xf32>
    %cst_52 = arith.constant dense<0.000000e+00> : vector<8x1024xf32>
    %156 = tpu.matmul %154, %155, %cst_52 {dimension_numbers = #tpu.dot_dimension_numbers<[1], [0], [0], [1], [0, 0, 1, 1], [], []>} : vector<8x32xf32>, vector<32x1024xf32>, vector<8x1024xf32> -> vector<8x1024xf32>
    %157 = arith.addf %133, %156 : vector<8x1024xf32>
    %158 = vector.extract_strided_slice %9 {offsets = [6, 0], sizes = [1, 1], strides = [1, 1]} : vector<8x3xf32> to vector<1x1xf32>
    %159 = vector.broadcast %158 : vector<1x1xf32> to vector<8x128xf32>
    %160 = arith.mulf %2, %159 : vector<8x128xf32>
    %161 = vector.extract_strided_slice %9 {offsets = [6, 1], sizes = [1, 1], strides = [1, 1]} : vector<8x3xf32> to vector<1x1xf32>
    %162 = vector.broadcast %161 : vector<1x1xf32> to vector<8x128xf32>
    %163 = arith.mulf %5, %162 : vector<8x128xf32>
    %164 = arith.addf %160, %163 : vector<8x128xf32>
    %165 = vector.extract_strided_slice %9 {offsets = [6, 2], sizes = [1, 1], strides = [1, 1]} : vector<8x3xf32> to vector<1x1xf32>
    %166 = vector.broadcast %165 : vector<1x1xf32> to vector<8x128xf32>
    %167 = arith.mulf %8, %166 : vector<8x128xf32>
    %168 = arith.addf %164, %167 : vector<8x128xf32>
    %169 = vector.extract_strided_slice %10 {offsets = [6, 0], sizes = [1, 128], strides = [1, 1]} : vector<8x128xf32> to vector<1x128xf32>
    %170 = vector.broadcast %169 : vector<1x128xf32> to vector<8x128xf32>
    %171 = arith.addf %168, %170 : vector<8x128xf32>
    %cst_53 = arith.constant 0.000000e+00 : f32
    %172 = vector.broadcast %cst_53 : f32 to vector<8x128xf32>
    %173 = arith.maximumf %171, %172 : vector<8x128xf32>
    %cst_54 = arith.constant dense<0.000000e+00> : vector<8x32xf32>
    %174 = tpu.matmul %173, %11, %cst_54 {dimension_numbers = #tpu.dot_dimension_numbers<[1], [0], [0], [1], [0, 0, 1, 1], [], []>} : vector<8x128xf32>, vector<128x32xf32>, vector<8x32xf32> -> vector<8x32xf32>
    %175 = vector.broadcast %12 : vector<1x32xf32> to vector<8x32xf32>
    %176 = arith.addf %174, %175 : vector<8x32xf32>
    %cst_55 = arith.constant 0.000000e+00 : f32
    %177 = vector.broadcast %cst_55 : f32 to vector<8x32xf32>
    %178 = arith.maximumf %176, %177 : vector<8x32xf32>
    %c192 = arith.constant 192 : index
    %c0_56 = arith.constant 0 : index
    %179 = vector.load %arg9[%c192, %c0_56] : memref<256x1024xf32, #tpu.memory_space<vmem>>, vector<32x1024xf32>
    %cst_57 = arith.constant dense<0.000000e+00> : vector<8x1024xf32>
    %180 = tpu.matmul %178, %179, %cst_57 {dimension_numbers = #tpu.dot_dimension_numbers<[1], [0], [0], [1], [0, 0, 1, 1], [], []>} : vector<8x32xf32>, vector<32x1024xf32>, vector<8x1024xf32> -> vector<8x1024xf32>
    %181 = arith.addf %157, %180 : vector<8x1024xf32>
    %182 = vector.extract_strided_slice %9 {offsets = [7, 0], sizes = [1, 1], strides = [1, 1]} : vector<8x3xf32> to vector<1x1xf32>
    %183 = vector.broadcast %182 : vector<1x1xf32> to vector<8x128xf32>
    %184 = arith.mulf %2, %183 : vector<8x128xf32>
    %185 = vector.extract_strided_slice %9 {offsets = [7, 1], sizes = [1, 1], strides = [1, 1]} : vector<8x3xf32> to vector<1x1xf32>
    %186 = vector.broadcast %185 : vector<1x1xf32> to vector<8x128xf32>
    %187 = arith.mulf %5, %186 : vector<8x128xf32>
    %188 = arith.addf %184, %187 : vector<8x128xf32>
    %189 = vector.extract_strided_slice %9 {offsets = [7, 2], sizes = [1, 1], strides = [1, 1]} : vector<8x3xf32> to vector<1x1xf32>
    %190 = vector.broadcast %189 : vector<1x1xf32> to vector<8x128xf32>
    %191 = arith.mulf %8, %190 : vector<8x128xf32>
    %192 = arith.addf %188, %191 : vector<8x128xf32>
    %193 = vector.extract_strided_slice %10 {offsets = [7, 0], sizes = [1, 128], strides = [1, 1]} : vector<8x128xf32> to vector<1x128xf32>
    %194 = vector.broadcast %193 : vector<1x128xf32> to vector<8x128xf32>
    %195 = arith.addf %192, %194 : vector<8x128xf32>
    %cst_58 = arith.constant 0.000000e+00 : f32
    %196 = vector.broadcast %cst_58 : f32 to vector<8x128xf32>
    %197 = arith.maximumf %195, %196 : vector<8x128xf32>
    %cst_59 = arith.constant dense<0.000000e+00> : vector<8x32xf32>
    %198 = tpu.matmul %197, %11, %cst_59 {dimension_numbers = #tpu.dot_dimension_numbers<[1], [0], [0], [1], [0, 0, 1, 1], [], []>} : vector<8x128xf32>, vector<128x32xf32>, vector<8x32xf32> -> vector<8x32xf32>
    %199 = vector.broadcast %12 : vector<1x32xf32> to vector<8x32xf32>
    %200 = arith.addf %198, %199 : vector<8x32xf32>
    %cst_60 = arith.constant 0.000000e+00 : f32
    %201 = vector.broadcast %cst_60 : f32 to vector<8x32xf32>
    %202 = arith.maximumf %200, %201 : vector<8x32xf32>
    %c224 = arith.constant 224 : index
    %c0_61 = arith.constant 0 : index
    %203 = vector.load %arg9[%c224, %c0_61] : memref<256x1024xf32, #tpu.memory_space<vmem>>, vector<32x1024xf32>
    %cst_62 = arith.constant dense<0.000000e+00> : vector<8x1024xf32>
    %204 = tpu.matmul %202, %203, %cst_62 {dimension_numbers = #tpu.dot_dimension_numbers<[1], [0], [0], [1], [0, 0, 1, 1], [], []>} : vector<8x32xf32>, vector<32x1024xf32>, vector<8x1024xf32> -> vector<8x1024xf32>
    %205 = arith.addf %181, %204 : vector<8x1024xf32>
    %c0_63 = arith.constant 0 : index
    %c0_64 = arith.constant 0 : index
    %206 = vector.load %arg10[%c0_63, %c0_64] : memref<1x1024xf32, #tpu.memory_space<vmem>>, vector<1x1024xf32>
    %207 = vector.broadcast %206 : vector<1x1024xf32> to vector<8x1024xf32>
    %208 = arith.addf %205, %207 : vector<8x1024xf32>
    %cst_65 = arith.constant 0.000000e+00 : f32
    %209 = vector.broadcast %cst_65 : f32 to vector<8x1024xf32>
    %210 = arith.maximumf %208, %209 : vector<8x1024xf32>
    %c0_66 = arith.constant 0 : index
    %c0_67 = arith.constant 0 : index
    %211 = vector.load %arg11[%c0_66, %c0_67] : memref<8x1024xf32, #tpu.memory_space<vmem>>, vector<8x1024xf32>
    tpu.vector_store %arg11[%c0_66, %c0_67], %210 {strides = array<i32>} : memref<8x1024xf32, #tpu.memory_space<vmem>>, vector<8x1024xf32>,
    return
  }
  func.func @transform_0(%arg0: i32) -> (i32, i32) {
    %c0_i32 = arith.constant 0 : i32
    %c0_i32_0 = arith.constant 0 : i32
    return %arg0, %c0_i32 : i32, i32
  }
  func.func @transform_1(%arg0: i32) -> (i32, i32) {
    %c0_i32 = arith.constant 0 : i32
    %c0_i32_0 = arith.constant 0 : i32
    return %arg0, %c0_i32 : i32, i32
  }
  func.func @transform_2(%arg0: i32) -> (i32, i32) {
    %c0_i32 = arith.constant 0 : i32
    %c0_i32_0 = arith.constant 0 : i32
    return %arg0, %c0_i32 : i32, i32
  }
  func.func @transform_3(%arg0: i32) -> (i32, i32) {
    %c0_i32 = arith.constant 0 : i32
    %c0_i32_0 = arith.constant 0 : i32
    %c0_i32_1 = arith.constant 0 : i32
    return %c0_i32, %c0_i32_0 : i32, i32
  }
  func.func @transform_4(%arg0: i32) -> (i32, i32) {
    %c0_i32 = arith.constant 0 : i32
    %c0_i32_0 = arith.constant 0 : i32
    %c0_i32_1 = arith.constant 0 : i32
    return %c0_i32, %c0_i32_0 : i32, i32
  }
  func.func @transform_5(%arg0: i32) -> (i32, i32) {
    %c0_i32 = arith.constant 0 : i32
    %c0_i32_0 = arith.constant 0 : i32
    %c0_i32_1 = arith.constant 0 : i32
    return %c0_i32, %c0_i32_0 : i32, i32
  }
  func.func @transform_6(%arg0: i32) -> (i32, i32) {
    %c0_i32 = arith.constant 0 : i32
    %c0_i32_0 = arith.constant 0 : i32
    %c0_i32_1 = arith.constant 0 : i32
    return %c0_i32, %c0_i32_0 : i32, i32
  }
  func.func @transform_7(%arg0: i32) -> (i32, i32) {
    %c0_i32 = arith.constant 0 : i32
    %c0_i32_0 = arith.constant 0 : i32
    %c0_i32_1 = arith.constant 0 : i32
    return %c0_i32, %c0_i32_0 : i32, i32
  }
  func.func @transform_8(%arg0: i32) -> (i32, i32) {
    %c0_i32 = arith.constant 0 : i32
    %c0_i32_0 = arith.constant 0 : i32
    %c0_i32_1 = arith.constant 0 : i32
    return %c0_i32, %c0_i32_0 : i32, i32
  }
  func.func @transform_9(%arg0: i32) -> (i32, i32) {
    %c0_i32 = arith.constant 0 : i32
    %c0_i32_0 = arith.constant 0 : i32
    %c0_i32_1 = arith.constant 0 : i32
    return %c0_i32, %c0_i32_0 : i32, i32
  }
  func.func @transform_10(%arg0: i32) -> (i32, i32) {
    %c0_i32 = arith.constant 0 : i32
    %c0_i32_0 = arith.constant 0 : i32
    return %arg0, %c0_i32 : i32, i32
  }
}

</mosaic_0001>

<llo_original>
// kernel: tile.8
$region0: #{tile.8}
  #allocation0 [shape = 's32[1]{0}', space=sflag, size = 0x4, scoped, tag = 'scoped memory for tile.8']
  %s0 = inlined_call_operand.vmem [shape: f32[32], index: 0, kind: input, shape index: {}]
  %s1 = inlined_call_operand.vmem [shape: f32[32,32], index: 1, kind: output, shape index: {}]
  // Predicated region
  $region2: #{tile.8} parent=0 // pred_check
    _
  $region3: #{tile.8} parent=0 // pred_check_branch
    %3 = sbr.rel (0) target = $region5
  $region4: #{tile.8} parent=0 // pred_region
    _
  $region5: #{tile.8} parent=0 // pred_fallthru
    _
  %v4 = vld [vmem:[%s0] ss:$0 sm:$0xff]
  %5 = vst [vmem:[%s1] sm:$0xff] %v4
  %s6 = scalar_lea.vmem %s1, 8
  %7 = vst [vmem:[%s6] sm:$0xff] %v4
  %s8 = scalar_lea.vmem %s1, 16
  %9 = vst [vmem:[%s8] sm:$0xff] %v4
  %s10 = scalar_lea.vmem %s1, 24
  %11 = vst [vmem:[%s10] sm:$0xff] %v4

// kernel: tile.9
$region0: #{tile.9}
  %s0 = inlined_call_operand.vmem [shape: f32[32,32], index: 0, kind: input, shape index: {}]
  %s1 = inlined_call_operand.vmem [shape: f32[1,1024], index: 1, kind: output, shape index: {}]
  $region1: #{tile.9} parent=0
    #allocation0 [shape = 'u8[32768]{0}', space=vmem, size = 0x8000, scoped, tag = 'scoped mem for output reshape']
    %v2 = vld [vmem:[%s0] ss:$4 sm:$0xff]
    %vm3 = vcmask 261120
    %4 = vst.msk [vmem:[#allocation0] ss:$8 sm:$0xf] %vm3, %v2
    %5 = vst.msk [vmem:[#allocation0] ss:$8 sm:$0xf0] %vm3, %v2
    %s6 = scalar_lea.vmem %s0, 3
    %v7 = vld [vmem:[%s6] ss:$4 sm:$0xff]
    %8 = vrot.lane.b32.xlu0 %v7, 96
    %v9 = vpop.permute.xlu0 %8
    %vm10 = vcmask 1048320
    %11 = vst.msk [vmem:[#allocation0] ss:$8 sm:$0xf] %vm10, %v9
    %12 = vst.msk [vmem:[#allocation0] ss:$8 sm:$0xf0] %vm10, %v9
    %s13 = scalar_lea.vmem %s0, 2
    %v14 = vld [vmem:[%s13] ss:$4 sm:$0xff]
    %15 = vrot.lane.b32.xlu0 %v14, 64
    %v16 = vpop.permute.xlu0 %15
    %vm17 = vcmask 785920
    %18 = vst.msk [vmem:[#allocation0] ss:$8 sm:$0xf] %vm17, %v16
    %19 = vst.msk [vmem:[#allocation0] ss:$8 sm:$0xf0] %vm17, %v16
    %s20 = scalar_lea.vmem %s0, 1
    %v21 = vld [vmem:[%s20] ss:$4 sm:$0xff]
    %22 = vrot.lane.b32.xlu0 %v21, 32
    %v23 = vpop.permute.xlu0 %22
    %vm24 = vcmask 523520
    %25 = vst.msk [vmem:[#allocation0] ss:$8 sm:$0xf] %vm24, %v23
    %26 = vst.msk [vmem:[#allocation0] ss:$8 sm:$0xf0] %vm24, %v23
    %s28 = sshllo.u32 0, 1
    %v30 = vld [vmem:[#allocation0] sm:%s28]
    %s31 = sshllo.u32 0, 1
    %32 = vst [vmem:[%s1] sm:%s31] %v30
    %s33 = scalar_lea.vmem [#allocation0], 8
    %v34 = vld [vmem:[%s33] sm:%s28]
    %s35 = sshllo.u32 0, 1
    %s36 = scalar_lea.vmem %s1, 1
    %37 = vst [vmem:[%s36] sm:%s35] %v34
    %s38 = scalar_lea.vmem [#allocation0], 16
    %v39 = vld [vmem:[%s38] sm:%s28]
    %s40 = sshllo.u32 0, 1
    %s41 = smul.addr 1, 2
    %s42 = scalar_lea.vmem %s1, %s41
    %43 = vst [vmem:[%s42] sm:%s40] %v39
    %s44 = scalar_lea.vmem [#allocation0], 24
    %v45 = vld [vmem:[%s44] sm:%s28]
    %s46 = sshllo.u32 0, 1
    %s47 = smul.addr 1, 3
    %s48 = scalar_lea.vmem %s1, %s47
    %49 = vst [vmem:[%s48] sm:%s46] %v45
    %s50 = scalar_lea.vmem [#allocation0], 32
    %v51 = vld [vmem:[%s50] sm:%s28]
    %s52 = sshllo.u32 0, 1
    %s53 = smul.addr 1, 4
    %s54 = scalar_lea.vmem %s1, %s53
    %55 = vst [vmem:[%s54] sm:%s52] %v51
    %s56 = scalar_lea.vmem [#allocation0], 40
    %v57 = vld [vmem:[%s56] sm:%s28]
    %s58 = sshllo.u32 0, 1
    %s59 = smul.addr 1, 5
    %s60 = scalar_lea.vmem %s1, %s59
    %61 = vst [vmem:[%s60] sm:%s58] %v57
    %s62 = scalar_lea.vmem [#allocation0], 48
    %v63 = vld [vmem:[%s62] sm:%s28]
    %s64 = sshllo.u32 0, 1
    %s65 = smul.addr 1, 6
    %s66 = scalar_lea.vmem %s1, %s65
    %67 = vst [vmem:[%s66] sm:%s64] %v63
    %s68 = scalar_lea.vmem [#allocation0], 56
    %v69 = vld [vmem:[%s68] sm:%s28]
    %s70 = sshllo.u32 0, 1
    %s71 = smul.addr 1, 7
    %s72 = scalar_lea.vmem %s1, %s71
    %73 = vst [vmem:[%s72] sm:%s70] %v69

// kernel: linear_kernel_network.1
$region0: #{linear_kernel_network.1}
  #allocation0 [shape = 'u32[]', space=smem, size = 0x4, offset = 0x4, fixed_abs, tag = 'smem constant byte address 0x4 - core index']
  #allocation1 [shape = 'u32[144,128]{1,0:T(1,128)}', space=vmem, size = 0x12000, scoped, tag = 'internal scratch']
  %s0 = inlined_call_operand.vmem [shape: bf16[16,1568], index: 0, kind: input, shape index: {}]
  %s1 = inlined_call_operand.vmem [shape: bf16[16,1568], index: 1, kind: input, shape index: {}]
  %s2 = inlined_call_operand.vmem [shape: bf16[16,1568], index: 2, kind: input, shape index: {}]
  %s3 = inlined_call_operand.vmem [shape: bf16[1568,128], index: 3, kind: input, shape index: {}]
  %s4 = inlined_call_operand.vmem [shape: f32[8,3], index: 4, kind: input, shape index: {}]
  %s5 = inlined_call_operand.vmem [shape: f32[8,128], index: 5, kind: input, shape index: {}]
  %s6 = inlined_call_operand.vmem [shape: f32[128,32], index: 6, kind: input, shape index: {}]
  %s7 = inlined_call_operand.vmem [shape: f32[1,32], index: 7, kind: input, shape index: {}]
  %s8 = inlined_call_operand.vmem [shape: f32[256,1024], index: 8, kind: input, shape index: {}]
  %s9 = inlined_call_operand.vmem [shape: f32[1,1024], index: 9, kind: input, shape index: {}]
  %s10 = inlined_call_operand.vmem [shape: f32[16,1024], index: 10, kind: output, shape index: {}]
  %s11 = sld [smem:[#allocation0]]
  $region73: #{linear_kernel_network.1} parent=0
    _
  %s13 = ssub.s32 1, %s11
  %s14 = scalar_select 0, %s13, %s11
  loop: start=0, step=1, limit=4
  $region2: #{linear_kernel_network.1} parent=0 // loop_pre_header
    _
  $region3: #{linear_kernel_network.1} parent=0 // loop_header
    %s16 = sphi 0, %s20
    %p17 = scmp.ge.s32.totalorder %s16, 4
    %s26 = sphi 0, %s28
    %s29 = sphi 0, %s26
    %s30 = sphi 0, %s29
    %s46 = sphi 0, %s30
    %s52 = sphi 0, %s54
    %s55 = sphi 0, %s52
    %s56 = sphi 0, %s55
    %s72 = sphi 0, %s56
    %s78 = sphi 0, %s80
    %s81 = sphi 0, %s78
    %s82 = sphi 0, %s81
    %s98 = sphi 0, %s82
    %s102 = sphi 0, %s102
    %s104 = sphi 0, %s102
    %s105 = sphi 0, %s104
    %s119 = sphi 0, %s105
    %s123 = sphi 0, %s123
    %s125 = sphi 0, %s123
    %s126 = sphi 0, %s125
    %s140 = sphi 0, %s126
    %s144 = sphi 0, %s144
    %s146 = sphi 0, %s144
    %s147 = sphi 0, %s146
    %s161 = sphi 0, %s147
    %s165 = sphi 0, %s165
    %s167 = sphi 0, %s165
    %s168 = sphi 0, %s167
    %s182 = sphi 0, %s168
    %s186 = sphi 0, %s186
    %s188 = sphi 0, %s186
    %s189 = sphi 0, %s188
    %s203 = sphi 0, %s189
    %s207 = sphi 0, %s207
    %s209 = sphi 0, %s207
    %s210 = sphi 0, %s209
    %s224 = sphi 0, %s210
    %s228 = sphi 0, %s228
    %s230 = sphi 0, %s228
    %s231 = sphi 0, %s230
    %s245 = sphi 0, %s231
    %s251 = sphi 0, %s253
    %s254 = sphi 0, %s251
    %s255 = sphi 0, %s254
    %s271 = sphi 0, %s255
  $region4: #{linear_kernel_network.1} parent=0 // loop_header_branch
    %19 = sbr.rel (%p17) target = $region8
  $region5: #{linear_kernel_network.1} parent=0 // loop_body
    %s21 = ssub.s32 %s16, 1
    %s22 = ssub.s32 %s16, 2
    %s23 = sadd.s32 %s16, 1
    %s24 = ssub.s32 %s16, %s23
    %p25 = scmp.eq.s32.totalorder %s24, 0
    %s27 = sadd.s32 %s26, 1
    %s28 = scalar_select %p25, %s26, %s27
    %p31 = pneg %p25
    %p32 = scmp.eq.s32.totalorder %s16, 1
    %p33 = por %p31, %p32
    %p34 = scmp.ne.s32.totalorder %s26, %s29
    %p35 = scmp.eq.s32.totalorder %s16, 0
    %p36 = por %p34, %p35
    %p37 = scmp.ne.s32.totalorder %s26, %s29
    %p38 = scmp.eq.s32.totalorder %s21, 1
    %p39 = por %p37, %p38
    %p40 = scmp.ne.s32.totalorder %s29, %s30
    %p41 = scmp.eq.s32.totalorder %s21, 0
    %p42 = por %p40, %p41
    %p43 = scmp.ne.s32.totalorder %s29, %s30
    %p44 = scmp.eq.s32.totalorder %s22, 1
    %p45 = por %p43, %p44
    %p47 = scmp.ne.s32.totalorder %s30, %s46
    %p48 = scmp.eq.s32.totalorder %s22, 0
    %p49 = por %p47, %p48
    %s50 = ssub.s32 %s16, %s23
    %p51 = scmp.eq.s32.totalorder %s50, 0
    %s53 = sadd.s32 %s52, 1
    %s54 = scalar_select %p51, %s52, %s53
    %p57 = pneg %p51
    %p58 = scmp.eq.s32.totalorder %s16, 1
    %p59 = por %p57, %p58
    %p60 = scmp.ne.s32.totalorder %s52, %s55
    %p61 = scmp.eq.s32.totalorder %s16, 0
    %p62 = por %p60, %p61
    %p63 = scmp.ne.s32.totalorder %s52, %s55
    %p64 = scmp.eq.s32.totalorder %s21, 1
    %p65 = por %p63, %p64
    %p66 = scmp.ne.s32.totalorder %s55, %s56
    %p67 = scmp.eq.s32.totalorder %s21, 0
    %p68 = por %p66, %p67
    %p69 = scmp.ne.s32.totalorder %s55, %s56
    %p70 = scmp.eq.s32.totalorder %s22, 1
    %p71 = por %p69, %p70
    %p73 = scmp.ne.s32.totalorder %s56, %s72
    %p74 = scmp.eq.s32.totalorder %s22, 0
    %p75 = por %p73, %p74
    %s76 = ssub.s32 %s16, %s23
    %p77 = scmp.eq.s32.totalorder %s76, 0
    %s79 = sadd.s32 %s78, 1
    %s80 = scalar_select %p77, %s78, %s79
    %p83 = pneg %p77
    %p84 = scmp.eq.s32.totalorder %s16, 1
    %p85 = por %p83, %p84
    %p86 = scmp.ne.s32.totalorder %s78, %s81
    %p87 = scmp.eq.s32.totalorder %s16, 0
    %p88 = por %p86, %p87
    %p89 = scmp.ne.s32.totalorder %s78, %s81
    %p90 = scmp.eq.s32.totalorder %s21, 1
    %p91 = por %p89, %p90
    %p92 = scmp.ne.s32.totalorder %s81, %s82
    %p93 = scmp.eq.s32.totalorder %s21, 0
    %p94 = por %p92, %p93
    %p95 = scmp.ne.s32.totalorder %s81, %s82
    %p96 = scmp.eq.s32.totalorder %s22, 1
    %p97 = por %p95, %p96
    %p99 = scmp.ne.s32.totalorder %s82, %s98
    %p100 = scmp.eq.s32.totalorder %s22, 0
    %p101 = por %p99, %p100
    %s103 = sadd.s32 %s102, 1
    %p106 = scmp.eq.s32.totalorder %s16, 1
    %p107 = scmp.ne.s32.totalorder %s102, %s104
    %p108 = scmp.eq.s32.totalorder %s16, 0
    %p109 = por %p107, %p108
    %p110 = scmp.ne.s32.totalorder %s102, %s104
    %p111 = scmp.eq.s32.totalorder %s21, 1
    %p112 = por %p110, %p111
    %p113 = scmp.ne.s32.totalorder %s104, %s105
    %p114 = scmp.eq.s32.totalorder %s21, 0
    %p115 = por %p113, %p114
    %p116 = scmp.ne.s32.totalorder %s104, %s105
    %p117 = scmp.eq.s32.totalorder %s22, 1
    %p118 = por %p116, %p117
    %p120 = scmp.ne.s32.totalorder %s105, %s119
    %p121 = scmp.eq.s32.totalorder %s22, 0
    %p122 = por %p120, %p121
    %s124 = sadd.s32 %s123, 1
    %p127 = scmp.eq.s32.totalorder %s16, 1
    %p128 = scmp.ne.s32.totalorder %s123, %s125
    %p129 = scmp.eq.s32.totalorder %s16, 0
    %p130 = por %p128, %p129
    %p131 = scmp.ne.s32.totalorder %s123, %s125
    %p132 = scmp.eq.s32.totalorder %s21, 1
    %p133 = por %p131, %p132
    %p134 = scmp.ne.s32.totalorder %s125, %s126
    %p135 = scmp.eq.s32.totalorder %s21, 0
    %p136 = por %p134, %p135
    %p137 = scmp.ne.s32.totalorder %s125, %s126
    %p138 = scmp.eq.s32.totalorder %s22, 1
    %p139 = por %p137, %p138
    %p141 = scmp.ne.s32.totalorder %s126, %s140
    %p142 = scmp.eq.s32.totalorder %s22, 0
    %p143 = por %p141, %p142
    %s145 = sadd.s32 %s144, 1
    %p148 = scmp.eq.s32.totalorder %s16, 1
    %p149 = scmp.ne.s32.totalorder %s144, %s146
    %p150 = scmp.eq.s32.totalorder %s16, 0
    %p151 = por %p149, %p150
    %p152 = scmp.ne.s32.totalorder %s144, %s146
    %p153 = scmp.eq.s32.totalorder %s21, 1
    %p154 = por %p152, %p153
    %p155 = scmp.ne.s32.totalorder %s146, %s147
    %p156 = scmp.eq.s32.totalorder %s21, 0
    %p157 = por %p155, %p156
    %p158 = scmp.ne.s32.totalorder %s146, %s147
    %p159 = scmp.eq.s32.totalorder %s22, 1
    %p160 = por %p158, %p159
    %p162 = scmp.ne.s32.totalorder %s147, %s161
    %p163 = scmp.eq.s32.totalorder %s22, 0
    %p164 = por %p162, %p163
    %s166 = sadd.s32 %s165, 1
    %p169 = scmp.eq.s32.totalorder %s16, 1
    %p170 = scmp.ne.s32.totalorder %s165, %s167
    %p171 = scmp.eq.s32.totalorder %s16, 0
    %p172 = por %p170, %p171
    %p173 = scmp.ne.s32.totalorder %s165, %s167
    %p174 = scmp.eq.s32.totalorder %s21, 1
    %p175 = por %p173, %p174
    %p176 = scmp.ne.s32.totalorder %s167, %s168
    %p177 = scmp.eq.s32.totalorder %s21, 0
    %p178 = por %p176, %p177
    %p179 = scmp.ne.s32.totalorder %s167, %s168
    %p180 = scmp.eq.s32.totalorder %s22, 1
    %p181 = por %p179, %p180
    %p183 = scmp.ne.s32.totalorder %s168, %s182
    %p184 = scmp.eq.s32.totalorder %s22, 0
    %p185 = por %p183, %p184
    %s187 = sadd.s32 %s186, 1
    %p190 = scmp.eq.s32.totalorder %s16, 1
    %p191 = scmp.ne.s32.totalorder %s186, %s188
    %p192 = scmp.eq.s32.totalorder %s16, 0
    %p193 = por %p191, %p192
    %p194 = scmp.ne.s32.totalorder %s186, %s188
    %p195 = scmp.eq.s32.totalorder %s21, 1
    %p196 = por %p194, %p195
    %p197 = scmp.ne.s32.totalorder %s188, %s189
    %p198 = scmp.eq.s32.totalorder %s21, 0
    %p199 = por %p197, %p198
    %p200 = scmp.ne.s32.totalorder %s188, %s189
    %p201 = scmp.eq.s32.totalorder %s22, 1
    %p202 = por %p200, %p201
    %p204 = scmp.ne.s32.totalorder %s189, %s203
    %p205 = scmp.eq.s32.totalorder %s22, 0
    %p206 = por %p204, %p205
    %s208 = sadd.s32 %s207, 1
    %p211 = scmp.eq.s32.totalorder %s16, 1
    %p212 = scmp.ne.s32.totalorder %s207, %s209
    %p213 = scmp.eq.s32.totalorder %s16, 0
    %p214 = por %p212, %p213
    %p215 = scmp.ne.s32.totalorder %s207, %s209
    %p216 = scmp.eq.s32.totalorder %s21, 1
    %p217 = por %p215, %p216
    %p218 = scmp.ne.s32.totalorder %s209, %s210
    %p219 = scmp.eq.s32.totalorder %s21, 0
    %p220 = por %p218, %p219
    %p221 = scmp.ne.s32.totalorder %s209, %s210
    %p222 = scmp.eq.s32.totalorder %s22, 1
    %p223 = por %p221, %p222
    %p225 = scmp.ne.s32.totalorder %s210, %s224
    %p226 = scmp.eq.s32.totalorder %s22, 0
    %p227 = por %p225, %p226
    %s229 = sadd.s32 %s228, 1
    %p232 = scmp.eq.s32.totalorder %s16, 1
    %p233 = scmp.ne.s32.totalorder %s228, %s230
    %p234 = scmp.eq.s32.totalorder %s16, 0
    %p235 = por %p233, %p234
    %p236 = scmp.ne.s32.totalorder %s228, %s230
    %p237 = scmp.eq.s32.totalorder %s21, 1
    %p238 = por %p236, %p237
    %p239 = scmp.ne.s32.totalorder %s230, %s231
    %p240 = scmp.eq.s32.totalorder %s21, 0
    %p241 = por %p239, %p240
    %p242 = scmp.ne.s32.totalorder %s230, %s231
    %p243 = scmp.eq.s32.totalorder %s22, 1
    %p244 = por %p242, %p243
    %p246 = scmp.ne.s32.totalorder %s231, %s245
    %p247 = scmp.eq.s32.totalorder %s22, 0
    %p248 = por %p246, %p247
    %s249 = ssub.s32 %s16, %s23
    %p250 = scmp.eq.s32.totalorder %s249, 0
    %s252 = sadd.s32 %s251, 1
    %s253 = scalar_select %p250, %s251, %s252
    %p256 = pneg %p250
    %p257 = scmp.eq.s32.totalorder %s16, 1
    %p258 = por %p256, %p257
    %p259 = scmp.ne.s32.totalorder %s251, %s254
    %p260 = scmp.eq.s32.totalorder %s16, 0
    %p261 = por %p259, %p260
    %p262 = scmp.ne.s32.totalorder %s251, %s254
    %p263 = scmp.eq.s32.totalorder %s21, 1
    %p264 = por %p262, %p263
    %p265 = scmp.ne.s32.totalorder %s254, %s255
    %p266 = scmp.eq.s32.totalorder %s21, 0
    %p267 = por %p265, %p266
    %p268 = scmp.ne.s32.totalorder %s254, %s255
    %p269 = scmp.eq.s32.totalorder %s22, 1
    %p270 = por %p268, %p269
    %p272 = scmp.ne.s32.totalorder %s255, %s271
    %p273 = scmp.eq.s32.totalorder %s22, 0
    %p274 = por %p272, %p273
    %p275 = scmp.le.s32.totalorder 1, %s16
    %p276 = scmp.lt.s32.totalorder %s16, 3
    %p277 = pnand %p275, %p276
    %p278 = pneg %p277
    // Predicated region
    $region9: #{linear_kernel_network.1} parent=5 // pred_check
      _
    $region10: #{linear_kernel_network.1} parent=5 // pred_check_branch
      %280 = sbr.rel (%p277) target = $region12
    $region11: #{linear_kernel_network.1} parent=5 // pred_region
      %s281 = ssub.s32 %s16, 1
      // Predicated region
      $region13: #{linear_kernel_network.1} parent=11 // pred_check
        %p282 = pneg %p115
      $region14: #{linear_kernel_network.1} parent=11 // pred_check_branch
        %284 = sbr.rel (%p282) target = $region16
      $region15: #{linear_kernel_network.1} parent=11 // pred_region
        _
      $region16: #{linear_kernel_network.1} parent=11 // pred_fallthru
        _
      // Predicated region
      $region17: #{linear_kernel_network.1} parent=11 // pred_check
        %p285 = pneg %p136
      $region18: #{linear_kernel_network.1} parent=11 // pred_check_branch
        %287 = sbr.rel (%p285) target = $region20
      $region19: #{linear_kernel_network.1} parent=11 // pred_region
        _
      $region20: #{linear_kernel_network.1} parent=11 // pred_fallthru
        _
      // Predicated region
      $region21: #{linear_kernel_network.1} parent=11 // pred_check
        %p288 = pneg %p157
      $region22: #{linear_kernel_network.1} parent=11 // pred_check_branch
        %290 = sbr.rel (%p288) target = $region24
      $region23: #{linear_kernel_network.1} parent=11 // pred_region
        _
      $region24: #{linear_kernel_network.1} parent=11 // pred_fallthru
        _
      // Predicated region
      $region25: #{linear_kernel_network.1} parent=11 // pred_check
        %p291 = pneg %p178
      $region26: #{linear_kernel_network.1} parent=11 // pred_check_branch
        %293 = sbr.rel (%p291) target = $region28
      $region27: #{linear_kernel_network.1} parent=11 // pred_region
        _
      $region28: #{linear_kernel_network.1} parent=11 // pred_fallthru
        _
      // Predicated region
      $region29: #{linear_kernel_network.1} parent=11 // pred_check
        %p294 = pneg %p199
      $region30: #{linear_kernel_network.1} parent=11 // pred_check_branch
        %296 = sbr.rel (%p294) target = $region32
      $region31: #{linear_kernel_network.1} parent=11 // pred_region
        _
      $region32: #{linear_kernel_network.1} parent=11 // pred_fallthru
        _
      // Predicated region
      $region33: #{linear_kernel_network.1} parent=11 // pred_check
        %p297 = pneg %p220
      $region34: #{linear_kernel_network.1} parent=11 // pred_check_branch
        %299 = sbr.rel (%p297) target = $region36
      $region35: #{linear_kernel_network.1} parent=11 // pred_region
        _
      $region36: #{linear_kernel_network.1} parent=11 // pred_fallthru
        _
      // Predicated region
      $region37: #{linear_kernel_network.1} parent=11 // pred_check
        %p300 = pneg %p241
      $region38: #{linear_kernel_network.1} parent=11 // pred_check_branch
        %302 = sbr.rel (%p300) target = $region40
      $region39: #{linear_kernel_network.1} parent=11 // pred_region
        _
      $region40: #{linear_kernel_network.1} parent=11 // pred_fallthru
        _
    $region12: #{linear_kernel_network.1} parent=5 // pred_fallthru
      _
    %p303 = scmp.lt.s32.totalorder %s16, 2
    // Predicated region
    $region41: #{linear_kernel_network.1} parent=5 // pred_check
      %p304 = pneg %p303
    $region42: #{linear_kernel_network.1} parent=5 // pred_check_branch
      %306 = sbr.rel (%p304) target = $region44
    $region43: #{linear_kernel_network.1} parent=5 // pred_region
      // Predicated region
      $region45: #{linear_kernel_network.1} parent=43 // pred_check
        %p307 = pneg %p36
      $region46: #{linear_kernel_network.1} parent=43 // pred_check_branch
        %309 = sbr.rel (%p307) target = $region48
      $region47: #{linear_kernel_network.1} parent=43 // pred_region
        %p310 = scmp.lt.s32.totalorder %s16, 1
        %s311 = scalar_select %p310, %s16, 1
        %s312 = smul.addr %s311, 13
        %s313 = smul.addr %s312, 4
        %s314 = scalar_lea.vmem %s0, %s313
      $region48: #{linear_kernel_network.1} parent=43 // pred_fallthru
        _
      // Predicated region
      $region49: #{linear_kernel_network.1} parent=43 // pred_check
        %p315 = pneg %p62
      $region50: #{linear_kernel_network.1} parent=43 // pred_check_branch
        %317 = sbr.rel (%p315) target = $region52
      $region51: #{linear_kernel_network.1} parent=43 // pred_region
        %p318 = scmp.lt.s32.totalorder %s16, 1
        %s319 = scalar_select %p318, %s16, 1
        %s320 = smul.addr %s319, 13
        %s321 = smul.addr %s320, 4
        %s322 = scalar_lea.vmem %s1, %s321
      $region52: #{linear_kernel_network.1} parent=43 // pred_fallthru
        _
      // Predicated region
      $region53: #{linear_kernel_network.1} parent=43 // pred_check
        %p323 = pneg %p88
      $region54: #{linear_kernel_network.1} parent=43 // pred_check_branch
        %325 = sbr.rel (%p323) target = $region56
      $region55: #{linear_kernel_network.1} parent=43 // pred_region
        %p326 = scmp.lt.s32.totalorder %s16, 1
        %s327 = scalar_select %p326, %s16, 1
        %s328 = smul.addr %s327, 13
        %s329 = smul.addr %s328, 4
        %s330 = scalar_lea.vmem %s2, %s329
      $region56: #{linear_kernel_network.1} parent=43 // pred_fallthru
        _
    $region44: #{linear_kernel_network.1} parent=5 // pred_fallthru
      _
    %p331 = scmp.le.s32.totalorder 1, %s16
    %p332 = scmp.lt.s32.totalorder %s16, 3
    %p333 = pnand %p331, %p332
    %p334 = pneg %p333
    // Predicated region
    $region57: #{linear_kernel_network.1} parent=5 // pred_check
      _
    $region58: #{linear_kernel_network.1} parent=5 // pred_check_branch
      %336 = sbr.rel (%p333) target = $region60
    $region59: #{linear_kernel_network.1} parent=5 // pred_region
      %s337 = ssub.s32 %s16, 1
      %p338 = scmp.lt.s32.totalorder %s21, 1
      %s339 = scalar_select %p338, %s21, 1
      %s340 = smul.addr %s339, 13
      %s341 = smul.addr %s340, 4
      %s342 = scalar_lea.vmem %s0, %s341
      %p343 = pneg %p42
      %p344 = pneg %p39
      %p345 = scmp.lt.s32.totalorder %s21, 1
      %s346 = scalar_select %p345, %s21, 1
      %s347 = smul.addr %s346, 13
      %s348 = smul.addr %s347, 4
      %s349 = scalar_lea.vmem %s1, %s348
      %p350 = pneg %p68
      %p351 = pneg %p65
      %p352 = scmp.lt.s32.totalorder %s21, 1
      %s353 = scalar_select %p352, %s21, 1
      %s354 = smul.addr %s353, 13
      %s355 = smul.addr %s354, 4
      %s356 = scalar_lea.vmem %s2, %s355
      %p357 = pneg %p94
      %p358 = pneg %p91
      %p359 = pneg %p115
      %p360 = pneg %p112
      %p361 = pneg %p136
      %p362 = pneg %p133
      %p363 = pneg %p157
      %p364 = pneg %p154
      %p365 = pneg %p178
      %p366 = pneg %p175
      %p367 = pneg %p199
      %p368 = pneg %p196
      %p369 = pneg %p220
      %p370 = pneg %p217
      %p371 = pneg %p241
      %p372 = pneg %p238
      %p373 = pneg %p267
      %p374 = pneg %p264
      %p375 = scmp.lt.s32.totalorder %s21, 1
      %s376 = scalar_select %p375, %s21, 1
      %s377 = smul.addr %s376, 8
      %s378 = smul.addr %s377, 8
      %s379 = scalar_lea.vmem %s10, %s378
      %p380 = scmp.lt.s32.totalorder %s21, 1
      %s381 = scalar_select %p380, %s21, 1
      %s382 = smul.addr %s381, 13
      %s383 = smul.addr %s382, 4
      %s384 = scalar_lea.vmem %s0, %s383
      %p385 = scmp.lt.s32.totalorder %s21, 1
      %s386 = scalar_select %p385, %s21, 1
      %s387 = smul.addr %s386, 13
      %s388 = smul.addr %s387, 4
      %s389 = scalar_lea.vmem %s1, %s388
      %p390 = scmp.lt.s32.totalorder %s21, 1
      %s391 = scalar_select %p390, %s21, 1
      %s392 = smul.addr %s391, 13
      %s393 = smul.addr %s392, 4
      %s394 = scalar_lea.vmem %s2, %s393
      %p395 = scmp.lt.s32.totalorder %s21, 1
      %s396 = scalar_select %p395, %s21, 1
      %s397 = smul.addr %s396, 8
      %s398 = smul.addr %s397, 8
      %s399 = scalar_lea.vmem %s10, %s398
      %v401 = vld [vmem:[%s384] sm:$0xff]
      %v402 = vld [vmem:[%s384 + $0x8] sm:$0xff]
      %v403 = vld [vmem:[%s384 + $0x10] sm:$0xff]
      %v404 = vld [vmem:[%s384 + $0x18] sm:$0xff]
      %v405 = vld [vmem:[%s384 + $0x20] sm:$0xff]
      %v406 = vld [vmem:[%s384 + $0x28] sm:$0xff]
      %v407 = vld [vmem:[%s384 + $0x30] sm:$0xf]
      %v408 = vld [vmem:[%s3] sm:$0xf]
      %v409 = vld [vmem:[%s3 + $0x4] sm:$0xf]
      %v410 = vld [vmem:[%s3 + $0x8] sm:$0xf]
      %v411 = vld [vmem:[%s3 + $0xc] sm:$0xf]
      %v412 = vld [vmem:[%s3 + $0x10] sm:$0xf]
      %v413 = vld [vmem:[%s3 + $0x14] sm:$0xf]
      %v414 = vld [vmem:[%s3 + $0x18] sm:$0xf]
      %v415 = vld [vmem:[%s3 + $0x1c] sm:$0xf]
      %v416 = vld [vmem:[%s3 + $0x20] sm:$0xf]
      %v417 = vld [vmem:[%s3 + $0x24] sm:$0xf]
      %v418 = vld [vmem:[%s3 + $0x28] sm:$0xf]
      %v419 = vld [vmem:[%s3 + $0x2c] sm:$0xf]
      %v420 = vld [vmem:[%s3 + $0x30] sm:$0xf]
      %v421 = vld [vmem:[%s3 + $0x34] sm:$0xf]
      %v422 = vld [vmem:[%s3 + $0x38] sm:$0xf]
      %v423 = vld [vmem:[%s3 + $0x3c] sm:$0xf]
      %v424 = vld [vmem:[%s3 + $0x40] sm:$0xf]
      %v425 = vld [vmem:[%s3 + $0x44] sm:$0xf]
      %v426 = vld [vmem:[%s3 + $0x48] sm:$0xf]
      %v427 = vld [vmem:[%s3 + $0x4c] sm:$0xf]
      %v428 = vld [vmem:[%s3 + $0x50] sm:$0xf]
      %v429 = vld [vmem:[%s3 + $0x54] sm:$0xf]
      %v430 = vld [vmem:[%s3 + $0x58] sm:$0xf]
      %v431 = vld [vmem:[%s3 + $0x5c] sm:$0xf]
      %v432 = vld [vmem:[%s3 + $0x60] sm:$0xf]
      %v433 = vld [vmem:[%s3 + $0x64] sm:$0xf]
      %v434 = vld [vmem:[%s3 + $0x68] sm:$0xf]
      %v435 = vld [vmem:[%s3 + $0x6c] sm:$0xf]
      %v436 = vld [vmem:[%s3 + $0x70] sm:$0xf]
      %v437 = vld [vmem:[%s3 + $0x74] sm:$0xf]
      %v438 = vld [vmem:[%s3 + $0x78] sm:$0xf]
      %v439 = vld [vmem:[%s3 + $0x7c] sm:$0xf]
      %v440 = vld [vmem:[%s3 + $0x80] sm:$0xf]
      %v441 = vld [vmem:[%s3 + $0x84] sm:$0xf]
      %v442 = vld [vmem:[%s3 + $0x88] sm:$0xf]
      %v443 = vld [vmem:[%s3 + $0x8c] sm:$0xf]
      %v444 = vld [vmem:[%s3 + $0x90] sm:$0xf]
      %v445 = vld [vmem:[%s3 + $0x94] sm:$0xf]
      %v446 = vld [vmem:[%s3 + $0x98] sm:$0xf]
      %v447 = vld [vmem:[%s3 + $0x9c] sm:$0xf]
      %v448 = vld [vmem:[%s3 + $0xa0] sm:$0xf]
      %v449 = vld [vmem:[%s3 + $0xa4] sm:$0xf]
      %v450 = vld [vmem:[%s3 + $0xa8] sm:$0xf]
      %v451 = vld [vmem:[%s3 + $0xac] sm:$0xf]
      %v452 = vld [vmem:[%s3 + $0xb0] sm:$0xf]
      %v453 = vld [vmem:[%s3 + $0xb4] sm:$0xf]
      %v454 = vld [vmem:[%s3 + $0xb8] sm:$0xf]
      %v455 = vld [vmem:[%s3 + $0xbc] sm:$0xf]
      %v456 = vld [vmem:[%s3 + $0xc0] sm:$0xf]
      %v457 = vld [vmem:[%s3 + $0xc4] sm:$0xf]
      %v458 = vld [vmem:[%s3 + $0xc8] sm:$0xf]
      %v459 = vld [vmem:[%s3 + $0xcc] sm:$0xf]
      %v460 = vld [vmem:[%s3 + $0xd0] sm:$0xf]
      %v461 = vld [vmem:[%s3 + $0xd4] sm:$0xf]
      %v462 = vld [vmem:[%s3 + $0xd8] sm:$0xf]
      %v463 = vld [vmem:[%s3 + $0xdc] sm:$0xf]
      %v464 = vld [vmem:[%s3 + $0xe0] sm:$0xf]
      %v465 = vld [vmem:[%s3 + $0xe4] sm:$0xf]
      %v466 = vld [vmem:[%s3 + $0xe8] sm:$0xf]
      %v467 = vld [vmem:[%s3 + $0xec] sm:$0xf]
      %v468 = vld [vmem:[%s3 + $0xf0] sm:$0xf]
      %v469 = vld [vmem:[%s3 + $0xf4] sm:$0xf]
      %v470 = vld [vmem:[%s3 + $0xf8] sm:$0xf]
      %v471 = vld [vmem:[%s3 + $0xfc] sm:$0xf]
      %v472 = vld [vmem:[%s3 + $0x100] sm:$0xf]
      %v473 = vld [vmem:[%s3 + $0x104] sm:$0xf]
      %v474 = vld [vmem:[%s3 + $0x108] sm:$0xf]
      %v475 = vld [vmem:[%s3 + $0x10c] sm:$0xf]
      %v476 = vld [vmem:[%s3 + $0x110] sm:$0xf]
      %v477 = vld [vmem:[%s3 + $0x114] sm:$0xf]
      %v478 = vld [vmem:[%s3 + $0x118] sm:$0xf]
      %v479 = vld [vmem:[%s3 + $0x11c] sm:$0xf]
      %v480 = vld [vmem:[%s3 + $0x120] sm:$0xf]
      %v481 = vld [vmem:[%s3 + $0x124] sm:$0xf]
      %v482 = vld [vmem:[%s3 + $0x128] sm:$0xf]
      %v483 = vld [vmem:[%s3 + $0x12c] sm:$0xf]
      %v484 = vld [vmem:[%s3 + $0x130] sm:$0xf]
      %v485 = vld [vmem:[%s3 + $0x134] sm:$0xf]
      %v486 = vld [vmem:[%s3 + $0x138] sm:$0xf]
      %v487 = vld [vmem:[%s3 + $0x13c] sm:$0xf]
      %v488 = vld [vmem:[%s3 + $0x140] sm:$0xf]
      %v489 = vld [vmem:[%s3 + $0x144] sm:$0xf]
      %v490 = vld [vmem:[%s3 + $0x148] sm:$0xf]
      %v491 = vld [vmem:[%s3 + $0x14c] sm:$0xf]
      %v492 = vld [vmem:[%s3 + $0x150] sm:$0xf]
      %v493 = vld [vmem:[%s3 + $0x154] sm:$0xf]
      %v494 = vld [vmem:[%s3 + $0x158] sm:$0xf]
      %v495 = vld [vmem:[%s3 + $0x15c] sm:$0xf]
      %v496 = vld [vmem:[%s3 + $0x160] sm:$0xf]
      %v497 = vld [vmem:[%s3 + $0x164] sm:$0xf]
      %v498 = vld [vmem:[%s3 + $0x168] sm:$0xf]
      %v499 = vld [vmem:[%s3 + $0x16c] sm:$0xf]
      %v500 = vld [vmem:[%s3 + $0x170] sm:$0xf]
      %v501 = vld [vmem:[%s3 + $0x174] sm:$0xf]
      %v502 = vld [vmem:[%s3 + $0x178] sm:$0xf]
      %v503 = vld [vmem:[%s3 + $0x17c] sm:$0xf]
      %v504 = vld [vmem:[%s3 + $0x180] sm:$0xf]
      %v505 = vld [vmem:[%s3 + $0x184] sm:$0xf]
      %v506 = vld [vmem:[%s3 + $0x188] sm:$0xf]
      %v507 = vld [vmem:[%s3 + $0x18c] sm:$0xf]
      %v508 = vld [vmem:[%s3 + $0x190] sm:$0xf]
      %v509 = vld [vmem:[%s3 + $0x194] sm:$0xf]
      %v510 = vld [vmem:[%s3 + $0x198] sm:$0xf]
      %v511 = vld [vmem:[%s3 + $0x19c] sm:$0xf]
      %v512 = vld [vmem:[%s3 + $0x1a0] sm:$0xf]
      %v513 = vld [vmem:[%s3 + $0x1a4] sm:$0xf]
      %v514 = vld [vmem:[%s3 + $0x1a8] sm:$0xf]
      %v515 = vld [vmem:[%s3 + $0x1ac] sm:$0xf]
      %v516 = vld [vmem:[%s3 + $0x1b0] sm:$0xf]
      %v517 = vld [vmem:[%s3 + $0x1b4] sm:$0xf]
      %v518 = vld [vmem:[%s3 + $0x1b8] sm:$0xf]
      %v519 = vld [vmem:[%s3 + $0x1bc] sm:$0xf]
      %v520 = vld [vmem:[%s3 + $0x1c0] sm:$0xf]
      %v521 = vld [vmem:[%s3 + $0x1c4] sm:$0xf]
      %v522 = vld [vmem:[%s3 + $0x1c8] sm:$0xf]
      %v523 = vld [vmem:[%s3 + $0x1cc] sm:$0xf]
      %v524 = vld [vmem:[%s3 + $0x1d0] sm:$0xf]
      %v525 = vld [vmem:[%s3 + $0x1d4] sm:$0xf]
      %v526 = vld [vmem:[%s3 + $0x1d8] sm:$0xf]
      %v527 = vld [vmem:[%s3 + $0x1dc] sm:$0xf]
      %v528 = vld [vmem:[%s3 + $0x1e0] sm:$0xf]
      %v529 = vld [vmem:[%s3 + $0x1e4] sm:$0xf]
      %v530 = vld [vmem:[%s3 + $0x1e8] sm:$0xf]
      %v531 = vld [vmem:[%s3 + $0x1ec] sm:$0xf]
      %v532 = vld [vmem:[%s3 + $0x1f0] sm:$0xf]
      %v533 = vld [vmem:[%s3 + $0x1f4] sm:$0xf]
      %v534 = vld [vmem:[%s3 + $0x1f8] sm:$0xf]
      %v535 = vld [vmem:[%s3 + $0x1fc] sm:$0xf]
      %v536 = vld [vmem:[%s3 + $0x200] sm:$0xf]
      %v537 = vld [vmem:[%s3 + $0x204] sm:$0xf]
      %v538 = vld [vmem:[%s3 + $0x208] sm:$0xf]
      %v539 = vld [vmem:[%s3 + $0x20c] sm:$0xf]
      %v540 = vld [vmem:[%s3 + $0x210] sm:$0xf]
      %v541 = vld [vmem:[%s3 + $0x214] sm:$0xf]
      %v542 = vld [vmem:[%s3 + $0x218] sm:$0xf]
      %v543 = vld [vmem:[%s3 + $0x21c] sm:$0xf]
      %v544 = vld [vmem:[%s3 + $0x220] sm:$0xf]
      %v545 = vld [vmem:[%s3 + $0x224] sm:$0xf]
      %v546 = vld [vmem:[%s3 + $0x228] sm:$0xf]
      %v547 = vld [vmem:[%s3 + $0x22c] sm:$0xf]
      %v548 = vld [vmem:[%s3 + $0x230] sm:$0xf]
      %v549 = vld [vmem:[%s3 + $0x234] sm:$0xf]
      %v550 = vld [vmem:[%s3 + $0x238] sm:$0xf]
      %v551 = vld [vmem:[%s3 + $0x23c] sm:$0xf]
      %v552 = vld [vmem:[%s3 + $0x240] sm:$0xf]
      %v553 = vld [vmem:[%s3 + $0x244] sm:$0xf]
      %v554 = vld [vmem:[%s3 + $0x248] sm:$0xf]
      %v555 = vld [vmem:[%s3 + $0x24c] sm:$0xf]
      %v556 = vld [vmem:[%s3 + $0x250] sm:$0xf]
      %v557 = vld [vmem:[%s3 + $0x254] sm:$0xf]
      %v558 = vld [vmem:[%s3 + $0x258] sm:$0xf]
      %v559 = vld [vmem:[%s3 + $0x25c] sm:$0xf]
      %v560 = vld [vmem:[%s3 + $0x260] sm:$0xf]
      %v561 = vld [vmem:[%s3 + $0x264] sm:$0xf]
      %v562 = vld [vmem:[%s3 + $0x268] sm:$0xf]
      %v563 = vld [vmem:[%s3 + $0x26c] sm:$0xf]
      %v564 = vld [vmem:[%s3 + $0x270] sm:$0xf]
      %v565 = vld [vmem:[%s3 + $0x274] sm:$0xf]
      %v566 = vld [vmem:[%s3 + $0x278] sm:$0xf]
      %v567 = vld [vmem:[%s3 + $0x27c] sm:$0xf]
      %v568 = vld [vmem:[%s3 + $0x280] sm:$0xf]
      %v569 = vld [vmem:[%s3 + $0x284] sm:$0xf]
      %v570 = vld [vmem:[%s3 + $0x288] sm:$0xf]
      %v571 = vld [vmem:[%s3 + $0x28c] sm:$0xf]
      %v572 = vld [vmem:[%s3 + $0x290] sm:$0xf]
      %v573 = vld [vmem:[%s3 + $0x294] sm:$0xf]
      %v574 = vld [vmem:[%s3 + $0x298] sm:$0xf]
      %v575 = vld [vmem:[%s3 + $0x29c] sm:$0xf]
      %v576 = vld [vmem:[%s3 + $0x2a0] sm:$0xf]
      %v577 = vld [vmem:[%s3 + $0x2a4] sm:$0xf]
      %v578 = vld [vmem:[%s3 + $0x2a8] sm:$0xf]
      %v579 = vld [vmem:[%s3 + $0x2ac] sm:$0xf]
      %v580 = vld [vmem:[%s3 + $0x2b0] sm:$0xf]
      %v581 = vld [vmem:[%s3 + $0x2b4] sm:$0xf]
      %v582 = vld [vmem:[%s3 + $0x2b8] sm:$0xf]
      %v583 = vld [vmem:[%s3 + $0x2bc] sm:$0xf]
      %v584 = vld [vmem:[%s3 + $0x2c0] sm:$0xf]
      %v585 = vld [vmem:[%s3 + $0x2c4] sm:$0xf]
      %v586 = vld [vmem:[%s3 + $0x2c8] sm:$0xf]
      %v587 = vld [vmem:[%s3 + $0x2cc] sm:$0xf]
      %v588 = vld [vmem:[%s3 + $0x2d0] sm:$0xf]
      %v589 = vld [vmem:[%s3 + $0x2d4] sm:$0xf]
      %v590 = vld [vmem:[%s3 + $0x2d8] sm:$0xf]
      %v591 = vld [vmem:[%s3 + $0x2dc] sm:$0xf]
      %v592 = vld [vmem:[%s3 + $0x2e0] sm:$0xf]
      %v593 = vld [vmem:[%s3 + $0x2e4] sm:$0xf]
      %v594 = vld [vmem:[%s3 + $0x2e8] sm:$0xf]
      %v595 = vld [vmem:[%s3 + $0x2ec] sm:$0xf]
      %v596 = vld [vmem:[%s3 + $0x2f0] sm:$0xf]
      %v597 = vld [vmem:[%s3 + $0x2f4] sm:$0xf]
      %v598 = vld [vmem:[%s3 + $0x2f8] sm:$0xf]
      %v599 = vld [vmem:[%s3 + $0x2fc] sm:$0xf]
      %v600 = vld [vmem:[%s3 + $0x300] sm:$0xf]
      %v601 = vld [vmem:[%s3 + $0x304] sm:$0xf]
      %v602 = vld [vmem:[%s3 + $0x308] sm:$0xf]
      %v603 = vld [vmem:[%s3 + $0x30c] sm:$0xf]
      %v611 = vunpack.c.l.b16 %v401
      %v612 = vunpack.c.h.b16 %v401
      %v613 = vunpack.c.l.b16 %v402
      %v614 = vunpack.c.h.b16 %v402
      %v615 = vunpack.c.l.b16 %v403
      %v616 = vunpack.c.h.b16 %v403
      %v617 = vunpack.c.l.b16 %v404
      %v618 = vunpack.c.h.b16 %v404
      %v619 = vunpack.c.l.b16 %v405
      %v620 = vunpack.c.h.b16 %v405
      %v621 = vunpack.c.l.b16 %v406
      %v622 = vunpack.c.h.b16 %v406
      %v623 = vunpack.c.l.b16 %v407
      %v624 = vpack.c.b16 %v611, %v611
      %v625 = vpack.c.b16 %v612, %v612
      %v626 = vpack.c.b16 %v613, %v613
      %v627 = vpack.c.b16 %v614, %v614
      %v628 = vpack.c.b16 %v615, %v615
      %v629 = vpack.c.b16 %v616, %v616
      %v630 = vpack.c.b16 %v617, %v617
      %v631 = vpack.c.b16 %v618, %v618
      %v632 = vpack.c.b16 %v619, %v619
      %v633 = vpack.c.b16 %v620, %v620
      %v634 = vpack.c.b16 %v621, %v621
      %v635 = vpack.c.b16 %v622, %v622
      %v636 = vpack.c.b16 %v623, %v623
      %v845 = vunpack.c.l.b16 %v408
      %v846 = vunpack.c.l.b16 %v409
      %v847 = vunpack.c.l.b16 %v410
      %v848 = vunpack.c.l.b16 %v411
      %v849 = vunpack.c.l.b16 %v412
      %v850 = vunpack.c.l.b16 %v413
      %v851 = vunpack.c.l.b16 %v414
      %v852 = vunpack.c.l.b16 %v415
      %v853 = vunpack.c.l.b16 %v416
      %v854 = vunpack.c.l.b16 %v417
      %v855 = vunpack.c.l.b16 %v418
      %v856 = vunpack.c.l.b16 %v419
      %v857 = vunpack.c.l.b16 %v420
      %v858 = vunpack.c.l.b16 %v421
      %v859 = vunpack.c.l.b16 %v422
      %v860 = vunpack.c.l.b16 %v423
      %v861 = vunpack.c.l.b16 %v424
      %v862 = vunpack.c.l.b16 %v425
      %v863 = vunpack.c.l.b16 %v426
      %v864 = vunpack.c.l.b16 %v427
      %v865 = vunpack.c.l.b16 %v428
      %v866 = vunpack.c.l.b16 %v429
      %v867 = vunpack.c.l.b16 %v430
      %v868 = vunpack.c.l.b16 %v431
      %v869 = vunpack.c.l.b16 %v432
      %v870 = vunpack.c.l.b16 %v433
      %v871 = vunpack.c.l.b16 %v434
      %v872 = vunpack.c.l.b16 %v435
      %v873 = vunpack.c.l.b16 %v436
      %v874 = vunpack.c.l.b16 %v437
      %v875 = vunpack.c.l.b16 %v438
      %v876 = vunpack.c.l.b16 %v439
      %v877 = vunpack.c.l.b16 %v440
      %v878 = vunpack.c.l.b16 %v441
      %v879 = vunpack.c.l.b16 %v442
      %v880 = vunpack.c.l.b16 %v443
      %v881 = vunpack.c.l.b16 %v444
      %v882 = vunpack.c.l.b16 %v445
      %v883 = vunpack.c.l.b16 %v446
      %v884 = vunpack.c.l.b16 %v447
      %v885 = vunpack.c.l.b16 %v448
      %v886 = vunpack.c.l.b16 %v449
      %v887 = vunpack.c.l.b16 %v450
      %v888 = vunpack.c.l.b16 %v451
      %v889 = vunpack.c.l.b16 %v452
      %v890 = vunpack.c.l.b16 %v453
      %v891 = vunpack.c.l.b16 %v454
      %v892 = vunpack.c.l.b16 %v455
      %v893 = vunpack.c.l.b16 %v456
      %v894 = vunpack.c.l.b16 %v457
      %v895 = vunpack.c.l.b16 %v458
      %v896 = vunpack.c.l.b16 %v459
      %v897 = vunpack.c.l.b16 %v460
      %v898 = vunpack.c.l.b16 %v461
      %v899 = vunpack.c.l.b16 %v462
      %v900 = vunpack.c.l.b16 %v463
      %v901 = vunpack.c.l.b16 %v464
      %v902 = vunpack.c.l.b16 %v465
      %v903 = vunpack.c.l.b16 %v466
      %v904 = vunpack.c.l.b16 %v467
      %v905 = vunpack.c.l.b16 %v468
      %v906 = vunpack.c.l.b16 %v469
      %v907 = vunpack.c.l.b16 %v470
      %v908 = vunpack.c.l.b16 %v471
      %v909 = vunpack.c.l.b16 %v472
      %v910 = vunpack.c.l.b16 %v473
      %v911 = vunpack.c.l.b16 %v474
      %v912 = vunpack.c.l.b16 %v475
      %v913 = vunpack.c.l.b16 %v476
      %v914 = vunpack.c.l.b16 %v477
      %v915 = vunpack.c.l.b16 %v478
      %v916 = vunpack.c.l.b16 %v479
      %v917 = vunpack.c.l.b16 %v480
      %v918 = vunpack.c.l.b16 %v481
      %v919 = vunpack.c.l.b16 %v482
      %v920 = vunpack.c.l.b16 %v483
      %v921 = vunpack.c.l.b16 %v484
      %v922 = vunpack.c.l.b16 %v485
      %v923 = vunpack.c.l.b16 %v486
      %v924 = vunpack.c.l.b16 %v487
      %v925 = vunpack.c.l.b16 %v488
      %v926 = vunpack.c.l.b16 %v489
      %v927 = vunpack.c.l.b16 %v490
      %v928 = vunpack.c.l.b16 %v491
      %v929 = vunpack.c.l.b16 %v492
      %v930 = vunpack.c.l.b16 %v493
      %v931 = vunpack.c.l.b16 %v494
      %v932 = vunpack.c.l.b16 %v495
      %v933 = vunpack.c.l.b16 %v496
      %v934 = vunpack.c.l.b16 %v497
      %v935 = vunpack.c.l.b16 %v498
      %v936 = vunpack.c.l.b16 %v499
      %v937 = vunpack.c.l.b16 %v500
      %v938 = vunpack.c.l.b16 %v501
      %v939 = vunpack.c.l.b16 %v502
      %v940 = vunpack.c.l.b16 %v503
      %v941 = vunpack.c.l.b16 %v504
      %v942 = vunpack.c.l.b16 %v505
      %v943 = vunpack.c.l.b16 %v506
      %v944 = vunpack.c.l.b16 %v507
      %v945 = vunpack.c.l.b16 %v508
      %v946 = vunpack.c.l.b16 %v509
      %v947 = vunpack.c.l.b16 %v510
      %v948 = vunpack.c.l.b16 %v511
      %v949 = vunpack.c.l.b16 %v512
      %v950 = vunpack.c.l.b16 %v513
      %v951 = vunpack.c.l.b16 %v514
      %v952 = vunpack.c.l.b16 %v515
      %v953 = vunpack.c.l.b16 %v516
      %v954 = vunpack.c.l.b16 %v517
      %v955 = vunpack.c.l.b16 %v518
      %v956 = vunpack.c.l.b16 %v519
      %v957 = vunpack.c.l.b16 %v520
      %v958 = vunpack.c.l.b16 %v521
      %v959 = vunpack.c.l.b16 %v522
      %v960 = vunpack.c.l.b16 %v523
      %v961 = vunpack.c.l.b16 %v524
      %v962 = vunpack.c.l.b16 %v525
      %v963 = vunpack.c.l.b16 %v526
      %v964 = vunpack.c.l.b16 %v527
      %v965 = vunpack.c.l.b16 %v528
      %v966 = vunpack.c.l.b16 %v529
      %v967 = vunpack.c.l.b16 %v530
      %v968 = vunpack.c.l.b16 %v531
      %v969 = vunpack.c.l.b16 %v532
      %v970 = vunpack.c.l.b16 %v533
      %v971 = vunpack.c.l.b16 %v534
      %v972 = vunpack.c.l.b16 %v535
      %v973 = vunpack.c.l.b16 %v536
      %v974 = vunpack.c.l.b16 %v537
      %v975 = vunpack.c.l.b16 %v538
      %v976 = vunpack.c.l.b16 %v539
      %v977 = vunpack.c.l.b16 %v540
      %v978 = vunpack.c.l.b16 %v541
      %v979 = vunpack.c.l.b16 %v542
      %v980 = vunpack.c.l.b16 %v543
      %v981 = vunpack.c.l.b16 %v544
      %v982 = vunpack.c.l.b16 %v545
      %v983 = vunpack.c.l.b16 %v546
      %v984 = vunpack.c.l.b16 %v547
      %v985 = vunpack.c.l.b16 %v548
      %v986 = vunpack.c.l.b16 %v549
      %v987 = vunpack.c.l.b16 %v550
      %v988 = vunpack.c.l.b16 %v551
      %v989 = vunpack.c.l.b16 %v552
      %v990 = vunpack.c.l.b16 %v553
      %v991 = vunpack.c.l.b16 %v554
      %v992 = vunpack.c.l.b16 %v555
      %v993 = vunpack.c.l.b16 %v556
      %v994 = vunpack.c.l.b16 %v557
      %v995 = vunpack.c.l.b16 %v558
      %v996 = vunpack.c.l.b16 %v559
      %v997 = vunpack.c.l.b16 %v560
      %v998 = vunpack.c.l.b16 %v561
      %v999 = vunpack.c.l.b16 %v562
      %v1000 = vunpack.c.l.b16 %v563
      %v1001 = vunpack.c.l.b16 %v564
      %v1002 = vunpack.c.l.b16 %v565
      %v1003 = vunpack.c.l.b16 %v566
      %v1004 = vunpack.c.l.b16 %v567
      %v1005 = vunpack.c.l.b16 %v568
      %v1006 = vunpack.c.l.b16 %v569
      %v1007 = vunpack.c.l.b16 %v570
      %v1008 = vunpack.c.l.b16 %v571
      %v1009 = vunpack.c.l.b16 %v572
      %v1010 = vunpack.c.l.b16 %v573
      %v1011 = vunpack.c.l.b16 %v574
      %v1012 = vunpack.c.l.b16 %v575
      %v1013 = vunpack.c.l.b16 %v576
      %v1014 = vunpack.c.l.b16 %v577
      %v1015 = vunpack.c.l.b16 %v578
      %v1016 = vunpack.c.l.b16 %v579
      %v1017 = vunpack.c.l.b16 %v580
      %v1018 = vunpack.c.l.b16 %v581
      %v1019 = vunpack.c.l.b16 %v582
      %v1020 = vunpack.c.l.b16 %v583
      %v1021 = vunpack.c.l.b16 %v584
      %v1022 = vunpack.c.l.b16 %v585
      %v1023 = vunpack.c.l.b16 %v586
      %v1024 = vunpack.c.l.b16 %v587
      %v1025 = vunpack.c.l.b16 %v588
      %v1026 = vunpack.c.l.b16 %v589
      %v1027 = vunpack.c.l.b16 %v590
      %v1028 = vunpack.c.l.b16 %v591
      %v1029 = vunpack.c.l.b16 %v592
      %v1030 = vunpack.c.l.b16 %v593
      %v1031 = vunpack.c.l.b16 %v594
      %v1032 = vunpack.c.l.b16 %v595
      %v1033 = vunpack.c.l.b16 %v596
      %v1034 = vunpack.c.l.b16 %v597
      %v1035 = vunpack.c.l.b16 %v598
      %v1036 = vunpack.c.l.b16 %v599
      %v1037 = vunpack.c.l.b16 %v600
      %v1038 = vunpack.c.l.b16 %v601
      %v1039 = vunpack.c.l.b16 %v602
      %v1040 = vunpack.c.l.b16 %v603
      %v1041 = vpack.c.b16 %v846, %v845
      %v1042 = vpack.c.b16 %v848, %v847
      %v1043 = vpack.c.b16 %v850, %v849
      %v1044 = vpack.c.b16 %v852, %v851
      %v1045 = vpack.c.b16 %v854, %v853
      %v1046 = vpack.c.b16 %v856, %v855
      %v1047 = vpack.c.b16 %v858, %v857
      %v1048 = vpack.c.b16 %v860, %v859
      %v1049 = vpack.c.b16 %v862, %v861
      %v1050 = vpack.c.b16 %v864, %v863
      %v1051 = vpack.c.b16 %v866, %v865
      %v1052 = vpack.c.b16 %v868, %v867
      %v1053 = vpack.c.b16 %v870, %v869
      %v1054 = vpack.c.b16 %v872, %v871
      %v1055 = vpack.c.b16 %v874, %v873
      %v1056 = vpack.c.b16 %v876, %v875
      %v1057 = vpack.c.b16 %v878, %v877
      %v1058 = vpack.c.b16 %v880, %v879
      %v1059 = vpack.c.b16 %v882, %v881
      %v1060 = vpack.c.b16 %v884, %v883
      %v1061 = vpack.c.b16 %v886, %v885
      %v1062 = vpack.c.b16 %v888, %v887
      %v1063 = vpack.c.b16 %v890, %v889
      %v1064 = vpack.c.b16 %v892, %v891
      %v1065 = vpack.c.b16 %v894, %v893
      %v1066 = vpack.c.b16 %v896, %v895
      %v1067 = vpack.c.b16 %v898, %v897
      %v1068 = vpack.c.b16 %v900, %v899
      %v1069 = vpack.c.b16 %v902, %v901
      %v1070 = vpack.c.b16 %v904, %v903
      %v1071 = vpack.c.b16 %v906, %v905
      %v1072 = vpack.c.b16 %v908, %v907
      %v1073 = vpack.c.b16 %v910, %v909
      %v1074 = vpack.c.b16 %v912, %v911
      %v1075 = vpack.c.b16 %v914, %v913
      %v1076 = vpack.c.b16 %v916, %v915
      %v1077 = vpack.c.b16 %v918, %v917
      %v1078 = vpack.c.b16 %v920, %v919
      %v1079 = vpack.c.b16 %v922, %v921
      %v1080 = vpack.c.b16 %v924, %v923
      %v1081 = vpack.c.b16 %v926, %v925
      %v1082 = vpack.c.b16 %v928, %v927
      %v1083 = vpack.c.b16 %v930, %v929
      %v1084 = vpack.c.b16 %v932, %v931
      %v1085 = vpack.c.b16 %v934, %v933
      %v1086 = vpack.c.b16 %v936, %v935
      %v1087 = vpack.c.b16 %v938, %v937
      %v1088 = vpack.c.b16 %v940, %v939
      %v1089 = vpack.c.b16 %v942, %v941
      %v1090 = vpack.c.b16 %v944, %v943
      %v1091 = vpack.c.b16 %v946, %v945
      %v1092 = vpack.c.b16 %v948, %v947
      %v1093 = vpack.c.b16 %v950, %v949
      %v1094 = vpack.c.b16 %v952, %v951
      %v1095 = vpack.c.b16 %v954, %v953
      %v1096 = vpack.c.b16 %v956, %v955
      %v1097 = vpack.c.b16 %v958, %v957
      %v1098 = vpack.c.b16 %v960, %v959
      %v1099 = vpack.c.b16 %v962, %v961
      %v1100 = vpack.c.b16 %v964, %v963
      %v1101 = vpack.c.b16 %v966, %v965
      %v1102 = vpack.c.b16 %v968, %v967
      %v1103 = vpack.c.b16 %v970, %v969
      %v1104 = vpack.c.b16 %v972, %v971
      %v1105 = vpack.c.b16 %v974, %v973
      %v1106 = vpack.c.b16 %v976, %v975
      %v1107 = vpack.c.b16 %v978, %v977
      %v1108 = vpack.c.b16 %v980, %v979
      %v1109 = vpack.c.b16 %v982, %v981
      %v1110 = vpack.c.b16 %v984, %v983
      %v1111 = vpack.c.b16 %v986, %v985
      %v1112 = vpack.c.b16 %v988, %v987
      %v1113 = vpack.c.b16 %v990, %v989
      %v1114 = vpack.c.b16 %v992, %v991
      %v1115 = vpack.c.b16 %v994, %v993
      %v1116 = vpack.c.b16 %v996, %v995
      %v1117 = vpack.c.b16 %v998, %v997
      %v1118 = vpack.c.b16 %v1000, %v999
      %v1119 = vpack.c.b16 %v1002, %v1001
      %v1120 = vpack.c.b16 %v1004, %v1003
      %v1121 = vpack.c.b16 %v1006, %v1005
      %v1122 = vpack.c.b16 %v1008, %v1007
      %v1123 = vpack.c.b16 %v1010, %v1009
      %v1124 = vpack.c.b16 %v1012, %v1011
      %v1125 = vpack.c.b16 %v1014, %v1013
      %v1126 = vpack.c.b16 %v1016, %v1015
      %v1127 = vpack.c.b16 %v1018, %v1017
      %v1128 = vpack.c.b16 %v1020, %v1019
      %v1129 = vpack.c.b16 %v1022, %v1021
      %v1130 = vpack.c.b16 %v1024, %v1023
      %v1131 = vpack.c.b16 %v1026, %v1025
      %v1132 = vpack.c.b16 %v1028, %v1027
      %v1133 = vpack.c.b16 %v1030, %v1029
      %v1134 = vpack.c.b16 %v1032, %v1031
      %v1135 = vpack.c.b16 %v1034, %v1033
      %v1136 = vpack.c.b16 %v1036, %v1035
      %v1137 = vpack.c.b16 %v1038, %v1037
      %v1138 = vpack.c.b16 %v1040, %v1039
      %vm1237 = vcmask 261120
      %v1239 = vsel %vm1237, %v636, 0
      %1241 = vmatprep.subr.bf16.mxu0 0
      %1242 = vmatpush1.bf16.msra.mxu0 %v1041
      %1243 = vmatprep.subr.bf16.mxu0 0
      %1244 = vmatpush1.bf16.msra.mxu0 %v1042
      %1245 = vmatprep.subr.bf16.mxu0 0
      %1246 = vmatpush1.bf16.msra.mxu0 %v1043
      %1247 = vmatprep.subr.bf16.mxu0 0
      %1248 = vmatpush1.bf16.msra.mxu0 %v1044
      %1249 = vmatprep.subr.bf16.mxu0 0
      %1250 = vmatpush1.bf16.msra.mxu0 %v1045
      %1251 = vmatprep.subr.bf16.mxu0 0
      %1252 = vmatpush1.bf16.msra.mxu0 %v1046
      %1253 = vmatprep.subr.bf16.mxu0 0
      %1254 = vmatpush1.bf16.msra.mxu0 %v1047
      %1255 = vmatprep.subr.bf16.mxu0 0
      %1256 = vmatpush1.bf16.msra.mxu0 %v1048
      %1257 = vmatprep.subr.bf16.mxu0 0
      %1258 = vmatpush1.bf16.msra.mxu0 %v1049
      %1259 = vmatprep.subr.bf16.mxu0 0
      %1260 = vmatpush1.bf16.msra.mxu0 %v1050
      %1261 = vmatprep.subr.bf16.mxu0 0
      %1262 = vmatpush1.bf16.msra.mxu0 %v1051
      %1263 = vmatprep.subr.bf16.mxu0 0
      %1264 = vmatpush1.bf16.msra.mxu0 %v1052
      %1265 = vmatprep.subr.bf16.mxu0 0
      %1266 = vmatpush1.bf16.msra.mxu0 %v1053
      %1267 = vmatprep.subr.bf16.mxu0 0
      %1268 = vmatpush1.bf16.msra.mxu0 %v1054
      %1269 = vmatprep.subr.bf16.mxu0 0
      %1270 = vmatpush1.bf16.msra.mxu0 %v1055
      %1271 = vmatprep.subr.bf16.mxu0 0
      %1272 = vmatpush1.bf16.msra.mxu0 %v1056
      %1273 = vmatprep.mubr.bf16.mxu0 %v625
      %1274 = vmatmul.mubr.bf16.gmra.mrb[0].mxu0 %v624
      %v1275 = vpop.f32.mrb[0].mxu0
      %v1276 = vadd.f32 0.0, %v1275
      %v1277 = vpop.f32.mrb[0].mxu0
      %v1278 = vpop.f32.mrb[0].mxu0
      %v1279 = vpop.f32.mrb[0].mxu0
      %1280 = vdwg.mxu0
      %1281 = vmatprep.subr.bf16.mxu0 0
      %1282 = vmatpush1.bf16.msra.mxu0 %v1057
      %1283 = vmatprep.subr.bf16.mxu0 0
      %1284 = vmatpush1.bf16.msra.mxu0 %v1058
      %1285 = vmatprep.subr.bf16.mxu0 0
      %1286 = vmatpush1.bf16.msra.mxu0 %v1059
      %1287 = vmatprep.subr.bf16.mxu0 0
      %1288 = vmatpush1.bf16.msra.mxu0 %v1060
      %1289 = vmatprep.subr.bf16.mxu0 0
      %1290 = vmatpush1.bf16.msra.mxu0 %v1061
      %1291 = vmatprep.subr.bf16.mxu0 0
      %1292 = vmatpush1.bf16.msra.mxu0 %v1062
      %1293 = vmatprep.subr.bf16.mxu0 0
      %1294 = vmatpush1.bf16.msra.mxu0 %v1063
      %1295 = vmatprep.subr.bf16.mxu0 0
      %1296 = vmatpush1.bf16.msra.mxu0 %v1064
      %1297 = vmatprep.subr.bf16.mxu0 0
      %1298 = vmatpush1.bf16.msra.mxu0 %v1065
      %1299 = vmatprep.subr.bf16.mxu0 0
      %1300 = vmatpush1.bf16.msra.mxu0 %v1066
      %1301 = vmatprep.subr.bf16.mxu0 0
      %1302 = vmatpush1.bf16.msra.mxu0 %v1067
      %1303 = vmatprep.subr.bf16.mxu0 0
      %1304 = vmatpush1.bf16.msra.mxu0 %v1068
      %1305 = vmatprep.subr.bf16.mxu0 0
      %1306 = vmatpush1.bf16.msra.mxu0 %v1069
      %1307 = vmatprep.subr.bf16.mxu0 0
      %1308 = vmatpush1.bf16.msra.mxu0 %v1070
      %1309 = vmatprep.subr.bf16.mxu0 0
      %1310 = vmatpush1.bf16.msra.mxu0 %v1071
      %1311 = vmatprep.subr.bf16.mxu0 0
      %1312 = vmatpush1.bf16.msra.mxu0 %v1072
      %1313 = vmatprep.mubr.bf16.mxu0 %v627
      %1314 = vmatmul.mubr.bf16.gmra.mrb[0].mxu0 %v626
      %v1315 = vpop.f32.mrb[0].mxu0
      %v1316 = vadd.f32 %v1276, %v1315
      %v1317 = vpop.f32.mrb[0].mxu0
      %v1318 = vpop.f32.mrb[0].mxu0
      %v1319 = vpop.f32.mrb[0].mxu0
      %1320 = vdwg.mxu0
      %1321 = vmatprep.subr.bf16.mxu0 0
      %1322 = vmatpush1.bf16.msra.mxu0 %v1073
      %1323 = vmatprep.subr.bf16.mxu0 0
      %1324 = vmatpush1.bf16.msra.mxu0 %v1074
      %1325 = vmatprep.subr.bf16.mxu0 0
      %1326 = vmatpush1.bf16.msra.mxu0 %v1075
      %1327 = vmatprep.subr.bf16.mxu0 0
      %1328 = vmatpush1.bf16.msra.mxu0 %v1076
      %1329 = vmatprep.subr.bf16.mxu0 0
      %1330 = vmatpush1.bf16.msra.mxu0 %v1077
      %1331 = vmatprep.subr.bf16.mxu0 0
      %1332 = vmatpush1.bf16.msra.mxu0 %v1078
      %1333 = vmatprep.subr.bf16.mxu0 0
      %1334 = vmatpush1.bf16.msra.mxu0 %v1079
      %1335 = vmatprep.subr.bf16.mxu0 0
      %1336 = vmatpush1.bf16.msra.mxu0 %v1080
      %1337 = vmatprep.subr.bf16.mxu0 0
      %1338 = vmatpush1.bf16.msra.mxu0 %v1081
      %1339 = vmatprep.subr.bf16.mxu0 0
      %1340 = vmatpush1.bf16.msra.mxu0 %v1082
      %1341 = vmatprep.subr.bf16.mxu0 0
      %1342 = vmatpush1.bf16.msra.mxu0 %v1083
      %1343 = vmatprep.subr.bf16.mxu0 0
      %1344 = vmatpush1.bf16.msra.mxu0 %v1084
      %1345 = vmatprep.subr.bf16.mxu0 0
      %1346 = vmatpush1.bf16.msra.mxu0 %v1085
      %1347 = vmatprep.subr.bf16.mxu0 0
      %1348 = vmatpush1.bf16.msra.mxu0 %v1086
      %1349 = vmatprep.subr.bf16.mxu0 0
      %1350 = vmatpush1.bf16.msra.mxu0 %v1087
      %1351 = vmatprep.subr.bf16.mxu0 0
      %1352 = vmatpush1.bf16.msra.mxu0 %v1088
      %1353 = vmatprep.mubr.bf16.mxu0 %v629
      %1354 = vmatmul.mubr.bf16.gmra.mrb[0].mxu0 %v628
      %v1355 = vpop.f32.mrb[0].mxu0
      %v1356 = vadd.f32 %v1316, %v1355
      %v1357 = vpop.f32.mrb[0].mxu0
      %v1358 = vpop.f32.mrb[0].mxu0
      %v1359 = vpop.f32.mrb[0].mxu0
      %1360 = vdwg.mxu0
      %1361 = vmatprep.subr.bf16.mxu0 0
      %1362 = vmatpush1.bf16.msra.mxu0 %v1089
      %1363 = vmatprep.subr.bf16.mxu0 0
      %1364 = vmatpush1.bf16.msra.mxu0 %v1090
      %1365 = vmatprep.subr.bf16.mxu0 0
      %1366 = vmatpush1.bf16.msra.mxu0 %v1091
      %1367 = vmatprep.subr.bf16.mxu0 0
      %1368 = vmatpush1.bf16.msra.mxu0 %v1092
      %1369 = vmatprep.subr.bf16.mxu0 0
      %1370 = vmatpush1.bf16.msra.mxu0 %v1093
      %1371 = vmatprep.subr.bf16.mxu0 0
      %1372 = vmatpush1.bf16.msra.mxu0 %v1094
      %1373 = vmatprep.subr.bf16.mxu0 0
      %1374 = vmatpush1.bf16.msra.mxu0 %v1095
      %1375 = vmatprep.subr.bf16.mxu0 0
      %1376 = vmatpush1.bf16.msra.mxu0 %v1096
      %1377 = vmatprep.subr.bf16.mxu0 0
      %1378 = vmatpush1.bf16.msra.mxu0 %v1097
      %1379 = vmatprep.subr.bf16.mxu0 0
      %1380 = vmatpush1.bf16.msra.mxu0 %v1098
      %1381 = vmatprep.subr.bf16.mxu0 0
      %1382 = vmatpush1.bf16.msra.mxu0 %v1099
      %1383 = vmatprep.subr.bf16.mxu0 0
      %1384 = vmatpush1.bf16.msra.mxu0 %v1100
      %1385 = vmatprep.subr.bf16.mxu0 0
      %1386 = vmatpush1.bf16.msra.mxu0 %v1101
      %1387 = vmatprep.subr.bf16.mxu0 0
      %1388 = vmatpush1.bf16.msra.mxu0 %v1102
      %1389 = vmatprep.subr.bf16.mxu0 0
      %1390 = vmatpush1.bf16.msra.mxu0 %v1103
      %1391 = vmatprep.subr.bf16.mxu0 0
      %1392 = vmatpush1.bf16.msra.mxu0 %v1104
      %1393 = vmatprep.mubr.bf16.mxu0 %v631
      %1394 = vmatmul.mubr.bf16.gmra.mrb[0].mxu0 %v630
      %v1395 = vpop.f32.mrb[0].mxu0
      %v1396 = vadd.f32 %v1356, %v1395
      %v1397 = vpop.f32.mrb[0].mxu0
      %v1398 = vpop.f32.mrb[0].mxu0
      %v1399 = vpop.f32.mrb[0].mxu0
      %1400 = vdwg.mxu0
      %1401 = vmatprep.subr.bf16.mxu0 0
      %1402 = vmatpush1.bf16.msra.mxu0 %v1105
      %1403 = vmatprep.subr.bf16.mxu0 0
      %1404 = vmatpush1.bf16.msra.mxu0 %v1106
      %1405 = vmatprep.subr.bf16.mxu0 0
      %1406 = vmatpush1.bf16.msra.mxu0 %v1107
      %1407 = vmatprep.subr.bf16.mxu0 0
      %1408 = vmatpush1.bf16.msra.mxu0 %v1108
      %1409 = vmatprep.subr.bf16.mxu0 0
      %1410 = vmatpush1.bf16.msra.mxu0 %v1109
      %1411 = vmatprep.subr.bf16.mxu0 0
      %1412 = vmatpush1.bf16.msra.mxu0 %v1110
      %1413 = vmatprep.subr.bf16.mxu0 0
      %1414 = vmatpush1.bf16.msra.mxu0 %v1111
      %1415 = vmatprep.subr.bf16.mxu0 0
      %1416 = vmatpush1.bf16.msra.mxu0 %v1112
      %1417 = vmatprep.subr.bf16.mxu0 0
      %1418 = vmatpush1.bf16.msra.mxu0 %v1113
      %1419 = vmatprep.subr.bf16.mxu0 0
      %1420 = vmatpush1.bf16.msra.mxu0 %v1114
      %1421 = vmatprep.subr.bf16.mxu0 0
      %1422 = vmatpush1.bf16.msra.mxu0 %v1115
      %1423 = vmatprep.subr.bf16.mxu0 0
      %1424 = vmatpush1.bf16.msra.mxu0 %v1116
      %1425 = vmatprep.subr.bf16.mxu0 0
      %1426 = vmatpush1.bf16.msra.mxu0 %v1117
      %1427 = vmatprep.subr.bf16.mxu0 0
      %1428 = vmatpush1.bf16.msra.mxu0 %v1118
      %1429 = vmatprep.subr.bf16.mxu0 0
      %1430 = vmatpush1.bf16.msra.mxu0 %v1119
      %1431 = vmatprep.subr.bf16.mxu0 0
      %1432 = vmatpush1.bf16.msra.mxu0 %v1120
      %1433 = vmatprep.mubr.bf16.mxu0 %v633
      %1434 = vmatmul.mubr.bf16.gmra.mrb[0].mxu0 %v632
      %v1435 = vpop.f32.mrb[0].mxu0
      %v1436 = vadd.f32 %v1396, %v1435
      %v1437 = vpop.f32.mrb[0].mxu0
      %v1438 = vpop.f32.mrb[0].mxu0
      %v1439 = vpop.f32.mrb[0].mxu0
      %1440 = vdwg.mxu0
      %1441 = vmatprep.subr.bf16.mxu0 0
      %1442 = vmatpush1.bf16.msra.mxu0 %v1121
      %1443 = vmatprep.subr.bf16.mxu0 0
      %1444 = vmatpush1.bf16.msra.mxu0 %v1122
      %1445 = vmatprep.subr.bf16.mxu0 0
      %1446 = vmatpush1.bf16.msra.mxu0 %v1123
      %1447 = vmatprep.subr.bf16.mxu0 0
      %1448 = vmatpush1.bf16.msra.mxu0 %v1124
      %1449 = vmatprep.subr.bf16.mxu0 0
      %1450 = vmatpush1.bf16.msra.mxu0 %v1125
      %1451 = vmatprep.subr.bf16.mxu0 0
      %1452 = vmatpush1.bf16.msra.mxu0 %v1126
      %1453 = vmatprep.subr.bf16.mxu0 0
      %1454 = vmatpush1.bf16.msra.mxu0 %v1127
      %1455 = vmatprep.subr.bf16.mxu0 0
      %1456 = vmatpush1.bf16.msra.mxu0 %v1128
      %1457 = vmatprep.subr.bf16.mxu0 0
      %1458 = vmatpush1.bf16.msra.mxu0 %v1129
      %1459 = vmatprep.subr.bf16.mxu0 0
      %1460 = vmatpush1.bf16.msra.mxu0 %v1130
      %1461 = vmatprep.subr.bf16.mxu0 0
      %1462 = vmatpush1.bf16.msra.mxu0 %v1131
      %1463 = vmatprep.subr.bf16.mxu0 0
      %1464 = vmatpush1.bf16.msra.mxu0 %v1132
      %1465 = vmatprep.subr.bf16.mxu0 0
      %1466 = vmatpush1.bf16.msra.mxu0 %v1133
      %1467 = vmatprep.subr.bf16.mxu0 0
      %1468 = vmatpush1.bf16.msra.mxu0 %v1134
      %1469 = vmatprep.subr.bf16.mxu0 0
      %1470 = vmatpush1.bf16.msra.mxu0 %v1135
      %1471 = vmatprep.subr.bf16.mxu0 0
      %1472 = vmatpush1.bf16.msra.mxu0 %v1136
      %1473 = vmatprep.mubr.bf16.mxu0 %v635
      %1474 = vmatmul.mubr.bf16.gmra.mrb[0].mxu0 %v634
      %v1475 = vpop.f32.mrb[0].mxu0
      %v1476 = vadd.f32 %v1436, %v1475
      %v1477 = vpop.f32.mrb[0].mxu0
      %v1478 = vpop.f32.mrb[0].mxu0
      %v1479 = vpop.f32.mrb[0].mxu0
      %1480 = vdwg.mxu0
      %1481 = vmatprep.subr.bf16.mxu0 0
      %1482 = vmatpush1.bf16.msra.mxu0 %v1137
      %1483 = vmatprep.subr.bf16.mxu0 0
      %1484 = vmatpush1.bf16.msra.mxu0 %v1138
      %1485 = vmatprep.subr.bf16.mxu0 0
      %1486 = vmatpush1.bf16.msra.mxu0 0
      %1487 = vmatprep.subr.bf16.mxu0 0
      %1488 = vmatpush1.bf16.msra.mxu0 0
      %1489 = vmatprep.subr.bf16.mxu0 0
      %1490 = vmatpush1.bf16.msra.mxu0 0
      %1491 = vmatprep.subr.bf16.mxu0 0
      %1492 = vmatpush1.bf16.msra.mxu0 0
      %1493 = vmatprep.subr.bf16.mxu0 0
      %1494 = vmatpush1.bf16.msra.mxu0 0
      %1495 = vmatprep.subr.bf16.mxu0 0
      %1496 = vmatpush1.bf16.msra.mxu0 0
      %1497 = vmatprep.subr.bf16.mxu0 0
      %1498 = vmatpush1.bf16.msra.mxu0 0
      %1499 = vmatprep.subr.bf16.mxu0 0
      %1500 = vmatpush1.bf16.msra.mxu0 0
      %1501 = vmatprep.subr.bf16.mxu0 0
      %1502 = vmatpush1.bf16.msra.mxu0 0
      %1503 = vmatprep.subr.bf16.mxu0 0
      %1504 = vmatpush1.bf16.msra.mxu0 0
      %1505 = vmatprep.subr.bf16.mxu0 0
      %1506 = vmatpush1.bf16.msra.mxu0 0
      %1507 = vmatprep.subr.bf16.mxu0 0
      %1508 = vmatpush1.bf16.msra.mxu0 0
      %1509 = vmatprep.subr.bf16.mxu0 0
      %1510 = vmatpush1.bf16.msra.mxu0 0
      %1511 = vmatprep.subr.bf16.mxu0 0
      %1512 = vmatpush1.bf16.msra.mxu0 0
      %1513 = vmatprep.mubr.bf16.mxu0 0
      %1514 = vmatmul.mubr.bf16.gmra.mrb[0].mxu0 %v1239
      %v1515 = vpop.f32.mrb[0].mxu0
      %v1516 = vadd.f32 %v1476, %v1515
      %v1517 = vpop.f32.mrb[0].mxu0
      %v1518 = vpop.f32.mrb[0].mxu0
      %v1519 = vpop.f32.mrb[0].mxu0
      %1520 = vdwg.mxu0
      %v1521 = vld [vmem:[%s389] sm:$0xff]
      %v1522 = vld [vmem:[%s389 + $0x8] sm:$0xff]
      %v1523 = vld [vmem:[%s389 + $0x10] sm:$0xff]
      %v1524 = vld [vmem:[%s389 + $0x18] sm:$0xff]
      %v1525 = vld [vmem:[%s389 + $0x20] sm:$0xff]
      %v1526 = vld [vmem:[%s389 + $0x28] sm:$0xff]
      %v1527 = vld [vmem:[%s389 + $0x30] sm:$0xf]
      %v1535 = vunpack.c.l.b16 %v1521
      %v1536 = vunpack.c.h.b16 %v1521
      %v1537 = vunpack.c.l.b16 %v1522
      %v1538 = vunpack.c.h.b16 %v1522
      %v1539 = vunpack.c.l.b16 %v1523
      %v1540 = vunpack.c.h.b16 %v1523
      %v1541 = vunpack.c.l.b16 %v1524
      %v1542 = vunpack.c.h.b16 %v1524
      %v1543 = vunpack.c.l.b16 %v1525
      %v1544 = vunpack.c.h.b16 %v1525
      %v1545 = vunpack.c.l.b16 %v1526
      %v1546 = vunpack.c.h.b16 %v1526
      %v1547 = vunpack.c.l.b16 %v1527
      %v1548 = vpack.c.b16 %v1535, %v1535
      %v1549 = vpack.c.b16 %v1536, %v1536
      %v1550 = vpack.c.b16 %v1537, %v1537
      %v1551 = vpack.c.b16 %v1538, %v1538
      %v1552 = vpack.c.b16 %v1539, %v1539
      %v1553 = vpack.c.b16 %v1540, %v1540
      %v1554 = vpack.c.b16 %v1541, %v1541
      %v1555 = vpack.c.b16 %v1542, %v1542
      %v1556 = vpack.c.b16 %v1543, %v1543
      %v1557 = vpack.c.b16 %v1544, %v1544
      %v1558 = vpack.c.b16 %v1545, %v1545
      %v1559 = vpack.c.b16 %v1546, %v1546
      %v1560 = vpack.c.b16 %v1547, %v1547
      %v1574 = vsel %vm1237, %v1560, 0
      %1576 = vmatprep.subr.bf16.mxu0 0
      %1577 = vmatpush1.bf16.msra.mxu0 %v1041
      %1578 = vmatprep.subr.bf16.mxu0 0
      %1579 = vmatpush1.bf16.msra.mxu0 %v1042
      %1580 = vmatprep.subr.bf16.mxu0 0
      %1581 = vmatpush1.bf16.msra.mxu0 %v1043
      %1582 = vmatprep.subr.bf16.mxu0 0
      %1583 = vmatpush1.bf16.msra.mxu0 %v1044
      %1584 = vmatprep.subr.bf16.mxu0 0
      %1585 = vmatpush1.bf16.msra.mxu0 %v1045
      %1586 = vmatprep.subr.bf16.mxu0 0
      %1587 = vmatpush1.bf16.msra.mxu0 %v1046
      %1588 = vmatprep.subr.bf16.mxu0 0
      %1589 = vmatpush1.bf16.msra.mxu0 %v1047
      %1590 = vmatprep.subr.bf16.mxu0 0
      %1591 = vmatpush1.bf16.msra.mxu0 %v1048
      %1592 = vmatprep.subr.bf16.mxu0 0
      %1593 = vmatpush1.bf16.msra.mxu0 %v1049
      %1594 = vmatprep.subr.bf16.mxu0 0
      %1595 = vmatpush1.bf16.msra.mxu0 %v1050
      %1596 = vmatprep.subr.bf16.mxu0 0
      %1597 = vmatpush1.bf16.msra.mxu0 %v1051
      %1598 = vmatprep.subr.bf16.mxu0 0
      %1599 = vmatpush1.bf16.msra.mxu0 %v1052
      %1600 = vmatprep.subr.bf16.mxu0 0
      %1601 = vmatpush1.bf16.msra.mxu0 %v1053
      %1602 = vmatprep.subr.bf16.mxu0 0
      %1603 = vmatpush1.bf16.msra.mxu0 %v1054
      %1604 = vmatprep.subr.bf16.mxu0 0
      %1605 = vmatpush1.bf16.msra.mxu0 %v1055
      %1606 = vmatprep.subr.bf16.mxu0 0
      %1607 = vmatpush1.bf16.msra.mxu0 %v1056
      %1608 = vmatprep.mubr.bf16.mxu0 %v1549
      %1609 = vmatmul.mubr.bf16.gmra.mrb[0].mxu0 %v1548
      %v1610 = vpop.f32.mrb[0].mxu0
      %v1611 = vadd.f32 0.0, %v1610
      %v1612 = vpop.f32.mrb[0].mxu0
      %v1613 = vpop.f32.mrb[0].mxu0
      %v1614 = vpop.f32.mrb[0].mxu0
      %1615 = vdwg.mxu0
      %1616 = vmatprep.subr.bf16.mxu0 0
      %1617 = vmatpush1.bf16.msra.mxu0 %v1057
      %1618 = vmatprep.subr.bf16.mxu0 0
      %1619 = vmatpush1.bf16.msra.mxu0 %v1058
      %1620 = vmatprep.subr.bf16.mxu0 0
      %1621 = vmatpush1.bf16.msra.mxu0 %v1059
      %1622 = vmatprep.subr.bf16.mxu0 0
      %1623 = vmatpush1.bf16.msra.mxu0 %v1060
      %1624 = vmatprep.subr.bf16.mxu0 0
      %1625 = vmatpush1.bf16.msra.mxu0 %v1061
      %1626 = vmatprep.subr.bf16.mxu0 0
      %1627 = vmatpush1.bf16.msra.mxu0 %v1062
      %1628 = vmatprep.subr.bf16.mxu0 0
      %1629 = vmatpush1.bf16.msra.mxu0 %v1063
      %1630 = vmatprep.subr.bf16.mxu0 0
      %1631 = vmatpush1.bf16.msra.mxu0 %v1064
      %1632 = vmatprep.subr.bf16.mxu0 0
      %1633 = vmatpush1.bf16.msra.mxu0 %v1065
      %1634 = vmatprep.subr.bf16.mxu0 0
      %1635 = vmatpush1.bf16.msra.mxu0 %v1066
      %1636 = vmatprep.subr.bf16.mxu0 0
      %1637 = vmatpush1.bf16.msra.mxu0 %v1067
      %1638 = vmatprep.subr.bf16.mxu0 0
      %1639 = vmatpush1.bf16.msra.mxu0 %v1068
      %1640 = vmatprep.subr.bf16.mxu0 0
      %1641 = vmatpush1.bf16.msra.mxu0 %v1069
      %1642 = vmatprep.subr.bf16.mxu0 0
      %1643 = vmatpush1.bf16.msra.mxu0 %v1070
      %1644 = vmatprep.subr.bf16.mxu0 0
      %1645 = vmatpush1.bf16.msra.mxu0 %v1071
      %1646 = vmatprep.subr.bf16.mxu0 0
      %1647 = vmatpush1.bf16.msra.mxu0 %v1072
      %1648 = vmatprep.mubr.bf16.mxu0 %v1551
      %1649 = vmatmul.mubr.bf16.gmra.mrb[0].mxu0 %v1550
      %v1650 = vpop.f32.mrb[0].mxu0
      %v1651 = vadd.f32 %v1611, %v1650
      %v1652 = vpop.f32.mrb[0].mxu0
      %v1653 = vpop.f32.mrb[0].mxu0
      %v1654 = vpop.f32.mrb[0].mxu0
      %1655 = vdwg.mxu0
      %1656 = vmatprep.subr.bf16.mxu0 0
      %1657 = vmatpush1.bf16.msra.mxu0 %v1073
      %1658 = vmatprep.subr.bf16.mxu0 0
      %1659 = vmatpush1.bf16.msra.mxu0 %v1074
      %1660 = vmatprep.subr.bf16.mxu0 0
      %1661 = vmatpush1.bf16.msra.mxu0 %v1075
      %1662 = vmatprep.subr.bf16.mxu0 0
      %1663 = vmatpush1.bf16.msra.mxu0 %v1076
      %1664 = vmatprep.subr.bf16.mxu0 0
      %1665 = vmatpush1.bf16.msra.mxu0 %v1077
      %1666 = vmatprep.subr.bf16.mxu0 0
      %1667 = vmatpush1.bf16.msra.mxu0 %v1078
      %1668 = vmatprep.subr.bf16.mxu0 0
      %1669 = vmatpush1.bf16.msra.mxu0 %v1079
      %1670 = vmatprep.subr.bf16.mxu0 0
      %1671 = vmatpush1.bf16.msra.mxu0 %v1080
      %1672 = vmatprep.subr.bf16.mxu0 0
      %1673 = vmatpush1.bf16.msra.mxu0 %v1081
      %1674 = vmatprep.subr.bf16.mxu0 0
      %1675 = vmatpush1.bf16.msra.mxu0 %v1082
      %1676 = vmatprep.subr.bf16.mxu0 0
      %1677 = vmatpush1.bf16.msra.mxu0 %v1083
      %1678 = vmatprep.subr.bf16.mxu0 0
      %1679 = vmatpush1.bf16.msra.mxu0 %v1084
      %1680 = vmatprep.subr.bf16.mxu0 0
      %1681 = vmatpush1.bf16.msra.mxu0 %v1085
      %1682 = vmatprep.subr.bf16.mxu0 0
      %1683 = vmatpush1.bf16.msra.mxu0 %v1086
      %1684 = vmatprep.subr.bf16.mxu0 0
      %1685 = vmatpush1.bf16.msra.mxu0 %v1087
      %1686 = vmatprep.subr.bf16.mxu0 0
      %1687 = vmatpush1.bf16.msra.mxu0 %v1088
      %1688 = vmatprep.mubr.bf16.mxu0 %v1553
      %1689 = vmatmul.mubr.bf16.gmra.mrb[0].mxu0 %v1552
      %v1690 = vpop.f32.mrb[0].mxu0
      %v1691 = vadd.f32 %v1651, %v1690
      %v1692 = vpop.f32.mrb[0].mxu0
      %v1693 = vpop.f32.mrb[0].mxu0
      %v1694 = vpop.f32.mrb[0].mxu0
      %1695 = vdwg.mxu0
      %1696 = vmatprep.subr.bf16.mxu0 0
      %1697 = vmatpush1.bf16.msra.mxu0 %v1089
      %1698 = vmatprep.subr.bf16.mxu0 0
      %1699 = vmatpush1.bf16.msra.mxu0 %v1090
      %1700 = vmatprep.subr.bf16.mxu0 0
      %1701 = vmatpush1.bf16.msra.mxu0 %v1091
      %1702 = vmatprep.subr.bf16.mxu0 0
      %1703 = vmatpush1.bf16.msra.mxu0 %v1092
      %1704 = vmatprep.subr.bf16.mxu0 0
      %1705 = vmatpush1.bf16.msra.mxu0 %v1093
      %1706 = vmatprep.subr.bf16.mxu0 0
      %1707 = vmatpush1.bf16.msra.mxu0 %v1094
      %1708 = vmatprep.subr.bf16.mxu0 0
      %1709 = vmatpush1.bf16.msra.mxu0 %v1095
      %1710 = vmatprep.subr.bf16.mxu0 0
      %1711 = vmatpush1.bf16.msra.mxu0 %v1096
      %1712 = vmatprep.subr.bf16.mxu0 0
      %1713 = vmatpush1.bf16.msra.mxu0 %v1097
      %1714 = vmatprep.subr.bf16.mxu0 0
      %1715 = vmatpush1.bf16.msra.mxu0 %v1098
      %1716 = vmatprep.subr.bf16.mxu0 0
      %1717 = vmatpush1.bf16.msra.mxu0 %v1099
      %1718 = vmatprep.subr.bf16.mxu0 0
      %1719 = vmatpush1.bf16.msra.mxu0 %v1100
      %1720 = vmatprep.subr.bf16.mxu0 0
      %1721 = vmatpush1.bf16.msra.mxu0 %v1101
      %1722 = vmatprep.subr.bf16.mxu0 0
      %1723 = vmatpush1.bf16.msra.mxu0 %v1102
      %1724 = vmatprep.subr.bf16.mxu0 0
      %1725 = vmatpush1.bf16.msra.mxu0 %v1103
      %1726 = vmatprep.subr.bf16.mxu0 0
      %1727 = vmatpush1.bf16.msra.mxu0 %v1104
      %1728 = vmatprep.mubr.bf16.mxu0 %v1555
      %1729 = vmatmul.mubr.bf16.gmra.mrb[0].mxu0 %v1554
      %v1730 = vpop.f32.mrb[0].mxu0
      %v1731 = vadd.f32 %v1691, %v1730
      %v1732 = vpop.f32.mrb[0].mxu0
      %v1733 = vpop.f32.mrb[0].mxu0
      %v1734 = vpop.f32.mrb[0].mxu0
      %1735 = vdwg.mxu0
      %1736 = vmatprep.subr.bf16.mxu0 0
      %1737 = vmatpush1.bf16.msra.mxu0 %v1105
      %1738 = vmatprep.subr.bf16.mxu0 0
      %1739 = vmatpush1.bf16.msra.mxu0 %v1106
      %1740 = vmatprep.subr.bf16.mxu0 0
      %1741 = vmatpush1.bf16.msra.mxu0 %v1107
      %1742 = vmatprep.subr.bf16.mxu0 0
      %1743 = vmatpush1.bf16.msra.mxu0 %v1108
      %1744 = vmatprep.subr.bf16.mxu0 0
      %1745 = vmatpush1.bf16.msra.mxu0 %v1109
      %1746 = vmatprep.subr.bf16.mxu0 0
      %1747 = vmatpush1.bf16.msra.mxu0 %v1110
      %1748 = vmatprep.subr.bf16.mxu0 0
      %1749 = vmatpush1.bf16.msra.mxu0 %v1111
      %1750 = vmatprep.subr.bf16.mxu0 0
      %1751 = vmatpush1.bf16.msra.mxu0 %v1112
      %1752 = vmatprep.subr.bf16.mxu0 0
      %1753 = vmatpush1.bf16.msra.mxu0 %v1113
      %1754 = vmatprep.subr.bf16.mxu0 0
      %1755 = vmatpush1.bf16.msra.mxu0 %v1114
      %1756 = vmatprep.subr.bf16.mxu0 0
      %1757 = vmatpush1.bf16.msra.mxu0 %v1115
      %1758 = vmatprep.subr.bf16.mxu0 0
      %1759 = vmatpush1.bf16.msra.mxu0 %v1116
      %1760 = vmatprep.subr.bf16.mxu0 0
      %1761 = vmatpush1.bf16.msra.mxu0 %v1117
      %1762 = vmatprep.subr.bf16.mxu0 0
      %1763 = vmatpush1.bf16.msra.mxu0 %v1118
      %1764 = vmatprep.subr.bf16.mxu0 0
      %1765 = vmatpush1.bf16.msra.mxu0 %v1119
      %1766 = vmatprep.subr.bf16.mxu0 0
      %1767 = vmatpush1.bf16.msra.mxu0 %v1120
      %1768 = vmatprep.mubr.bf16.mxu0 %v1557
      %1769 = vmatmul.mubr.bf16.gmra.mrb[0].mxu0 %v1556
      %v1770 = vpop.f32.mrb[0].mxu0
      %v1771 = vadd.f32 %v1731, %v1770
      %v1772 = vpop.f32.mrb[0].mxu0
      %v1773 = vpop.f32.mrb[0].mxu0
      %v1774 = vpop.f32.mrb[0].mxu0
      %1775 = vdwg.mxu0
      %1776 = vmatprep.subr.bf16.mxu0 0
      %1777 = vmatpush1.bf16.msra.mxu0 %v1121
      %1778 = vmatprep.subr.bf16.mxu0 0
      %1779 = vmatpush1.bf16.msra.mxu0 %v1122
      %1780 = vmatprep.subr.bf16.mxu0 0
      %1781 = vmatpush1.bf16.msra.mxu0 %v1123
      %1782 = vmatprep.subr.bf16.mxu0 0
      %1783 = vmatpush1.bf16.msra.mxu0 %v1124
      %1784 = vmatprep.subr.bf16.mxu0 0
      %1785 = vmatpush1.bf16.msra.mxu0 %v1125
      %1786 = vmatprep.subr.bf16.mxu0 0
      %1787 = vmatpush1.bf16.msra.mxu0 %v1126
      %1788 = vmatprep.subr.bf16.mxu0 0
      %1789 = vmatpush1.bf16.msra.mxu0 %v1127
      %1790 = vmatprep.subr.bf16.mxu0 0
      %1791 = vmatpush1.bf16.msra.mxu0 %v1128
      %1792 = vmatprep.subr.bf16.mxu0 0
      %1793 = vmatpush1.bf16.msra.mxu0 %v1129
      %1794 = vmatprep.subr.bf16.mxu0 0
      %1795 = vmatpush1.bf16.msra.mxu0 %v1130
      %1796 = vmatprep.subr.bf16.mxu0 0
      %1797 = vmatpush1.bf16.msra.mxu0 %v1131
      %1798 = vmatprep.subr.bf16.mxu0 0
      %1799 = vmatpush1.bf16.msra.mxu0 %v1132
      %1800 = vmatprep.subr.bf16.mxu0 0
      %1801 = vmatpush1.bf16.msra.mxu0 %v1133
      %1802 = vmatprep.subr.bf16.mxu0 0
      %1803 = vmatpush1.bf16.msra.mxu0 %v1134
      %1804 = vmatprep.subr.bf16.mxu0 0
      %1805 = vmatpush1.bf16.msra.mxu0 %v1135
      %1806 = vmatprep.subr.bf16.mxu0 0
      %1807 = vmatpush1.bf16.msra.mxu0 %v1136
      %1808 = vmatprep.mubr.bf16.mxu0 %v1559
      %1809 = vmatmul.mubr.bf16.gmra.mrb[0].mxu0 %v1558
      %v1810 = vpop.f32.mrb[0].mxu0
      %v1811 = vadd.f32 %v1771, %v1810
      %v1812 = vpop.f32.mrb[0].mxu0
      %v1813 = vpop.f32.mrb[0].mxu0
      %v1814 = vpop.f32.mrb[0].mxu0
      %1815 = vdwg.mxu0
      %1816 = vmatprep.subr.bf16.mxu0 0
      %1817 = vmatpush1.bf16.msra.mxu0 %v1137
      %1818 = vmatprep.subr.bf16.mxu0 0
      %1819 = vmatpush1.bf16.msra.mxu0 %v1138
      %1820 = vmatprep.subr.bf16.mxu0 0
      %1821 = vmatpush1.bf16.msra.mxu0 0
      %1822 = vmatprep.subr.bf16.mxu0 0
      %1823 = vmatpush1.bf16.msra.mxu0 0
      %1824 = vmatprep.subr.bf16.mxu0 0
      %1825 = vmatpush1.bf16.msra.mxu0 0
      %1826 = vmatprep.subr.bf16.mxu0 0
      %1827 = vmatpush1.bf16.msra.mxu0 0
      %1828 = vmatprep.subr.bf16.mxu0 0
      %1829 = vmatpush1.bf16.msra.mxu0 0
      %1830 = vmatprep.subr.bf16.mxu0 0
      %1831 = vmatpush1.bf16.msra.mxu0 0
      %1832 = vmatprep.subr.bf16.mxu0 0
      %1833 = vmatpush1.bf16.msra.mxu0 0
      %1834 = vmatprep.subr.bf16.mxu0 0
      %1835 = vmatpush1.bf16.msra.mxu0 0
      %1836 = vmatprep.subr.bf16.mxu0 0
      %1837 = vmatpush1.bf16.msra.mxu0 0
      %1838 = vmatprep.subr.bf16.mxu0 0
      %1839 = vmatpush1.bf16.msra.mxu0 0
      %1840 = vmatprep.subr.bf16.mxu0 0
      %1841 = vmatpush1.bf16.msra.mxu0 0
      %1842 = vmatprep.subr.bf16.mxu0 0
      %1843 = vmatpush1.bf16.msra.mxu0 0
      %1844 = vmatprep.subr.bf16.mxu0 0
      %1845 = vmatpush1.bf16.msra.mxu0 0
      %1846 = vmatprep.subr.bf16.mxu0 0
      %1847 = vmatpush1.bf16.msra.mxu0 0
      %1848 = vmatprep.mubr.bf16.mxu0 0
      %1849 = vmatmul.mubr.bf16.gmra.mrb[0].mxu0 %v1574
      %v1850 = vpop.f32.mrb[0].mxu0
      %v1851 = vadd.f32 %v1811, %v1850
      %v1852 = vpop.f32.mrb[0].mxu0
      %v1853 = vpop.f32.mrb[0].mxu0
      %v1854 = vpop.f32.mrb[0].mxu0
      %1855 = vdwg.mxu0
      %v1856 = vld [vmem:[%s394] sm:$0xff]
      %v1857 = vld [vmem:[%s394 + $0x8] sm:$0xff]
      %v1858 = vld [vmem:[%s394 + $0x10] sm:$0xff]
      %v1859 = vld [vmem:[%s394 + $0x18] sm:$0xff]
      %v1860 = vld [vmem:[%s394 + $0x20] sm:$0xff]
      %v1861 = vld [vmem:[%s394 + $0x28] sm:$0xff]
      %v1862 = vld [vmem:[%s394 + $0x30] sm:$0xf]
      %v1870 = vunpack.c.l.b16 %v1856
      %v1871 = vunpack.c.h.b16 %v1856
      %v1872 = vunpack.c.l.b16 %v1857
      %v1873 = vunpack.c.h.b16 %v1857
      %v1874 = vunpack.c.l.b16 %v1858
      %v1875 = vunpack.c.h.b16 %v1858
      %v1876 = vunpack.c.l.b16 %v1859
      %v1877 = vunpack.c.h.b16 %v1859
      %v1878 = vunpack.c.l.b16 %v1860
      %v1879 = vunpack.c.h.b16 %v1860
      %v1880 = vunpack.c.l.b16 %v1861
      %v1881 = vunpack.c.h.b16 %v1861
      %v1882 = vunpack.c.l.b16 %v1862
      %v1883 = vpack.c.b16 %v1870, %v1870
      %v1884 = vpack.c.b16 %v1871, %v1871
      %v1885 = vpack.c.b16 %v1872, %v1872
      %v1886 = vpack.c.b16 %v1873, %v1873
      %v1887 = vpack.c.b16 %v1874, %v1874
      %v1888 = vpack.c.b16 %v1875, %v1875
      %v1889 = vpack.c.b16 %v1876, %v1876
      %v1890 = vpack.c.b16 %v1877, %v1877
      %v1891 = vpack.c.b16 %v1878, %v1878
      %v1892 = vpack.c.b16 %v1879, %v1879
      %v1893 = vpack.c.b16 %v1880, %v1880
      %v1894 = vpack.c.b16 %v1881, %v1881
      %v1895 = vpack.c.b16 %v1882, %v1882
      %v1909 = vsel %vm1237, %v1895, 0
      %1911 = vmatprep.subr.bf16.mxu0 0
      %1912 = vmatpush1.bf16.msra.mxu0 %v1041
      %1913 = vmatprep.subr.bf16.mxu0 0
      %1914 = vmatpush1.bf16.msra.mxu0 %v1042
      %1915 = vmatprep.subr.bf16.mxu0 0
      %1916 = vmatpush1.bf16.msra.mxu0 %v1043
      %1917 = vmatprep.subr.bf16.mxu0 0
      %1918 = vmatpush1.bf16.msra.mxu0 %v1044
      %1919 = vmatprep.subr.bf16.mxu0 0
      %1920 = vmatpush1.bf16.msra.mxu0 %v1045
      %1921 = vmatprep.subr.bf16.mxu0 0
      %1922 = vmatpush1.bf16.msra.mxu0 %v1046
      %1923 = vmatprep.subr.bf16.mxu0 0
      %1924 = vmatpush1.bf16.msra.mxu0 %v1047
      %1925 = vmatprep.subr.bf16.mxu0 0
      %1926 = vmatpush1.bf16.msra.mxu0 %v1048
      %1927 = vmatprep.subr.bf16.mxu0 0
      %1928 = vmatpush1.bf16.msra.mxu0 %v1049
      %1929 = vmatprep.subr.bf16.mxu0 0
      %1930 = vmatpush1.bf16.msra.mxu0 %v1050
      %1931 = vmatprep.subr.bf16.mxu0 0
      %1932 = vmatpush1.bf16.msra.mxu0 %v1051
      %1933 = vmatprep.subr.bf16.mxu0 0
      %1934 = vmatpush1.bf16.msra.mxu0 %v1052
      %1935 = vmatprep.subr.bf16.mxu0 0
      %1936 = vmatpush1.bf16.msra.mxu0 %v1053
      %1937 = vmatprep.subr.bf16.mxu0 0
      %1938 = vmatpush1.bf16.msra.mxu0 %v1054
      %1939 = vmatprep.subr.bf16.mxu0 0
      %1940 = vmatpush1.bf16.msra.mxu0 %v1055
      %1941 = vmatprep.subr.bf16.mxu0 0
      %1942 = vmatpush1.bf16.msra.mxu0 %v1056
      %1943 = vmatprep.mubr.bf16.mxu0 %v1884
      %1944 = vmatmul.mubr.bf16.gmra.mrb[0].mxu0 %v1883
      %v1945 = vpop.f32.mrb[0].mxu0
      %v1946 = vadd.f32 0.0, %v1945
      %v1947 = vpop.f32.mrb[0].mxu0
      %v1948 = vpop.f32.mrb[0].mxu0
      %v1949 = vpop.f32.mrb[0].mxu0
      %1950 = vdwg.mxu0
      %1951 = vmatprep.subr.bf16.mxu0 0
      %1952 = vmatpush1.bf16.msra.mxu0 %v1057
      %1953 = vmatprep.subr.bf16.mxu0 0
      %1954 = vmatpush1.bf16.msra.mxu0 %v1058
      %1955 = vmatprep.subr.bf16.mxu0 0
      %1956 = vmatpush1.bf16.msra.mxu0 %v1059
      %1957 = vmatprep.subr.bf16.mxu0 0
      %1958 = vmatpush1.bf16.msra.mxu0 %v1060
      %1959 = vmatprep.subr.bf16.mxu0 0
      %1960 = vmatpush1.bf16.msra.mxu0 %v1061
      %1961 = vmatprep.subr.bf16.mxu0 0
      %1962 = vmatpush1.bf16.msra.mxu0 %v1062
      %1963 = vmatprep.subr.bf16.mxu0 0
      %1964 = vmatpush1.bf16.msra.mxu0 %v1063
      %1965 = vmatprep.subr.bf16.mxu0 0
      %1966 = vmatpush1.bf16.msra.mxu0 %v1064
      %1967 = vmatprep.subr.bf16.mxu0 0
      %1968 = vmatpush1.bf16.msra.mxu0 %v1065
      %1969 = vmatprep.subr.bf16.mxu0 0
      %1970 = vmatpush1.bf16.msra.mxu0 %v1066
      %1971 = vmatprep.subr.bf16.mxu0 0
      %1972 = vmatpush1.bf16.msra.mxu0 %v1067
      %1973 = vmatprep.subr.bf16.mxu0 0
      %1974 = vmatpush1.bf16.msra.mxu0 %v1068
      %1975 = vmatprep.subr.bf16.mxu0 0
      %1976 = vmatpush1.bf16.msra.mxu0 %v1069
      %1977 = vmatprep.subr.bf16.mxu0 0
      %1978 = vmatpush1.bf16.msra.mxu0 %v1070
      %1979 = vmatprep.subr.bf16.mxu0 0
      %1980 = vmatpush1.bf16.msra.mxu0 %v1071
      %1981 = vmatprep.subr.bf16.mxu0 0
      %1982 = vmatpush1.bf16.msra.mxu0 %v1072
      %1983 = vmatprep.mubr.bf16.mxu0 %v1886
      %1984 = vmatmul.mubr.bf16.gmra.mrb[0].mxu0 %v1885
      %v1985 = vpop.f32.mrb[0].mxu0
      %v1986 = vadd.f32 %v1946, %v1985
      %v1987 = vpop.f32.mrb[0].mxu0
      %v1988 = vpop.f32.mrb[0].mxu0
      %v1989 = vpop.f32.mrb[0].mxu0
      %1990 = vdwg.mxu0
      %1991 = vmatprep.subr.bf16.mxu0 0
      %1992 = vmatpush1.bf16.msra.mxu0 %v1073
      %1993 = vmatprep.subr.bf16.mxu0 0
      %1994 = vmatpush1.bf16.msra.mxu0 %v1074
      %1995 = vmatprep.subr.bf16.mxu0 0
      %1996 = vmatpush1.bf16.msra.mxu0 %v1075
      %1997 = vmatprep.subr.bf16.mxu0 0
      %1998 = vmatpush1.bf16.msra.mxu0 %v1076
      %1999 = vmatprep.subr.bf16.mxu0 0
      %2000 = vmatpush1.bf16.msra.mxu0 %v1077
      %2001 = vmatprep.subr.bf16.mxu0 0
      %2002 = vmatpush1.bf16.msra.mxu0 %v1078
      %2003 = vmatprep.subr.bf16.mxu0 0
      %2004 = vmatpush1.bf16.msra.mxu0 %v1079
      %2005 = vmatprep.subr.bf16.mxu0 0
      %2006 = vmatpush1.bf16.msra.mxu0 %v1080
      %2007 = vmatprep.subr.bf16.mxu0 0
      %2008 = vmatpush1.bf16.msra.mxu0 %v1081
      %2009 = vmatprep.subr.bf16.mxu0 0
      %2010 = vmatpush1.bf16.msra.mxu0 %v1082
      %2011 = vmatprep.subr.bf16.mxu0 0
      %2012 = vmatpush1.bf16.msra.mxu0 %v1083
      %2013 = vmatprep.subr.bf16.mxu0 0
      %2014 = vmatpush1.bf16.msra.mxu0 %v1084
      %2015 = vmatprep.subr.bf16.mxu0 0
      %2016 = vmatpush1.bf16.msra.mxu0 %v1085
      %2017 = vmatprep.subr.bf16.mxu0 0
      %2018 = vmatpush1.bf16.msra.mxu0 %v1086
      %2019 = vmatprep.subr.bf16.mxu0 0
      %2020 = vmatpush1.bf16.msra.mxu0 %v1087
      %2021 = vmatprep.subr.bf16.mxu0 0
      %2022 = vmatpush1.bf16.msra.mxu0 %v1088
      %2023 = vmatprep.mubr.bf16.mxu0 %v1888
      %2024 = vmatmul.mubr.bf16.gmra.mrb[0].mxu0 %v1887
      %v2025 = vpop.f32.mrb[0].mxu0
      %v2026 = vadd.f32 %v1986, %v2025
      %v2027 = vpop.f32.mrb[0].mxu0
      %v2028 = vpop.f32.mrb[0].mxu0
      %v2029 = vpop.f32.mrb[0].mxu0
      %2030 = vdwg.mxu0
      %2031 = vmatprep.subr.bf16.mxu0 0
      %2032 = vmatpush1.bf16.msra.mxu0 %v1089
      %2033 = vmatprep.subr.bf16.mxu0 0
      %2034 = vmatpush1.bf16.msra.mxu0 %v1090
      %2035 = vmatprep.subr.bf16.mxu0 0
      %2036 = vmatpush1.bf16.msra.mxu0 %v1091
      %2037 = vmatprep.subr.bf16.mxu0 0
      %2038 = vmatpush1.bf16.msra.mxu0 %v1092
      %2039 = vmatprep.subr.bf16.mxu0 0
      %2040 = vmatpush1.bf16.msra.mxu0 %v1093
      %2041 = vmatprep.subr.bf16.mxu0 0
      %2042 = vmatpush1.bf16.msra.mxu0 %v1094
      %2043 = vmatprep.subr.bf16.mxu0 0
      %2044 = vmatpush1.bf16.msra.mxu0 %v1095
      %2045 = vmatprep.subr.bf16.mxu0 0
      %2046 = vmatpush1.bf16.msra.mxu0 %v1096
      %2047 = vmatprep.subr.bf16.mxu0 0
      %2048 = vmatpush1.bf16.msra.mxu0 %v1097
      %2049 = vmatprep.subr.bf16.mxu0 0
      %2050 = vmatpush1.bf16.msra.mxu0 %v1098
      %2051 = vmatprep.subr.bf16.mxu0 0
      %2052 = vmatpush1.bf16.msra.mxu0 %v1099
      %2053 = vmatprep.subr.bf16.mxu0 0
      %2054 = vmatpush1.bf16.msra.mxu0 %v1100
      %2055 = vmatprep.subr.bf16.mxu0 0
      %2056 = vmatpush1.bf16.msra.mxu0 %v1101
      %2057 = vmatprep.subr.bf16.mxu0 0
      %2058 = vmatpush1.bf16.msra.mxu0 %v1102
      %2059 = vmatprep.subr.bf16.mxu0 0
      %2060 = vmatpush1.bf16.msra.mxu0 %v1103
      %2061 = vmatprep.subr.bf16.mxu0 0
      %2062 = vmatpush1.bf16.msra.mxu0 %v1104
      %2063 = vmatprep.mubr.bf16.mxu0 %v1890
      %2064 = vmatmul.mubr.bf16.gmra.mrb[0].mxu0 %v1889
      %v2065 = vpop.f32.mrb[0].mxu0
      %v2066 = vadd.f32 %v2026, %v2065
      %v2067 = vpop.f32.mrb[0].mxu0
      %v2068 = vpop.f32.mrb[0].mxu0
      %v2069 = vpop.f32.mrb[0].mxu0
      %2070 = vdwg.mxu0
      %2071 = vmatprep.subr.bf16.mxu0 0
      %2072 = vmatpush1.bf16.msra.mxu0 %v1105
      %2073 = vmatprep.subr.bf16.mxu0 0
      %2074 = vmatpush1.bf16.msra.mxu0 %v1106
      %2075 = vmatprep.subr.bf16.mxu0 0
      %2076 = vmatpush1.bf16.msra.mxu0 %v1107
      %2077 = vmatprep.subr.bf16.mxu0 0
      %2078 = vmatpush1.bf16.msra.mxu0 %v1108
      %2079 = vmatprep.subr.bf16.mxu0 0
      %2080 = vmatpush1.bf16.msra.mxu0 %v1109
      %2081 = vmatprep.subr.bf16.mxu0 0
      %2082 = vmatpush1.bf16.msra.mxu0 %v1110
      %2083 = vmatprep.subr.bf16.mxu0 0
      %2084 = vmatpush1.bf16.msra.mxu0 %v1111
      %2085 = vmatprep.subr.bf16.mxu0 0
      %2086 = vmatpush1.bf16.msra.mxu0 %v1112
      %2087 = vmatprep.subr.bf16.mxu0 0
      %2088 = vmatpush1.bf16.msra.mxu0 %v1113
      %2089 = vmatprep.subr.bf16.mxu0 0
      %2090 = vmatpush1.bf16.msra.mxu0 %v1114
      %2091 = vmatprep.subr.bf16.mxu0 0
      %2092 = vmatpush1.bf16.msra.mxu0 %v1115
      %2093 = vmatprep.subr.bf16.mxu0 0
      %2094 = vmatpush1.bf16.msra.mxu0 %v1116
      %2095 = vmatprep.subr.bf16.mxu0 0
      %2096 = vmatpush1.bf16.msra.mxu0 %v1117
      %2097 = vmatprep.subr.bf16.mxu0 0
      %2098 = vmatpush1.bf16.msra.mxu0 %v1118
      %2099 = vmatprep.subr.bf16.mxu0 0
      %2100 = vmatpush1.bf16.msra.mxu0 %v1119
      %2101 = vmatprep.subr.bf16.mxu0 0
      %2102 = vmatpush1.bf16.msra.mxu0 %v1120
      %2103 = vmatprep.mubr.bf16.mxu0 %v1892
      %2104 = vmatmul.mubr.bf16.gmra.mrb[0].mxu0 %v1891
      %v2105 = vpop.f32.mrb[0].mxu0
      %v2106 = vadd.f32 %v2066, %v2105
      %v2107 = vpop.f32.mrb[0].mxu0
      %v2108 = vpop.f32.mrb[0].mxu0
      %v2109 = vpop.f32.mrb[0].mxu0
      %2110 = vdwg.mxu0
      %2111 = vmatprep.subr.bf16.mxu0 0
      %2112 = vmatpush1.bf16.msra.mxu0 %v1121
      %2113 = vmatprep.subr.bf16.mxu0 0
      %2114 = vmatpush1.bf16.msra.mxu0 %v1122
      %2115 = vmatprep.subr.bf16.mxu0 0
      %2116 = vmatpush1.bf16.msra.mxu0 %v1123
      %2117 = vmatprep.subr.bf16.mxu0 0
      %2118 = vmatpush1.bf16.msra.mxu0 %v1124
      %2119 = vmatprep.subr.bf16.mxu0 0
      %2120 = vmatpush1.bf16.msra.mxu0 %v1125
      %2121 = vmatprep.subr.bf16.mxu0 0
      %2122 = vmatpush1.bf16.msra.mxu0 %v1126
      %2123 = vmatprep.subr.bf16.mxu0 0
      %2124 = vmatpush1.bf16.msra.mxu0 %v1127
      %2125 = vmatprep.subr.bf16.mxu0 0
      %2126 = vmatpush1.bf16.msra.mxu0 %v1128
      %2127 = vmatprep.subr.bf16.mxu0 0
      %2128 = vmatpush1.bf16.msra.mxu0 %v1129
      %2129 = vmatprep.subr.bf16.mxu0 0
      %2130 = vmatpush1.bf16.msra.mxu0 %v1130
      %2131 = vmatprep.subr.bf16.mxu0 0
      %2132 = vmatpush1.bf16.msra.mxu0 %v1131
      %2133 = vmatprep.subr.bf16.mxu0 0
      %2134 = vmatpush1.bf16.msra.mxu0 %v1132
      %2135 = vmatprep.subr.bf16.mxu0 0
      %2136 = vmatpush1.bf16.msra.mxu0 %v1133
      %2137 = vmatprep.subr.bf16.mxu0 0
      %2138 = vmatpush1.bf16.msra.mxu0 %v1134
      %2139 = vmatprep.subr.bf16.mxu0 0
      %2140 = vmatpush1.bf16.msra.mxu0 %v1135
      %2141 = vmatprep.subr.bf16.mxu0 0
      %2142 = vmatpush1.bf16.msra.mxu0 %v1136
      %2143 = vmatprep.mubr.bf16.mxu0 %v1894
      %2144 = vmatmul.mubr.bf16.gmra.mrb[0].mxu0 %v1893
      %v2145 = vpop.f32.mrb[0].mxu0
      %v2146 = vadd.f32 %v2106, %v2145
      %v2147 = vpop.f32.mrb[0].mxu0
      %v2148 = vpop.f32.mrb[0].mxu0
      %v2149 = vpop.f32.mrb[0].mxu0
      %2150 = vdwg.mxu0
      %2151 = vmatprep.subr.bf16.mxu0 0
      %2152 = vmatpush1.bf16.msra.mxu0 %v1137
      %2153 = vmatprep.subr.bf16.mxu0 0
      %2154 = vmatpush1.bf16.msra.mxu0 %v1138
      %2155 = vmatprep.subr.bf16.mxu0 0
      %2156 = vmatpush1.bf16.msra.mxu0 0
      %2157 = vmatprep.subr.bf16.mxu0 0
      %2158 = vmatpush1.bf16.msra.mxu0 0
      %2159 = vmatprep.subr.bf16.mxu0 0
      %2160 = vmatpush1.bf16.msra.mxu0 0
      %2161 = vmatprep.subr.bf16.mxu0 0
      %2162 = vmatpush1.bf16.msra.mxu0 0
      %2163 = vmatprep.subr.bf16.mxu0 0
      %2164 = vmatpush1.bf16.msra.mxu0 0
      %2165 = vmatprep.subr.bf16.mxu0 0
      %2166 = vmatpush1.bf16.msra.mxu0 0
      %2167 = vmatprep.subr.bf16.mxu0 0
      %2168 = vmatpush1.bf16.msra.mxu0 0
      %2169 = vmatprep.subr.bf16.mxu0 0
      %2170 = vmatpush1.bf16.msra.mxu0 0
      %2171 = vmatprep.subr.bf16.mxu0 0
      %2172 = vmatpush1.bf16.msra.mxu0 0
      %2173 = vmatprep.subr.bf16.mxu0 0
      %2174 = vmatpush1.bf16.msra.mxu0 0
      %2175 = vmatprep.subr.bf16.mxu0 0
      %2176 = vmatpush1.bf16.msra.mxu0 0
      %2177 = vmatprep.subr.bf16.mxu0 0
      %2178 = vmatpush1.bf16.msra.mxu0 0
      %2179 = vmatprep.subr.bf16.mxu0 0
      %2180 = vmatpush1.bf16.msra.mxu0 0
      %2181 = vmatprep.subr.bf16.mxu0 0
      %2182 = vmatpush1.bf16.msra.mxu0 0
      %2183 = vmatprep.mubr.bf16.mxu0 0
      %2184 = vmatmul.mubr.bf16.gmra.mrb[0].mxu0 %v1909
      %v2185 = vpop.f32.mrb[0].mxu0
      %v2186 = vadd.f32 %v2146, %v2185
      %v2187 = vpop.f32.mrb[0].mxu0
      %v2188 = vpop.f32.mrb[0].mxu0
      %v2189 = vpop.f32.mrb[0].mxu0
      %2190 = vdwg.mxu0
      %v2191 = vld [vmem:[%s4] sm:$0xff]
      %v2192 = vld [vmem:[%s5] sm:$0xff]
      %v2193 = vld [vmem:[%s6] sm:$0xff]
      %v2194 = vld [vmem:[%s6 + $0x8] sm:$0xff]
      %v2195 = vld [vmem:[%s6 + $0x10] sm:$0xff]
      %v2196 = vld [vmem:[%s6 + $0x18] sm:$0xff]
      %v2197 = vld [vmem:[%s6 + $0x20] sm:$0xff]
      %v2198 = vld [vmem:[%s6 + $0x28] sm:$0xff]
      %v2199 = vld [vmem:[%s6 + $0x30] sm:$0xff]
      %v2200 = vld [vmem:[%s6 + $0x38] sm:$0xff]
      %v2201 = vld [vmem:[%s6 + $0x40] sm:$0xff]
      %v2202 = vld [vmem:[%s6 + $0x48] sm:$0xff]
      %v2203 = vld [vmem:[%s6 + $0x50] sm:$0xff]
      %v2204 = vld [vmem:[%s6 + $0x58] sm:$0xff]
      %v2205 = vld [vmem:[%s6 + $0x60] sm:$0xff]
      %v2206 = vld [vmem:[%s6 + $0x68] sm:$0xff]
      %v2207 = vld [vmem:[%s6 + $0x70] sm:$0xff]
      %v2208 = vld [vmem:[%s6 + $0x78] sm:$0xff]
      %v2209 = vld [vmem:[%s7] sm:$0x1]
      %s2211 = vtos %v2191
      %v2212 = vstv %s2211
      %v2214 = vmul.f32 %v1516, %v2212
      %2215 = vrot.lane.b32.xlu0 %v2191, 127
      %v2216 = vpop.permute.xlu0 %2215
      %s2217 = vtos %v2216
      %v2218 = vstv %s2217
      %v2220 = vmul.f32 %v1851, %v2218
      %v2221 = vadd.f32 %v2214, %v2220
      %2222 = vrot.lane.b32.xlu0 %v2191, 126
      %v2223 = vpop.permute.xlu0 %2222
      %s2224 = vtos %v2223
      %v2225 = vstv %s2224
      %v2227 = vmul.f32 %v2186, %v2225
      %v2228 = vadd.f32 %v2221, %v2227
      %v2229 = vlaneseq
      %v2230 = vshrl.u32 %v2229, 7
      %v2231 = vsub.s32 0, %v2230
      %v2232 = vrot.slane %v2192, %v2231
      %v2233 = vadd.f32 %v2228, %v2232
      %v2234 = vmax.f32 %v2233, 0.0
      %v2236 = vlaneseq
      %v2237 = vshrl.u32 %v2236, 7
      %v2238 = vsub.s32 0, %v2237
      %v2239 = vrot.slane %v2209, %v2238
      %2241 = vmatprep.subr.mxu0 0.0
      %2242 = vmatpush1.msra.mxu0 %v2193
      %2243 = vmatprep.subr.mxu0 0.0
      %2244 = vmatpush1.msra.mxu0 %v2194
      %2245 = vmatprep.subr.mxu0 0.0
      %2246 = vmatpush1.msra.mxu0 %v2195
      %2247 = vmatprep.subr.mxu0 0.0
      %2248 = vmatpush1.msra.mxu0 %v2196
      %2249 = vmatprep.subr.mxu0 0.0
      %2250 = vmatpush1.msra.mxu0 %v2197
      %2251 = vmatprep.subr.mxu0 0.0
      %2252 = vmatpush1.msra.mxu0 %v2198
      %2253 = vmatprep.subr.mxu0 0.0
      %2254 = vmatpush1.msra.mxu0 %v2199
      %2255 = vmatprep.subr.mxu0 0.0
      %2256 = vmatpush1.msra.mxu0 %v2200
      %2257 = vmatprep.subr.mxu0 0.0
      %2258 = vmatpush1.msra.mxu0 %v2201
      %2259 = vmatprep.subr.mxu0 0.0
      %2260 = vmatpush1.msra.mxu0 %v2202
      %2261 = vmatprep.subr.mxu0 0.0
      %2262 = vmatpush1.msra.mxu0 %v2203
      %2263 = vmatprep.subr.mxu0 0.0
      %2264 = vmatpush1.msra.mxu0 %v2204
      %2265 = vmatprep.subr.mxu0 0.0
      %2266 = vmatpush1.msra.mxu0 %v2205
      %2267 = vmatprep.subr.mxu0 0.0
      %2268 = vmatpush1.msra.mxu0 %v2206
      %2269 = vmatprep.subr.mxu0 0.0
      %2270 = vmatpush1.msra.mxu0 %v2207
      %2271 = vmatprep.subr.mxu0 0.0
      %2272 = vmatpush1.msra.mxu0 %v2208
      %2273 = vmatprep.subr.mxu0 0.0
      %2274 = vmatpush1.msra.mxu0 0.0
      %2275 = vmatprep.subr.mxu0 0.0
      %2276 = vmatpush1.msra.mxu0 0.0
      %2277 = vmatprep.subr.mxu0 0.0
      %2278 = vmatpush1.msra.mxu0 0.0
      %2279 = vmatprep.subr.mxu0 0.0
      %2280 = vmatpush1.msra.mxu0 0.0
      %2281 = vmatprep.subr.mxu0 0.0
      %2282 = vmatpush1.msra.mxu0 0.0
      %2283 = vmatprep.subr.mxu0 0.0
      %2284 = vmatpush1.msra.mxu0 0.0
      %2285 = vmatprep.subr.mxu0 0.0
      %2286 = vmatpush1.msra.mxu0 0.0
      %2287 = vmatprep.subr.mxu0 0.0
      %2288 = vmatpush1.msra.mxu0 0.0
      %2289 = vmatprep.subr.mxu0 0.0
      %2290 = vmatpush1.msra.mxu0 0.0
      %2291 = vmatprep.subr.mxu0 0.0
      %2292 = vmatpush1.msra.mxu0 0.0
      %2293 = vmatprep.subr.mxu0 0.0
      %2294 = vmatpush1.msra.mxu0 0.0
      %2295 = vmatprep.subr.mxu0 0.0
      %2296 = vmatpush1.msra.mxu0 0.0
      %2297 = vmatprep.subr.mxu0 0.0
      %2298 = vmatpush1.msra.mxu0 0.0
      %2299 = vmatprep.subr.mxu0 0.0
      %2300 = vmatpush1.msra.mxu0 0.0
      %2301 = vmatprep.subr.mxu0 0.0
      %2302 = vmatpush1.msra.mxu0 0.0
      %2303 = vmatprep.subr.mxu0 0.0
      %2304 = vmatpush1.msra.mxu0 0.0
      %2305 = vmatprep.mubr.f32.mxu0 0.0
      %2306 = vmatmul.mubr.f32.gmra.mrb[0].mxu0 %v2234
      %v2307 = vpop.f32.mrb[0].mxu0
      %v2308 = vadd.f32 %v2239, %v2307
      %v2309 = vpop.f32.mrb[0].mxu0
      %2310 = vdwg.mxu0
      %v2311 = vmax.f32 %v2308, 0.0
      %v2312 = vld [vmem:[%s8] sm:$0xff]
      %v2313 = vld [vmem:[%s8 + $0x8] sm:$0xff]
      %v2314 = vld [vmem:[%s8 + $0x10] sm:$0xff]
      %v2315 = vld [vmem:[%s8 + $0x18] sm:$0xff]
      %v2316 = vld [vmem:[%s8 + $0x20] sm:$0xff]
      %v2317 = vld [vmem:[%s8 + $0x28] sm:$0xff]
      %v2318 = vld [vmem:[%s8 + $0x30] sm:$0xff]
      %v2319 = vld [vmem:[%s8 + $0x38] sm:$0xff]
      %v2320 = vld [vmem:[%s8 + $0x40] sm:$0xff]
      %v2321 = vld [vmem:[%s8 + $0x48] sm:$0xff]
      %v2322 = vld [vmem:[%s8 + $0x50] sm:$0xff]
      %v2323 = vld [vmem:[%s8 + $0x58] sm:$0xff]
      %v2324 = vld [vmem:[%s8 + $0x60] sm:$0xff]
      %v2325 = vld [vmem:[%s8 + $0x68] sm:$0xff]
      %v2326 = vld [vmem:[%s8 + $0x70] sm:$0xff]
      %v2327 = vld [vmem:[%s8 + $0x78] sm:$0xff]
      %v2328 = vld [vmem:[%s8 + $0x80] sm:$0xff]
      %v2329 = vld [vmem:[%s8 + $0x88] sm:$0xff]
      %v2330 = vld [vmem:[%s8 + $0x90] sm:$0xff]
      %v2331 = vld [vmem:[%s8 + $0x98] sm:$0xff]
      %v2332 = vld [vmem:[%s8 + $0xa0] sm:$0xff]
      %v2333 = vld [vmem:[%s8 + $0xa8] sm:$0xff]
      %v2334 = vld [vmem:[%s8 + $0xb0] sm:$0xff]
      %v2335 = vld [vmem:[%s8 + $0xb8] sm:$0xff]
      %v2336 = vld [vmem:[%s8 + $0xc0] sm:$0xff]
      %v2337 = vld [vmem:[%s8 + $0xc8] sm:$0xff]
      %v2338 = vld [vmem:[%s8 + $0xd0] sm:$0xff]
      %v2339 = vld [vmem:[%s8 + $0xd8] sm:$0xff]
      %v2340 = vld [vmem:[%s8 + $0xe0] sm:$0xff]
      %v2341 = vld [vmem:[%s8 + $0xe8] sm:$0xff]
      %v2342 = vld [vmem:[%s8 + $0xf0] sm:$0xff]
      %v2343 = vld [vmem:[%s8 + $0xf8] sm:$0xff]
      %v2344 = vrot.slane %v2191, 1
      %s2345 = vtos %v2344
      %v2346 = vstv %s2345
      %v2348 = vmul.f32 %v1516, %v2346
      %2349 = vrot.lane.b32.xlu0 %v2344, 127
      %v2350 = vpop.permute.xlu0 %2349
      %s2351 = vtos %v2350
      %v2352 = vstv %s2351
      %v2354 = vmul.f32 %v1851, %v2352
      %v2355 = vadd.f32 %v2348, %v2354
      %2356 = vrot.lane.b32.xlu0 %v2344, 126
      %v2357 = vpop.permute.xlu0 %2356
      %s2358 = vtos %v2357
      %v2359 = vstv %s2358
      %v2361 = vmul.f32 %v2186, %v2359
      %v2362 = vadd.f32 %v2355, %v2361
      %v2363 = vlaneseq
      %v2364 = vshrl.u32 %v2363, 7
      %v2365 = vsub.s32 1, %v2364
      %v2366 = vrot.slane %v2192, %v2365
      %v2367 = vadd.f32 %v2362, %v2366
      %v2368 = vmax.f32 %v2367, 0.0
      %2369 = vmatprep.subr.mxu0 0.0
      %2370 = vmatpush1.msra.mxu0 %v2193
      %2371 = vmatprep.subr.mxu0 0.0
      %2372 = vmatpush1.msra.mxu0 %v2194
      %2373 = vmatprep.subr.mxu0 0.0
      %2374 = vmatpush1.msra.mxu0 %v2195
      %2375 = vmatprep.subr.mxu0 0.0
      %2376 = vmatpush1.msra.mxu0 %v2196
      %2377 = vmatprep.subr.mxu0 0.0
      %2378 = vmatpush1.msra.mxu0 %v2197
      %2379 = vmatprep.subr.mxu0 0.0
      %2380 = vmatpush1.msra.mxu0 %v2198
      %2381 = vmatprep.subr.mxu0 0.0
      %2382 = vmatpush1.msra.mxu0 %v2199
      %2383 = vmatprep.subr.mxu0 0.0
      %2384 = vmatpush1.msra.mxu0 %v2200
      %2385 = vmatprep.subr.mxu0 0.0
      %2386 = vmatpush1.msra.mxu0 %v2201
      %2387 = vmatprep.subr.mxu0 0.0
      %2388 = vmatpush1.msra.mxu0 %v2202
      %2389 = vmatprep.subr.mxu0 0.0
      %2390 = vmatpush1.msra.mxu0 %v2203
      %2391 = vmatprep.subr.mxu0 0.0
      %2392 = vmatpush1.msra.mxu0 %v2204
      %2393 = vmatprep.subr.mxu0 0.0
      %2394 = vmatpush1.msra.mxu0 %v2205
      %2395 = vmatprep.subr.mxu0 0.0
      %2396 = vmatpush1.msra.mxu0 %v2206
      %2397 = vmatprep.subr.mxu0 0.0
      %2398 = vmatpush1.msra.mxu0 %v2207
      %2399 = vmatprep.subr.mxu0 0.0
      %2400 = vmatpush1.msra.mxu0 %v2208
      %2401 = vmatprep.subr.mxu0 0.0
      %2402 = vmatpush1.msra.mxu0 0.0
      %2403 = vmatprep.subr.mxu0 0.0
      %2404 = vmatpush1.msra.mxu0 0.0
      %2405 = vmatprep.subr.mxu0 0.0
      %2406 = vmatpush1.msra.mxu0 0.0
      %2407 = vmatprep.subr.mxu0 0.0
      %2408 = vmatpush1.msra.mxu0 0.0
      %2409 = vmatprep.subr.mxu0 0.0
      %2410 = vmatpush1.msra.mxu0 0.0
      %2411 = vmatprep.subr.mxu0 0.0
      %2412 = vmatpush1.msra.mxu0 0.0
      %2413 = vmatprep.subr.mxu0 0.0
      %2414 = vmatpush1.msra.mxu0 0.0
      %2415 = vmatprep.subr.mxu0 0.0
      %2416 = vmatpush1.msra.mxu0 0.0
      %2417 = vmatprep.subr.mxu0 0.0
      %2418 = vmatpush1.msra.mxu0 0.0
      %2419 = vmatprep.subr.mxu0 0.0
      %2420 = vmatpush1.msra.mxu0 0.0
      %2421 = vmatprep.subr.mxu0 0.0
      %2422 = vmatpush1.msra.mxu0 0.0
      %2423 = vmatprep.subr.mxu0 0.0
      %2424 = vmatpush1.msra.mxu0 0.0
      %2425 = vmatprep.subr.mxu0 0.0
      %2426 = vmatpush1.msra.mxu0 0.0
      %2427 = vmatprep.subr.mxu0 0.0
      %2428 = vmatpush1.msra.mxu0 0.0
      %2429 = vmatprep.subr.mxu0 0.0
      %2430 = vmatpush1.msra.mxu0 0.0
      %2431 = vmatprep.subr.mxu0 0.0
      %2432 = vmatpush1.msra.mxu0 0.0
      %2433 = vmatprep.mubr.f32.mxu0 0.0
      %2434 = vmatmul.mubr.f32.gmra.mrb[0].mxu0 %v2368
      %v2435 = vpop.f32.mrb[0].mxu0
      %v2436 = vadd.f32 %v2239, %v2435
      %v2437 = vpop.f32.mrb[0].mxu0
      %2438 = vdwg.mxu0
      %v2439 = vmax.f32 %v2436, 0.0
      %v2440 = vld [vmem:[%s8 + $0x100] sm:$0xff]
      %v2441 = vld [vmem:[%s8 + $0x108] sm:$0xff]
      %v2442 = vld [vmem:[%s8 + $0x110] sm:$0xff]
      %v2443 = vld [vmem:[%s8 + $0x118] sm:$0xff]
      %v2444 = vld [vmem:[%s8 + $0x120] sm:$0xff]
      %v2445 = vld [vmem:[%s8 + $0x128] sm:$0xff]
      %v2446 = vld [vmem:[%s8 + $0x130] sm:$0xff]
      %v2447 = vld [vmem:[%s8 + $0x138] sm:$0xff]
      %v2448 = vld [vmem:[%s8 + $0x140] sm:$0xff]
      %v2449 = vld [vmem:[%s8 + $0x148] sm:$0xff]
      %v2450 = vld [vmem:[%s8 + $0x150] sm:$0xff]
      %v2451 = vld [vmem:[%s8 + $0x158] sm:$0xff]
      %v2452 = vld [vmem:[%s8 + $0x160] sm:$0xff]
      %v2453 = vld [vmem:[%s8 + $0x168] sm:$0xff]
      %v2454 = vld [vmem:[%s8 + $0x170] sm:$0xff]
      %v2455 = vld [vmem:[%s8 + $0x178] sm:$0xff]
      %v2456 = vld [vmem:[%s8 + $0x180] sm:$0xff]
      %v2457 = vld [vmem:[%s8 + $0x188] sm:$0xff]
      %v2458 = vld [vmem:[%s8 + $0x190] sm:$0xff]
      %v2459 = vld [vmem:[%s8 + $0x198] sm:$0xff]
      %v2460 = vld [vmem:[%s8 + $0x1a0] sm:$0xff]
      %v2461 = vld [vmem:[%s8 + $0x1a8] sm:$0xff]
      %v2462 = vld [vmem:[%s8 + $0x1b0] sm:$0xff]
      %v2463 = vld [vmem:[%s8 + $0x1b8] sm:$0xff]
      %v2464 = vld [vmem:[%s8 + $0x1c0] sm:$0xff]
      %v2465 = vld [vmem:[%s8 + $0x1c8] sm:$0xff]
      %v2466 = vld [vmem:[%s8 + $0x1d0] sm:$0xff]
      %v2467 = vld [vmem:[%s8 + $0x1d8] sm:$0xff]
      %v2468 = vld [vmem:[%s8 + $0x1e0] sm:$0xff]
      %v2469 = vld [vmem:[%s8 + $0x1e8] sm:$0xff]
      %v2470 = vld [vmem:[%s8 + $0x1f0] sm:$0xff]
      %v2471 = vld [vmem:[%s8 + $0x1f8] sm:$0xff]
      %v2473 = vsel %vm1237, %v2439, 0
      %2475 = vmatprep.subr.mxu0 %v2441
      %2476 = vmatpush1.msra.mxu0 %v2440
      %2477 = vmatprep.subr.mxu0 %v2449
      %2478 = vmatpush1.msra.mxu0 %v2448
      %2479 = vmatprep.subr.mxu0 %v2457
      %2480 = vmatpush1.msra.mxu0 %v2456
      %2481 = vmatprep.subr.mxu0 %v2465
      %2482 = vmatpush1.msra.mxu0 %v2464
      %2483 = vmatprep.subr.mxu0 0.0
      %2484 = vmatpush1.msra.mxu0 0.0
      %2485 = vmatprep.subr.mxu0 0.0
      %2486 = vmatpush1.msra.mxu0 0.0
      %2487 = vmatprep.subr.mxu0 0.0
      %2488 = vmatpush1.msra.mxu0 0.0
      %2489 = vmatprep.subr.mxu0 0.0
      %2490 = vmatpush1.msra.mxu0 0.0
      %2491 = vmatprep.subr.mxu0 0.0
      %2492 = vmatpush1.msra.mxu0 0.0
      %2493 = vmatprep.subr.mxu0 0.0
      %2494 = vmatpush1.msra.mxu0 0.0
      %2495 = vmatprep.subr.mxu0 0.0
      %2496 = vmatpush1.msra.mxu0 0.0
      %2497 = vmatprep.subr.mxu0 0.0
      %2498 = vmatpush1.msra.mxu0 0.0
      %2499 = vmatprep.subr.mxu0 0.0
      %2500 = vmatpush1.msra.mxu0 0.0
      %2501 = vmatprep.subr.mxu0 0.0
      %2502 = vmatpush1.msra.mxu0 0.0
      %2503 = vmatprep.subr.mxu0 0.0
      %2504 = vmatpush1.msra.mxu0 0.0
      %2505 = vmatprep.subr.mxu0 0.0
      %2506 = vmatpush1.msra.mxu0 0.0
      %2507 = vmatprep.subr.mxu0 0.0
      %2508 = vmatpush1.msra.mxu0 0.0
      %2509 = vmatprep.subr.mxu0 0.0
      %2510 = vmatpush1.msra.mxu0 0.0
      %2511 = vmatprep.subr.mxu0 0.0
      %2512 = vmatpush1.msra.mxu0 0.0
      %2513 = vmatprep.subr.mxu0 0.0
      %2514 = vmatpush1.msra.mxu0 0.0
      %2515 = vmatprep.subr.mxu0 0.0
      %2516 = vmatpush1.msra.mxu0 0.0
      %2517 = vmatprep.subr.mxu0 0.0
      %2518 = vmatpush1.msra.mxu0 0.0
      %2519 = vmatprep.subr.mxu0 0.0
      %2520 = vmatpush1.msra.mxu0 0.0
      %2521 = vmatprep.subr.mxu0 0.0
      %2522 = vmatpush1.msra.mxu0 0.0
      %2523 = vmatprep.subr.mxu0 0.0
      %2524 = vmatpush1.msra.mxu0 0.0
      %2525 = vmatprep.subr.mxu0 0.0
      %2526 = vmatpush1.msra.mxu0 0.0
      %2527 = vmatprep.subr.mxu0 0.0
      %2528 = vmatpush1.msra.mxu0 0.0
      %2529 = vmatprep.subr.mxu0 0.0
      %2530 = vmatpush1.msra.mxu0 0.0
      %2531 = vmatprep.subr.mxu0 0.0
      %2532 = vmatpush1.msra.mxu0 0.0
      %2533 = vmatprep.subr.mxu0 0.0
      %2534 = vmatpush1.msra.mxu0 0.0
      %2535 = vmatprep.subr.mxu0 0.0
      %2536 = vmatpush1.msra.mxu0 0.0
      %2537 = vmatprep.subr.mxu0 0.0
      %2538 = vmatpush1.msra.mxu0 0.0
      %2539 = vmatprep.mubr.f32.mxu0 0.0
      %2540 = vmatmul.mubr.f32.gmra.mrb[0].mxu0 %v2473
      %v2541 = vpop.f32.mrb[0].mxu0
      %v2542 = vadd.f32 0.0, %v2541
      %v2543 = vpop.f32.mrb[0].mxu0
      %v2544 = vadd.f32 0.0, %v2543
      %2545 = vdwg.mxu0
      %2546 = vmatprep.subr.mxu0 %v2443
      %2547 = vmatpush1.msra.mxu0 %v2442
      %2548 = vmatprep.subr.mxu0 %v2451
      %2549 = vmatpush1.msra.mxu0 %v2450
      %2550 = vmatprep.subr.mxu0 %v2459
      %2551 = vmatpush1.msra.mxu0 %v2458
      %2552 = vmatprep.subr.mxu0 %v2467
      %2553 = vmatpush1.msra.mxu0 %v2466
      %2554 = vmatprep.subr.mxu0 0.0
      %2555 = vmatpush1.msra.mxu0 0.0
      %2556 = vmatprep.subr.mxu0 0.0
      %2557 = vmatpush1.msra.mxu0 0.0
      %2558 = vmatprep.subr.mxu0 0.0
      %2559 = vmatpush1.msra.mxu0 0.0
      %2560 = vmatprep.subr.mxu0 0.0
      %2561 = vmatpush1.msra.mxu0 0.0
      %2562 = vmatprep.subr.mxu0 0.0
      %2563 = vmatpush1.msra.mxu0 0.0
      %2564 = vmatprep.subr.mxu0 0.0
      %2565 = vmatpush1.msra.mxu0 0.0
      %2566 = vmatprep.subr.mxu0 0.0
      %2567 = vmatpush1.msra.mxu0 0.0
      %2568 = vmatprep.subr.mxu0 0.0
      %2569 = vmatpush1.msra.mxu0 0.0
      %2570 = vmatprep.subr.mxu0 0.0
      %2571 = vmatpush1.msra.mxu0 0.0
      %2572 = vmatprep.subr.mxu0 0.0
      %2573 = vmatpush1.msra.mxu0 0.0
      %2574 = vmatprep.subr.mxu0 0.0
      %2575 = vmatpush1.msra.mxu0 0.0
      %2576 = vmatprep.subr.mxu0 0.0
      %2577 = vmatpush1.msra.mxu0 0.0
      %2578 = vmatprep.subr.mxu0 0.0
      %2579 = vmatpush1.msra.mxu0 0.0
      %2580 = vmatprep.subr.mxu0 0.0
      %2581 = vmatpush1.msra.mxu0 0.0
      %2582 = vmatprep.subr.mxu0 0.0
      %2583 = vmatpush1.msra.mxu0 0.0
      %2584 = vmatprep.subr.mxu0 0.0
      %2585 = vmatpush1.msra.mxu0 0.0
      %2586 = vmatprep.subr.mxu0 0.0
      %2587 = vmatpush1.msra.mxu0 0.0
      %2588 = vmatprep.subr.mxu0 0.0
      %2589 = vmatpush1.msra.mxu0 0.0
      %2590 = vmatprep.subr.mxu0 0.0
      %2591 = vmatpush1.msra.mxu0 0.0
      %2592 = vmatprep.subr.mxu0 0.0
      %2593 = vmatpush1.msra.mxu0 0.0
      %2594 = vmatprep.subr.mxu0 0.0
      %2595 = vmatpush1.msra.mxu0 0.0
      %2596 = vmatprep.subr.mxu0 0.0
      %2597 = vmatpush1.msra.mxu0 0.0
      %2598 = vmatprep.subr.mxu0 0.0
      %2599 = vmatpush1.msra.mxu0 0.0
      %2600 = vmatprep.subr.mxu0 0.0
      %2601 = vmatpush1.msra.mxu0 0.0
      %2602 = vmatprep.subr.mxu0 0.0
      %2603 = vmatpush1.msra.mxu0 0.0
      %2604 = vmatprep.subr.mxu0 0.0
      %2605 = vmatpush1.msra.mxu0 0.0
      %2606 = vmatprep.subr.mxu0 0.0
      %2607 = vmatpush1.msra.mxu0 0.0
      %2608 = vmatprep.subr.mxu0 0.0
      %2609 = vmatpush1.msra.mxu0 0.0
      %2610 = vmatprep.mubr.f32.mxu0 0.0
      %2611 = vmatmul.mubr.f32.gmra.mrb[0].mxu0 %v2473
      %v2612 = vpop.f32.mrb[0].mxu0
      %v2613 = vadd.f32 0.0, %v2612
      %v2614 = vpop.f32.mrb[0].mxu0
      %v2615 = vadd.f32 0.0, %v2614
      %2616 = vdwg.mxu0
      %2617 = vmatprep.subr.mxu0 %v2445
      %2618 = vmatpush1.msra.mxu0 %v2444
      %2619 = vmatprep.subr.mxu0 %v2453
      %2620 = vmatpush1.msra.mxu0 %v2452
      %2621 = vmatprep.subr.mxu0 %v2461
      %2622 = vmatpush1.msra.mxu0 %v2460
      %2623 = vmatprep.subr.mxu0 %v2469
      %2624 = vmatpush1.msra.mxu0 %v2468
      %2625 = vmatprep.subr.mxu0 0.0
      %2626 = vmatpush1.msra.mxu0 0.0
      %2627 = vmatprep.subr.mxu0 0.0
      %2628 = vmatpush1.msra.mxu0 0.0
      %2629 = vmatprep.subr.mxu0 0.0
      %2630 = vmatpush1.msra.mxu0 0.0
      %2631 = vmatprep.subr.mxu0 0.0
      %2632 = vmatpush1.msra.mxu0 0.0
      %2633 = vmatprep.subr.mxu0 0.0
      %2634 = vmatpush1.msra.mxu0 0.0
      %2635 = vmatprep.subr.mxu0 0.0
      %2636 = vmatpush1.msra.mxu0 0.0
      %2637 = vmatprep.subr.mxu0 0.0
      %2638 = vmatpush1.msra.mxu0 0.0
      %2639 = vmatprep.subr.mxu0 0.0
      %2640 = vmatpush1.msra.mxu0 0.0
      %2641 = vmatprep.subr.mxu0 0.0
      %2642 = vmatpush1.msra.mxu0 0.0
      %2643 = vmatprep.subr.mxu0 0.0
      %2644 = vmatpush1.msra.mxu0 0.0
      %2645 = vmatprep.subr.mxu0 0.0
      %2646 = vmatpush1.msra.mxu0 0.0
      %2647 = vmatprep.subr.mxu0 0.0
      %2648 = vmatpush1.msra.mxu0 0.0
      %2649 = vmatprep.subr.mxu0 0.0
      %2650 = vmatpush1.msra.mxu0 0.0
      %2651 = vmatprep.subr.mxu0 0.0
      %2652 = vmatpush1.msra.mxu0 0.0
      %2653 = vmatprep.subr.mxu0 0.0
      %2654 = vmatpush1.msra.mxu0 0.0
      %2655 = vmatprep.subr.mxu0 0.0
      %2656 = vmatpush1.msra.mxu0 0.0
      %2657 = vmatprep.subr.mxu0 0.0
      %2658 = vmatpush1.msra.mxu0 0.0
      %2659 = vmatprep.subr.mxu0 0.0
      %2660 = vmatpush1.msra.mxu0 0.0
      %2661 = vmatprep.subr.mxu0 0.0
      %2662 = vmatpush1.msra.mxu0 0.0
      %2663 = vmatprep.subr.mxu0 0.0
      %2664 = vmatpush1.msra.mxu0 0.0
      %2665 = vmatprep.subr.mxu0 0.0
      %2666 = vmatpush1.msra.mxu0 0.0
      %2667 = vmatprep.subr.mxu0 0.0
      %2668 = vmatpush1.msra.mxu0 0.0
      %2669 = vmatprep.subr.mxu0 0.0
      %2670 = vmatpush1.msra.mxu0 0.0
      %2671 = vmatprep.subr.mxu0 0.0
      %2672 = vmatpush1.msra.mxu0 0.0
      %2673 = vmatprep.subr.mxu0 0.0
      %2674 = vmatpush1.msra.mxu0 0.0
      %2675 = vmatprep.subr.mxu0 0.0
      %2676 = vmatpush1.msra.mxu0 0.0
      %2677 = vmatprep.subr.mxu0 0.0
      %2678 = vmatpush1.msra.mxu0 0.0
      %2679 = vmatprep.subr.mxu0 0.0
      %2680 = vmatpush1.msra.mxu0 0.0
      %2681 = vmatprep.mubr.f32.mxu0 0.0
      %2682 = vmatmul.mubr.f32.gmra.mrb[0].mxu0 %v2473
      %v2683 = vpop.f32.mrb[0].mxu0
      %v2684 = vadd.f32 0.0, %v2683
      %v2685 = vpop.f32.mrb[0].mxu0
      %v2686 = vadd.f32 0.0, %v2685
      %2687 = vdwg.mxu0
      %2688 = vmatprep.subr.mxu0 %v2447
      %2689 = vmatpush1.msra.mxu0 %v2446
      %2690 = vmatprep.subr.mxu0 %v2455
      %2691 = vmatpush1.msra.mxu0 %v2454
      %2692 = vmatprep.subr.mxu0 %v2463
      %2693 = vmatpush1.msra.mxu0 %v2462
      %2694 = vmatprep.subr.mxu0 %v2471
      %2695 = vmatpush1.msra.mxu0 %v2470
      %2696 = vmatprep.subr.mxu0 0.0
      %2697 = vmatpush1.msra.mxu0 0.0
      %2698 = vmatprep.subr.mxu0 0.0
      %2699 = vmatpush1.msra.mxu0 0.0
      %2700 = vmatprep.subr.mxu0 0.0
      %2701 = vmatpush1.msra.mxu0 0.0
      %2702 = vmatprep.subr.mxu0 0.0
      %2703 = vmatpush1.msra.mxu0 0.0
      %2704 = vmatprep.subr.mxu0 0.0
      %2705 = vmatpush1.msra.mxu0 0.0
      %2706 = vmatprep.subr.mxu0 0.0
      %2707 = vmatpush1.msra.mxu0 0.0
      %2708 = vmatprep.subr.mxu0 0.0
      %2709 = vmatpush1.msra.mxu0 0.0
      %2710 = vmatprep.subr.mxu0 0.0
      %2711 = vmatpush1.msra.mxu0 0.0
      %2712 = vmatprep.subr.mxu0 0.0
      %2713 = vmatpush1.msra.mxu0 0.0
      %2714 = vmatprep.subr.mxu0 0.0
      %2715 = vmatpush1.msra.mxu0 0.0
      %2716 = vmatprep.subr.mxu0 0.0
      %2717 = vmatpush1.msra.mxu0 0.0
      %2718 = vmatprep.subr.mxu0 0.0
      %2719 = vmatpush1.msra.mxu0 0.0
      %2720 = vmatprep.subr.mxu0 0.0
      %2721 = vmatpush1.msra.mxu0 0.0
      %2722 = vmatprep.subr.mxu0 0.0
      %2723 = vmatpush1.msra.mxu0 0.0
      %2724 = vmatprep.subr.mxu0 0.0
      %2725 = vmatpush1.msra.mxu0 0.0
      %2726 = vmatprep.subr.mxu0 0.0
      %2727 = vmatpush1.msra.mxu0 0.0
      %2728 = vmatprep.subr.mxu0 0.0
      %2729 = vmatpush1.msra.mxu0 0.0
      %2730 = vmatprep.subr.mxu0 0.0
      %2731 = vmatpush1.msra.mxu0 0.0
      %2732 = vmatprep.subr.mxu0 0.0
      %2733 = vmatpush1.msra.mxu0 0.0
      %2734 = vmatprep.subr.mxu0 0.0
      %2735 = vmatpush1.msra.mxu0 0.0
      %2736 = vmatprep.subr.mxu0 0.0
      %2737 = vmatpush1.msra.mxu0 0.0
      %2738 = vmatprep.subr.mxu0 0.0
      %2739 = vmatpush1.msra.mxu0 0.0
      %2740 = vmatprep.subr.mxu0 0.0
      %2741 = vmatpush1.msra.mxu0 0.0
      %2742 = vmatprep.subr.mxu0 0.0
      %2743 = vmatpush1.msra.mxu0 0.0
      %2744 = vmatprep.subr.mxu0 0.0
      %2745 = vmatpush1.msra.mxu0 0.0
      %2746 = vmatprep.subr.mxu0 0.0
      %2747 = vmatpush1.msra.mxu0 0.0
      %2748 = vmatprep.subr.mxu0 0.0
      %2749 = vmatpush1.msra.mxu0 0.0
      %2750 = vmatprep.subr.mxu0 0.0
      %2751 = vmatpush1.msra.mxu0 0.0
      %2752 = vmatprep.mubr.f32.mxu0 0.0
      %2753 = vmatmul.mubr.f32.gmra.mrb[0].mxu0 %v2473
      %v2754 = vpop.f32.mrb[0].mxu0
      %v2755 = vadd.f32 0.0, %v2754
      %v2756 = vpop.f32.mrb[0].mxu0
      %v2757 = vadd.f32 0.0, %v2756
      %2758 = vdwg.mxu0
      %v2760 = vsel %vm1237, %v2311, 0
      %2762 = vmatprep.subr.mxu0 %v2313
      %2763 = vmatpush1.msra.mxu0 %v2312
      %2764 = vmatprep.subr.mxu0 %v2321
      %2765 = vmatpush1.msra.mxu0 %v2320
      %2766 = vmatprep.subr.mxu0 %v2329
      %2767 = vmatpush1.msra.mxu0 %v2328
      %2768 = vmatprep.subr.mxu0 %v2337
      %2769 = vmatpush1.msra.mxu0 %v2336
      %2770 = vmatprep.subr.mxu0 0.0
      %2771 = vmatpush1.msra.mxu0 0.0
      %2772 = vmatprep.subr.mxu0 0.0
      %2773 = vmatpush1.msra.mxu0 0.0
      %2774 = vmatprep.subr.mxu0 0.0
      %2775 = vmatpush1.msra.mxu0 0.0
      %2776 = vmatprep.subr.mxu0 0.0
      %2777 = vmatpush1.msra.mxu0 0.0
      %2778 = vmatprep.subr.mxu0 0.0
      %2779 = vmatpush1.msra.mxu0 0.0
      %2780 = vmatprep.subr.mxu0 0.0
      %2781 = vmatpush1.msra.mxu0 0.0
      %2782 = vmatprep.subr.mxu0 0.0
      %2783 = vmatpush1.msra.mxu0 0.0
      %2784 = vmatprep.subr.mxu0 0.0
      %2785 = vmatpush1.msra.mxu0 0.0
      %2786 = vmatprep.subr.mxu0 0.0
      %2787 = vmatpush1.msra.mxu0 0.0
      %2788 = vmatprep.subr.mxu0 0.0
      %2789 = vmatpush1.msra.mxu0 0.0
      %2790 = vmatprep.subr.mxu0 0.0
      %2791 = vmatpush1.msra.mxu0 0.0
      %2792 = vmatprep.subr.mxu0 0.0
      %2793 = vmatpush1.msra.mxu0 0.0
      %2794 = vmatprep.subr.mxu0 0.0
      %2795 = vmatpush1.msra.mxu0 0.0
      %2796 = vmatprep.subr.mxu0 0.0
      %2797 = vmatpush1.msra.mxu0 0.0
      %2798 = vmatprep.subr.mxu0 0.0
      %2799 = vmatpush1.msra.mxu0 0.0
      %2800 = vmatprep.subr.mxu0 0.0
      %2801 = vmatpush1.msra.mxu0 0.0
      %2802 = vmatprep.subr.mxu0 0.0
      %2803 = vmatpush1.msra.mxu0 0.0
      %2804 = vmatprep.subr.mxu0 0.0
      %2805 = vmatpush1.msra.mxu0 0.0
      %2806 = vmatprep.subr.mxu0 0.0
      %2807 = vmatpush1.msra.mxu0 0.0
      %2808 = vmatprep.subr.mxu0 0.0
      %2809 = vmatpush1.msra.mxu0 0.0
      %2810 = vmatprep.subr.mxu0 0.0
      %2811 = vmatpush1.msra.mxu0 0.0
      %2812 = vmatprep.subr.mxu0 0.0
      %2813 = vmatpush1.msra.mxu0 0.0
      %2814 = vmatprep.subr.mxu0 0.0
      %2815 = vmatpush1.msra.mxu0 0.0
      %2816 = vmatprep.subr.mxu0 0.0
      %2817 = vmatpush1.msra.mxu0 0.0
      %2818 = vmatprep.subr.mxu0 0.0
      %2819 = vmatpush1.msra.mxu0 0.0
      %2820 = vmatprep.subr.mxu0 0.0
      %2821 = vmatpush1.msra.mxu0 0.0
      %2822 = vmatprep.subr.mxu0 0.0
      %2823 = vmatpush1.msra.mxu0 0.0
      %2824 = vmatprep.subr.mxu0 0.0
      %2825 = vmatpush1.msra.mxu0 0.0
      %2826 = vmatprep.mubr.f32.mxu0 0.0
      %2827 = vmatmul.mubr.f32.gmra.mrb[0].mxu0 %v2760
      %v2828 = vpop.f32.mrb[0].mxu0
      %v2829 = vadd.f32 %v2542, %v2828
      %v2830 = vpop.f32.mrb[0].mxu0
      %v2831 = vadd.f32 %v2544, %v2830
      %2832 = vdwg.mxu0
      %2833 = vmatprep.subr.mxu0 %v2315
      %2834 = vmatpush1.msra.mxu0 %v2314
      %2835 = vmatprep.subr.mxu0 %v2323
      %2836 = vmatpush1.msra.mxu0 %v2322
      %2837 = vmatprep.subr.mxu0 %v2331
      %2838 = vmatpush1.msra.mxu0 %v2330
      %2839 = vmatprep.subr.mxu0 %v2339
      %2840 = vmatpush1.msra.mxu0 %v2338
      %2841 = vmatprep.subr.mxu0 0.0
      %2842 = vmatpush1.msra.mxu0 0.0
      %2843 = vmatprep.subr.mxu0 0.0
      %2844 = vmatpush1.msra.mxu0 0.0
      %2845 = vmatprep.subr.mxu0 0.0
      %2846 = vmatpush1.msra.mxu0 0.0
      %2847 = vmatprep.subr.mxu0 0.0
      %2848 = vmatpush1.msra.mxu0 0.0
      %2849 = vmatprep.subr.mxu0 0.0
      %2850 = vmatpush1.msra.mxu0 0.0
      %2851 = vmatprep.subr.mxu0 0.0
      %2852 = vmatpush1.msra.mxu0 0.0
      %2853 = vmatprep.subr.mxu0 0.0
      %2854 = vmatpush1.msra.mxu0 0.0
      %2855 = vmatprep.subr.mxu0 0.0
      %2856 = vmatpush1.msra.mxu0 0.0
      %2857 = vmatprep.subr.mxu0 0.0
      %2858 = vmatpush1.msra.mxu0 0.0
      %2859 = vmatprep.subr.mxu0 0.0
      %2860 = vmatpush1.msra.mxu0 0.0
      %2861 = vmatprep.subr.mxu0 0.0
      %2862 = vmatpush1.msra.mxu0 0.0
      %2863 = vmatprep.subr.mxu0 0.0
      %2864 = vmatpush1.msra.mxu0 0.0
      %2865 = vmatprep.subr.mxu0 0.0
      %2866 = vmatpush1.msra.mxu0 0.0
      %2867 = vmatprep.subr.mxu0 0.0
      %2868 = vmatpush1.msra.mxu0 0.0
      %2869 = vmatprep.subr.mxu0 0.0
      %2870 = vmatpush1.msra.mxu0 0.0
      %2871 = vmatprep.subr.mxu0 0.0
      %2872 = vmatpush1.msra.mxu0 0.0
      %2873 = vmatprep.subr.mxu0 0.0
      %2874 = vmatpush1.msra.mxu0 0.0
      %2875 = vmatprep.subr.mxu0 0.0
      %2876 = vmatpush1.msra.mxu0 0.0
      %2877 = vmatprep.subr.mxu0 0.0
      %2878 = vmatpush1.msra.mxu0 0.0
      %2879 = vmatprep.subr.mxu0 0.0
      %2880 = vmatpush1.msra.mxu0 0.0
      %2881 = vmatprep.subr.mxu0 0.0
      %2882 = vmatpush1.msra.mxu0 0.0
      %2883 = vmatprep.subr.mxu0 0.0
      %2884 = vmatpush1.msra.mxu0 0.0
      %2885 = vmatprep.subr.mxu0 0.0
      %2886 = vmatpush1.msra.mxu0 0.0
      %2887 = vmatprep.subr.mxu0 0.0
      %2888 = vmatpush1.msra.mxu0 0.0
      %2889 = vmatprep.subr.mxu0 0.0
      %2890 = vmatpush1.msra.mxu0 0.0
      %2891 = vmatprep.subr.mxu0 0.0
      %2892 = vmatpush1.msra.mxu0 0.0
      %2893 = vmatprep.subr.mxu0 0.0
      %2894 = vmatpush1.msra.mxu0 0.0
      %2895 = vmatprep.subr.mxu0 0.0
      %2896 = vmatpush1.msra.mxu0 0.0
      %2897 = vmatprep.mubr.f32.mxu0 0.0
      %2898 = vmatmul.mubr.f32.gmra.mrb[0].mxu0 %v2760
      %v2899 = vpop.f32.mrb[0].mxu0
      %v2900 = vadd.f32 %v2613, %v2899
      %v2901 = vpop.f32.mrb[0].mxu0
      %v2902 = vadd.f32 %v2615, %v2901
      %2903 = vdwg.mxu0
      %2904 = vmatprep.subr.mxu0 %v2317
      %2905 = vmatpush1.msra.mxu0 %v2316
      %2906 = vmatprep.subr.mxu0 %v2325
      %2907 = vmatpush1.msra.mxu0 %v2324
      %2908 = vmatprep.subr.mxu0 %v2333
      %2909 = vmatpush1.msra.mxu0 %v2332
      %2910 = vmatprep.subr.mxu0 %v2341
      %2911 = vmatpush1.msra.mxu0 %v2340
      %2912 = vmatprep.subr.mxu0 0.0
      %2913 = vmatpush1.msra.mxu0 0.0
      %2914 = vmatprep.subr.mxu0 0.0
      %2915 = vmatpush1.msra.mxu0 0.0
      %2916 = vmatprep.subr.mxu0 0.0
      %2917 = vmatpush1.msra.mxu0 0.0
      %2918 = vmatprep.subr.mxu0 0.0
      %2919 = vmatpush1.msra.mxu0 0.0
      %2920 = vmatprep.subr.mxu0 0.0
      %2921 = vmatpush1.msra.mxu0 0.0
      %2922 = vmatprep.subr.mxu0 0.0
      %2923 = vmatpush1.msra.mxu0 0.0
      %2924 = vmatprep.subr.mxu0 0.0
      %2925 = vmatpush1.msra.mxu0 0.0
      %2926 = vmatprep.subr.mxu0 0.0
      %2927 = vmatpush1.msra.mxu0 0.0
      %2928 = vmatprep.subr.mxu0 0.0
      %2929 = vmatpush1.msra.mxu0 0.0
      %2930 = vmatprep.subr.mxu0 0.0
      %2931 = vmatpush1.msra.mxu0 0.0
      %2932 = vmatprep.subr.mxu0 0.0
      %2933 = vmatpush1.msra.mxu0 0.0
      %2934 = vmatprep.subr.mxu0 0.0
      %2935 = vmatpush1.msra.mxu0 0.0
      %2936 = vmatprep.subr.mxu0 0.0
      %2937 = vmatpush1.msra.mxu0 0.0
      %2938 = vmatprep.subr.mxu0 0.0
      %2939 = vmatpush1.msra.mxu0 0.0
      %2940 = vmatprep.subr.mxu0 0.0
      %2941 = vmatpush1.msra.mxu0 0.0
      %2942 = vmatprep.subr.mxu0 0.0
      %2943 = vmatpush1.msra.mxu0 0.0
      %2944 = vmatprep.subr.mxu0 0.0
      %2945 = vmatpush1.msra.mxu0 0.0
      %2946 = vmatprep.subr.mxu0 0.0
      %2947 = vmatpush1.msra.mxu0 0.0
      %2948 = vmatprep.subr.mxu0 0.0
      %2949 = vmatpush1.msra.mxu0 0.0
      %2950 = vmatprep.subr.mxu0 0.0
      %2951 = vmatpush1.msra.mxu0 0.0
      %2952 = vmatprep.subr.mxu0 0.0
      %2953 = vmatpush1.msra.mxu0 0.0
      %2954 = vmatprep.subr.mxu0 0.0
      %2955 = vmatpush1.msra.mxu0 0.0
      %2956 = vmatprep.subr.mxu0 0.0
      %2957 = vmatpush1.msra.mxu0 0.0
      %2958 = vmatprep.subr.mxu0 0.0
      %2959 = vmatpush1.msra.mxu0 0.0
      %2960 = vmatprep.subr.mxu0 0.0
      %2961 = vmatpush1.msra.mxu0 0.0
      %2962 = vmatprep.subr.mxu0 0.0
      %2963 = vmatpush1.msra.mxu0 0.0
      %2964 = vmatprep.subr.mxu0 0.0
      %2965 = vmatpush1.msra.mxu0 0.0
      %2966 = vmatprep.subr.mxu0 0.0
      %2967 = vmatpush1.msra.mxu0 0.0
      %2968 = vmatprep.mubr.f32.mxu0 0.0
      %2969 = vmatmul.mubr.f32.gmra.mrb[0].mxu0 %v2760
      %v2970 = vpop.f32.mrb[0].mxu0
      %v2971 = vadd.f32 %v2684, %v2970
      %v2972 = vpop.f32.mrb[0].mxu0
      %v2973 = vadd.f32 %v2686, %v2972
      %2974 = vdwg.mxu0
      %2975 = vmatprep.subr.mxu0 %v2319
      %2976 = vmatpush1.msra.mxu0 %v2318
      %2977 = vmatprep.subr.mxu0 %v2327
      %2978 = vmatpush1.msra.mxu0 %v2326
      %2979 = vmatprep.subr.mxu0 %v2335
      %2980 = vmatpush1.msra.mxu0 %v2334
      %2981 = vmatprep.subr.mxu0 %v2343
      %2982 = vmatpush1.msra.mxu0 %v2342
      %2983 = vmatprep.subr.mxu0 0.0
      %2984 = vmatpush1.msra.mxu0 0.0
      %2985 = vmatprep.subr.mxu0 0.0
      %2986 = vmatpush1.msra.mxu0 0.0
      %2987 = vmatprep.subr.mxu0 0.0
      %2988 = vmatpush1.msra.mxu0 0.0
      %2989 = vmatprep.subr.mxu0 0.0
      %2990 = vmatpush1.msra.mxu0 0.0
      %2991 = vmatprep.subr.mxu0 0.0
      %2992 = vmatpush1.msra.mxu0 0.0
      %2993 = vmatprep.subr.mxu0 0.0
      %2994 = vmatpush1.msra.mxu0 0.0
      %2995 = vmatprep.subr.mxu0 0.0
      %2996 = vmatpush1.msra.mxu0 0.0
      %2997 = vmatprep.subr.mxu0 0.0
      %2998 = vmatpush1.msra.mxu0 0.0
      %2999 = vmatprep.subr.mxu0 0.0
      %3000 = vmatpush1.msra.mxu0 0.0
      %3001 = vmatprep.subr.mxu0 0.0
      %3002 = vmatpush1.msra.mxu0 0.0
      %3003 = vmatprep.subr.mxu0 0.0
      %3004 = vmatpush1.msra.mxu0 0.0
      %3005 = vmatprep.subr.mxu0 0.0
      %3006 = vmatpush1.msra.mxu0 0.0
      %3007 = vmatprep.subr.mxu0 0.0
      %3008 = vmatpush1.msra.mxu0 0.0
      %3009 = vmatprep.subr.mxu0 0.0
      %3010 = vmatpush1.msra.mxu0 0.0
      %3011 = vmatprep.subr.mxu0 0.0
      %3012 = vmatpush1.msra.mxu0 0.0
      %3013 = vmatprep.subr.mxu0 0.0
      %3014 = vmatpush1.msra.mxu0 0.0
      %3015 = vmatprep.subr.mxu0 0.0
      %3016 = vmatpush1.msra.mxu0 0.0
      %3017 = vmatprep.subr.mxu0 0.0
      %3018 = vmatpush1.msra.mxu0 0.0
      %3019 = vmatprep.subr.mxu0 0.0
      %3020 = vmatpush1.msra.mxu0 0.0
      %3021 = vmatprep.subr.mxu0 0.0
      %3022 = vmatpush1.msra.mxu0 0.0
      %3023 = vmatprep.subr.mxu0 0.0
      %3024 = vmatpush1.msra.mxu0 0.0
      %3025 = vmatprep.subr.mxu0 0.0
      %3026 = vmatpush1.msra.mxu0 0.0
      %3027 = vmatprep.subr.mxu0 0.0
      %3028 = vmatpush1.msra.mxu0 0.0
      %3029 = vmatprep.subr.mxu0 0.0
      %3030 = vmatpush1.msra.mxu0 0.0
      %3031 = vmatprep.subr.mxu0 0.0
      %3032 = vmatpush1.msra.mxu0 0.0
      %3033 = vmatprep.subr.mxu0 0.0
      %3034 = vmatpush1.msra.mxu0 0.0
      %3035 = vmatprep.subr.mxu0 0.0
      %3036 = vmatpush1.msra.mxu0 0.0
      %3037 = vmatprep.subr.mxu0 0.0
      %3038 = vmatpush1.msra.mxu0 0.0
      %3039 = vmatprep.mubr.f32.mxu0 0.0
      %3040 = vmatmul.mubr.f32.gmra.mrb[0].mxu0 %v2760
      %v3041 = vpop.f32.mrb[0].mxu0
      %v3042 = vadd.f32 %v2755, %v3041
      %v3043 = vpop.f32.mrb[0].mxu0
      %v3044 = vadd.f32 %v2757, %v3043
      %3045 = vdwg.mxu0
      %v3046 = vrot.slane %v2191, 2
      %s3047 = vtos %v3046
      %v3048 = vstv %s3047
      %v3050 = vmul.f32 %v1516, %v3048
      %3051 = vrot.lane.b32.xlu0 %v3046, 127
      %v3052 = vpop.permute.xlu0 %3051
      %s3053 = vtos %v3052
      %v3054 = vstv %s3053
      %v3056 = vmul.f32 %v1851, %v3054
      %v3057 = vadd.f32 %v3050, %v3056
      %3058 = vrot.lane.b32.xlu0 %v3046, 126
      %v3059 = vpop.permute.xlu0 %3058
      %s3060 = vtos %v3059
      %v3061 = vstv %s3060
      %v3063 = vmul.f32 %v2186, %v3061
      %v3064 = vadd.f32 %v3057, %v3063
      %v3065 = vlaneseq
      %v3066 = vshrl.u32 %v3065, 7
      %v3067 = vsub.s32 2, %v3066
      %v3068 = vrot.slane %v2192, %v3067
      %v3069 = vadd.f32 %v3064, %v3068
      %v3070 = vmax.f32 %v3069, 0.0
      %3071 = vmatprep.subr.mxu0 0.0
      %3072 = vmatpush1.msra.mxu0 %v2193
      %3073 = vmatprep.subr.mxu0 0.0
      %3074 = vmatpush1.msra.mxu0 %v2194
      %3075 = vmatprep.subr.mxu0 0.0
      %3076 = vmatpush1.msra.mxu0 %v2195
      %3077 = vmatprep.subr.mxu0 0.0
      %3078 = vmatpush1.msra.mxu0 %v2196
      %3079 = vmatprep.subr.mxu0 0.0
      %3080 = vmatpush1.msra.mxu0 %v2197
      %3081 = vmatprep.subr.mxu0 0.0
      %3082 = vmatpush1.msra.mxu0 %v2198
      %3083 = vmatprep.subr.mxu0 0.0
      %3084 = vmatpush1.msra.mxu0 %v2199
      %3085 = vmatprep.subr.mxu0 0.0
      %3086 = vmatpush1.msra.mxu0 %v2200
      %3087 = vmatprep.subr.mxu0 0.0
      %3088 = vmatpush1.msra.mxu0 %v2201
      %3089 = vmatprep.subr.mxu0 0.0
      %3090 = vmatpush1.msra.mxu0 %v2202
      %3091 = vmatprep.subr.mxu0 0.0
      %3092 = vmatpush1.msra.mxu0 %v2203
      %3093 = vmatprep.subr.mxu0 0.0
      %3094 = vmatpush1.msra.mxu0 %v2204
      %3095 = vmatprep.subr.mxu0 0.0
      %3096 = vmatpush1.msra.mxu0 %v2205
      %3097 = vmatprep.subr.mxu0 0.0
      %3098 = vmatpush1.msra.mxu0 %v2206
      %3099 = vmatprep.subr.mxu0 0.0
      %3100 = vmatpush1.msra.mxu0 %v2207
      %3101 = vmatprep.subr.mxu0 0.0
      %3102 = vmatpush1.msra.mxu0 %v2208
      %3103 = vmatprep.subr.mxu0 0.0
      %3104 = vmatpush1.msra.mxu0 0.0
      %3105 = vmatprep.subr.mxu0 0.0
      %3106 = vmatpush1.msra.mxu0 0.0
      %3107 = vmatprep.subr.mxu0 0.0
      %3108 = vmatpush1.msra.mxu0 0.0
      %3109 = vmatprep.subr.mxu0 0.0
      %3110 = vmatpush1.msra.mxu0 0.0
      %3111 = vmatprep.subr.mxu0 0.0
      %3112 = vmatpush1.msra.mxu0 0.0
      %3113 = vmatprep.subr.mxu0 0.0
      %3114 = vmatpush1.msra.mxu0 0.0
      %3115 = vmatprep.subr.mxu0 0.0
      %3116 = vmatpush1.msra.mxu0 0.0
      %3117 = vmatprep.subr.mxu0 0.0
      %3118 = vmatpush1.msra.mxu0 0.0
      %3119 = vmatprep.subr.mxu0 0.0
      %3120 = vmatpush1.msra.mxu0 0.0
      %3121 = vmatprep.subr.mxu0 0.0
      %3122 = vmatpush1.msra.mxu0 0.0
      %3123 = vmatprep.subr.mxu0 0.0
      %3124 = vmatpush1.msra.mxu0 0.0
      %3125 = vmatprep.subr.mxu0 0.0
      %3126 = vmatpush1.msra.mxu0 0.0
      %3127 = vmatprep.subr.mxu0 0.0
      %3128 = vmatpush1.msra.mxu0 0.0
      %3129 = vmatprep.subr.mxu0 0.0
      %3130 = vmatpush1.msra.mxu0 0.0
      %3131 = vmatprep.subr.mxu0 0.0
      %3132 = vmatpush1.msra.mxu0 0.0
      %3133 = vmatprep.subr.mxu0 0.0
      %3134 = vmatpush1.msra.mxu0 0.0
      %3135 = vmatprep.mubr.f32.mxu0 0.0
      %3136 = vmatmul.mubr.f32.gmra.mrb[0].mxu0 %v3070
      %v3137 = vpop.f32.mrb[0].mxu0
      %v3138 = vadd.f32 %v2239, %v3137
      %v3139 = vpop.f32.mrb[0].mxu0
      %3140 = vdwg.mxu0
      %v3141 = vmax.f32 %v3138, 0.0
      %v3142 = vld [vmem:[%s8 + $0x200] sm:$0xff]
      %v3143 = vld [vmem:[%s8 + $0x208] sm:$0xff]
      %v3144 = vld [vmem:[%s8 + $0x210] sm:$0xff]
      %v3145 = vld [vmem:[%s8 + $0x218] sm:$0xff]
      %v3146 = vld [vmem:[%s8 + $0x220] sm:$0xff]
      %v3147 = vld [vmem:[%s8 + $0x228] sm:$0xff]
      %v3148 = vld [vmem:[%s8 + $0x230] sm:$0xff]
      %v3149 = vld [vmem:[%s8 + $0x238] sm:$0xff]
      %v3150 = vld [vmem:[%s8 + $0x240] sm:$0xff]
      %v3151 = vld [vmem:[%s8 + $0x248] sm:$0xff]
      %v3152 = vld [vmem:[%s8 + $0x250] sm:$0xff]
      %v3153 = vld [vmem:[%s8 + $0x258] sm:$0xff]
      %v3154 = vld [vmem:[%s8 + $0x260] sm:$0xff]
      %v3155 = vld [vmem:[%s8 + $0x268] sm:$0xff]
      %v3156 = vld [vmem:[%s8 + $0x270] sm:$0xff]
      %v3157 = vld [vmem:[%s8 + $0x278] sm:$0xff]
      %v3158 = vld [vmem:[%s8 + $0x280] sm:$0xff]
      %v3159 = vld [vmem:[%s8 + $0x288] sm:$0xff]
      %v3160 = vld [vmem:[%s8 + $0x290] sm:$0xff]
      %v3161 = vld [vmem:[%s8 + $0x298] sm:$0xff]
      %v3162 = vld [vmem:[%s8 + $0x2a0] sm:$0xff]
      %v3163 = vld [vmem:[%s8 + $0x2a8] sm:$0xff]
      %v3164 = vld [vmem:[%s8 + $0x2b0] sm:$0xff]
      %v3165 = vld [vmem:[%s8 + $0x2b8] sm:$0xff]
      %v3166 = vld [vmem:[%s8 + $0x2c0] sm:$0xff]
      %v3167 = vld [vmem:[%s8 + $0x2c8] sm:$0xff]
      %v3168 = vld [vmem:[%s8 + $0x2d0] sm:$0xff]
      %v3169 = vld [vmem:[%s8 + $0x2d8] sm:$0xff]
      %v3170 = vld [vmem:[%s8 + $0x2e0] sm:$0xff]
      %v3171 = vld [vmem:[%s8 + $0x2e8] sm:$0xff]
      %v3172 = vld [vmem:[%s8 + $0x2f0] sm:$0xff]
      %v3173 = vld [vmem:[%s8 + $0x2f8] sm:$0xff]
      %v3175 = vsel %vm1237, %v3141, 0
      %3177 = vmatprep.subr.mxu0 %v3143
      %3178 = vmatpush1.msra.mxu0 %v3142
      %3179 = vmatprep.subr.mxu0 %v3151
      %3180 = vmatpush1.msra.mxu0 %v3150
      %3181 = vmatprep.subr.mxu0 %v3159
      %3182 = vmatpush1.msra.mxu0 %v3158
      %3183 = vmatprep.subr.mxu0 %v3167
      %3184 = vmatpush1.msra.mxu0 %v3166
      %3185 = vmatprep.subr.mxu0 0.0
      %3186 = vmatpush1.msra.mxu0 0.0
      %3187 = vmatprep.subr.mxu0 0.0
      %3188 = vmatpush1.msra.mxu0 0.0
      %3189 = vmatprep.subr.mxu0 0.0
      %3190 = vmatpush1.msra.mxu0 0.0
      %3191 = vmatprep.subr.mxu0 0.0
      %3192 = vmatpush1.msra.mxu0 0.0
      %3193 = vmatprep.subr.mxu0 0.0
      %3194 = vmatpush1.msra.mxu0 0.0
      %3195 = vmatprep.subr.mxu0 0.0
      %3196 = vmatpush1.msra.mxu0 0.0
      %3197 = vmatprep.subr.mxu0 0.0
      %3198 = vmatpush1.msra.mxu0 0.0
      %3199 = vmatprep.subr.mxu0 0.0
      %3200 = vmatpush1.msra.mxu0 0.0
      %3201 = vmatprep.subr.mxu0 0.0
      %3202 = vmatpush1.msra.mxu0 0.0
      %3203 = vmatprep.subr.mxu0 0.0
      %3204 = vmatpush1.msra.mxu0 0.0
      %3205 = vmatprep.subr.mxu0 0.0
      %3206 = vmatpush1.msra.mxu0 0.0
      %3207 = vmatprep.subr.mxu0 0.0
      %3208 = vmatpush1.msra.mxu0 0.0
      %3209 = vmatprep.subr.mxu0 0.0
      %3210 = vmatpush1.msra.mxu0 0.0
      %3211 = vmatprep.subr.mxu0 0.0
      %3212 = vmatpush1.msra.mxu0 0.0
      %3213 = vmatprep.subr.mxu0 0.0
      %3214 = vmatpush1.msra.mxu0 0.0
      %3215 = vmatprep.subr.mxu0 0.0
      %3216 = vmatpush1.msra.mxu0 0.0
      %3217 = vmatprep.subr.mxu0 0.0
      %3218 = vmatpush1.msra.mxu0 0.0
      %3219 = vmatprep.subr.mxu0 0.0
      %3220 = vmatpush1.msra.mxu0 0.0
      %3221 = vmatprep.subr.mxu0 0.0
      %3222 = vmatpush1.msra.mxu0 0.0
      %3223 = vmatprep.subr.mxu0 0.0
      %3224 = vmatpush1.msra.mxu0 0.0
      %3225 = vmatprep.subr.mxu0 0.0
      %3226 = vmatpush1.msra.mxu0 0.0
      %3227 = vmatprep.subr.mxu0 0.0
      %3228 = vmatpush1.msra.mxu0 0.0
      %3229 = vmatprep.subr.mxu0 0.0
      %3230 = vmatpush1.msra.mxu0 0.0
      %3231 = vmatprep.subr.mxu0 0.0
      %3232 = vmatpush1.msra.mxu0 0.0
      %3233 = vmatprep.subr.mxu0 0.0
      %3234 = vmatpush1.msra.mxu0 0.0
      %3235 = vmatprep.subr.mxu0 0.0
      %3236 = vmatpush1.msra.mxu0 0.0
      %3237 = vmatprep.subr.mxu0 0.0
      %3238 = vmatpush1.msra.mxu0 0.0
      %3239 = vmatprep.subr.mxu0 0.0
      %3240 = vmatpush1.msra.mxu0 0.0
      %3241 = vmatprep.mubr.f32.mxu0 0.0
      %3242 = vmatmul.mubr.f32.gmra.mrb[0].mxu0 %v3175
      %v3243 = vpop.f32.mrb[0].mxu0
      %v3244 = vadd.f32 0.0, %v3243
      %v3245 = vpop.f32.mrb[0].mxu0
      %v3246 = vadd.f32 0.0, %v3245
      %3247 = vdwg.mxu0
      %3248 = vmatprep.subr.mxu0 %v3145
      %3249 = vmatpush1.msra.mxu0 %v3144
      %3250 = vmatprep.subr.mxu0 %v3153
      %3251 = vmatpush1.msra.mxu0 %v3152
      %3252 = vmatprep.subr.mxu0 %v3161
      %3253 = vmatpush1.msra.mxu0 %v3160
      %3254 = vmatprep.subr.mxu0 %v3169
      %3255 = vmatpush1.msra.mxu0 %v3168
      %3256 = vmatprep.subr.mxu0 0.0
      %3257 = vmatpush1.msra.mxu0 0.0
      %3258 = vmatprep.subr.mxu0 0.0
      %3259 = vmatpush1.msra.mxu0 0.0
      %3260 = vmatprep.subr.mxu0 0.0
      %3261 = vmatpush1.msra.mxu0 0.0
      %3262 = vmatprep.subr.mxu0 0.0
      %3263 = vmatpush1.msra.mxu0 0.0
      %3264 = vmatprep.subr.mxu0 0.0
      %3265 = vmatpush1.msra.mxu0 0.0
      %3266 = vmatprep.subr.mxu0 0.0
      %3267 = vmatpush1.msra.mxu0 0.0
      %3268 = vmatprep.subr.mxu0 0.0
      %3269 = vmatpush1.msra.mxu0 0.0
      %3270 = vmatprep.subr.mxu0 0.0
      %3271 = vmatpush1.msra.mxu0 0.0
      %3272 = vmatprep.subr.mxu0 0.0
      %3273 = vmatpush1.msra.mxu0 0.0
      %3274 = vmatprep.subr.mxu0 0.0
      %3275 = vmatpush1.msra.mxu0 0.0
      %3276 = vmatprep.subr.mxu0 0.0
      %3277 = vmatpush1.msra.mxu0 0.0
      %3278 = vmatprep.subr.mxu0 0.0
      %3279 = vmatpush1.msra.mxu0 0.0
      %3280 = vmatprep.subr.mxu0 0.0
      %3281 = vmatpush1.msra.mxu0 0.0
      %3282 = vmatprep.subr.mxu0 0.0
      %3283 = vmatpush1.msra.mxu0 0.0
      %3284 = vmatprep.subr.mxu0 0.0
      %3285 = vmatpush1.msra.mxu0 0.0
      %3286 = vmatprep.subr.mxu0 0.0
      %3287 = vmatpush1.msra.mxu0 0.0
      %3288 = vmatprep.subr.mxu0 0.0
      %3289 = vmatpush1.msra.mxu0 0.0
      %3290 = vmatprep.subr.mxu0 0.0
      %3291 = vmatpush1.msra.mxu0 0.0
      %3292 = vmatprep.subr.mxu0 0.0
      %3293 = vmatpush1.msra.mxu0 0.0
      %3294 = vmatprep.subr.mxu0 0.0
      %3295 = vmatpush1.msra.mxu0 0.0
      %3296 = vmatprep.subr.mxu0 0.0
      %3297 = vmatpush1.msra.mxu0 0.0
      %3298 = vmatprep.subr.mxu0 0.0
      %3299 = vmatpush1.msra.mxu0 0.0
      %3300 = vmatprep.subr.mxu0 0.0
      %3301 = vmatpush1.msra.mxu0 0.0
      %3302 = vmatprep.subr.mxu0 0.0
      %3303 = vmatpush1.msra.mxu0 0.0
      %3304 = vmatprep.subr.mxu0 0.0
      %3305 = vmatpush1.msra.mxu0 0.0
      %3306 = vmatprep.subr.mxu0 0.0
      %3307 = vmatpush1.msra.mxu0 0.0
      %3308 = vmatprep.subr.mxu0 0.0
      %3309 = vmatpush1.msra.mxu0 0.0
      %3310 = vmatprep.subr.mxu0 0.0
      %3311 = vmatpush1.msra.mxu0 0.0
      %3312 = vmatprep.mubr.f32.mxu0 0.0
      %3313 = vmatmul.mubr.f32.gmra.mrb[0].mxu0 %v3175
      %v3314 = vpop.f32.mrb[0].mxu0
      %v3315 = vadd.f32 0.0, %v3314
      %v3316 = vpop.f32.mrb[0].mxu0
      %v3317 = vadd.f32 0.0, %v3316
      %3318 = vdwg.mxu0
      %3319 = vmatprep.subr.mxu0 %v3147
      %3320 = vmatpush1.msra.mxu0 %v3146
      %3321 = vmatprep.subr.mxu0 %v3155
      %3322 = vmatpush1.msra.mxu0 %v3154
      %3323 = vmatprep.subr.mxu0 %v3163
      %3324 = vmatpush1.msra.mxu0 %v3162
      %3325 = vmatprep.subr.mxu0 %v3171
      %3326 = vmatpush1.msra.mxu0 %v3170
      %3327 = vmatprep.subr.mxu0 0.0
      %3328 = vmatpush1.msra.mxu0 0.0
      %3329 = vmatprep.subr.mxu0 0.0
      %3330 = vmatpush1.msra.mxu0 0.0
      %3331 = vmatprep.subr.mxu0 0.0
      %3332 = vmatpush1.msra.mxu0 0.0
      %3333 = vmatprep.subr.mxu0 0.0
      %3334 = vmatpush1.msra.mxu0 0.0
      %3335 = vmatprep.subr.mxu0 0.0
      %3336 = vmatpush1.msra.mxu0 0.0
      %3337 = vmatprep.subr.mxu0 0.0
      %3338 = vmatpush1.msra.mxu0 0.0
      %3339 = vmatprep.subr.mxu0 0.0
      %3340 = vmatpush1.msra.mxu0 0.0
      %3341 = vmatprep.subr.mxu0 0.0
      %3342 = vmatpush1.msra.mxu0 0.0
      %3343 = vmatprep.subr.mxu0 0.0
      %3344 = vmatpush1.msra.mxu0 0.0
      %3345 = vmatprep.subr.mxu0 0.0
      %3346 = vmatpush1.msra.mxu0 0.0
      %3347 = vmatprep.subr.mxu0 0.0
      %3348 = vmatpush1.msra.mxu0 0.0
      %3349 = vmatprep.subr.mxu0 0.0
      %3350 = vmatpush1.msra.mxu0 0.0
      %3351 = vmatprep.subr.mxu0 0.0
      %3352 = vmatpush1.msra.mxu0 0.0
      %3353 = vmatprep.subr.mxu0 0.0
      %3354 = vmatpush1.msra.mxu0 0.0
      %3355 = vmatprep.subr.mxu0 0.0
      %3356 = vmatpush1.msra.mxu0 0.0
      %3357 = vmatprep.subr.mxu0 0.0
      %3358 = vmatpush1.msra.mxu0 0.0
      %3359 = vmatprep.subr.mxu0 0.0
      %3360 = vmatpush1.msra.mxu0 0.0
      %3361 = vmatprep.subr.mxu0 0.0
      %3362 = vmatpush1.msra.mxu0 0.0
      %3363 = vmatprep.subr.mxu0 0.0
      %3364 = vmatpush1.msra.mxu0 0.0
      %3365 = vmatprep.subr.mxu0 0.0
      %3366 = vmatpush1.msra.mxu0 0.0
      %3367 = vmatprep.subr.mxu0 0.0
      %3368 = vmatpush1.msra.mxu0 0.0
      %3369 = vmatprep.subr.mxu0 0.0
      %3370 = vmatpush1.msra.mxu0 0.0
      %3371 = vmatprep.subr.mxu0 0.0
      %3372 = vmatpush1.msra.mxu0 0.0
      %3373 = vmatprep.subr.mxu0 0.0
      %3374 = vmatpush1.msra.mxu0 0.0
      %3375 = vmatprep.subr.mxu0 0.0
      %3376 = vmatpush1.msra.mxu0 0.0
      %3377 = vmatprep.subr.mxu0 0.0
      %3378 = vmatpush1.msra.mxu0 0.0
      %3379 = vmatprep.subr.mxu0 0.0
      %3380 = vmatpush1.msra.mxu0 0.0
      %3381 = vmatprep.subr.mxu0 0.0
      %3382 = vmatpush1.msra.mxu0 0.0
      %3383 = vmatprep.mubr.f32.mxu0 0.0
      %3384 = vmatmul.mubr.f32.gmra.mrb[0].mxu0 %v3175
      %v3385 = vpop.f32.mrb[0].mxu0
      %v3386 = vadd.f32 0.0, %v3385
      %v3387 = vpop.f32.mrb[0].mxu0
      %v3388 = vadd.f32 0.0, %v3387
      %3389 = vdwg.mxu0
      %3390 = vmatprep.subr.mxu0 %v3149
      %3391 = vmatpush1.msra.mxu0 %v3148
      %3392 = vmatprep.subr.mxu0 %v3157
      %3393 = vmatpush1.msra.mxu0 %v3156
      %3394 = vmatprep.subr.mxu0 %v3165
      %3395 = vmatpush1.msra.mxu0 %v3164
      %3396 = vmatprep.subr.mxu0 %v3173
      %3397 = vmatpush1.msra.mxu0 %v3172
      %3398 = vmatprep.subr.mxu0 0.0
      %3399 = vmatpush1.msra.mxu0 0.0
      %3400 = vmatprep.subr.mxu0 0.0
      %3401 = vmatpush1.msra.mxu0 0.0
      %3402 = vmatprep.subr.mxu0 0.0
      %3403 = vmatpush1.msra.mxu0 0.0
      %3404 = vmatprep.subr.mxu0 0.0
      %3405 = vmatpush1.msra.mxu0 0.0
      %3406 = vmatprep.subr.mxu0 0.0
      %3407 = vmatpush1.msra.mxu0 0.0
      %3408 = vmatprep.subr.mxu0 0.0
      %3409 = vmatpush1.msra.mxu0 0.0
      %3410 = vmatprep.subr.mxu0 0.0
      %3411 = vmatpush1.msra.mxu0 0.0
      %3412 = vmatprep.subr.mxu0 0.0
      %3413 = vmatpush1.msra.mxu0 0.0
      %3414 = vmatprep.subr.mxu0 0.0
      %3415 = vmatpush1.msra.mxu0 0.0
      %3416 = vmatprep.subr.mxu0 0.0
      %3417 = vmatpush1.msra.mxu0 0.0
      %3418 = vmatprep.subr.mxu0 0.0
      %3419 = vmatpush1.msra.mxu0 0.0
      %3420 = vmatprep.subr.mxu0 0.0
      %3421 = vmatpush1.msra.mxu0 0.0
      %3422 = vmatprep.subr.mxu0 0.0
      %3423 = vmatpush1.msra.mxu0 0.0
      %3424 = vmatprep.subr.mxu0 0.0
      %3425 = vmatpush1.msra.mxu0 0.0
      %3426 = vmatprep.subr.mxu0 0.0
      %3427 = vmatpush1.msra.mxu0 0.0
      %3428 = vmatprep.subr.mxu0 0.0
      %3429 = vmatpush1.msra.mxu0 0.0
      %3430 = vmatprep.subr.mxu0 0.0
      %3431 = vmatpush1.msra.mxu0 0.0
      %3432 = vmatprep.subr.mxu0 0.0
      %3433 = vmatpush1.msra.mxu0 0.0
      %3434 = vmatprep.subr.mxu0 0.0
      %3435 = vmatpush1.msra.mxu0 0.0
      %3436 = vmatprep.subr.mxu0 0.0
      %3437 = vmatpush1.msra.mxu0 0.0
      %3438 = vmatprep.subr.mxu0 0.0
      %3439 = vmatpush1.msra.mxu0 0.0
      %3440 = vmatprep.subr.mxu0 0.0
      %3441 = vmatpush1.msra.mxu0 0.0
      %3442 = vmatprep.subr.mxu0 0.0
      %3443 = vmatpush1.msra.mxu0 0.0
      %3444 = vmatprep.subr.mxu0 0.0
      %3445 = vmatpush1.msra.mxu0 0.0
      %3446 = vmatprep.subr.mxu0 0.0
      %3447 = vmatpush1.msra.mxu0 0.0
      %3448 = vmatprep.subr.mxu0 0.0
      %3449 = vmatpush1.msra.mxu0 0.0
      %3450 = vmatprep.subr.mxu0 0.0
      %3451 = vmatpush1.msra.mxu0 0.0
      %3452 = vmatprep.subr.mxu0 0.0
      %3453 = vmatpush1.msra.mxu0 0.0
      %3454 = vmatprep.mubr.f32.mxu0 0.0
      %3455 = vmatmul.mubr.f32.gmra.mrb[0].mxu0 %v3175
      %v3456 = vpop.f32.mrb[0].mxu0
      %v3457 = vadd.f32 0.0, %v3456
      %v3458 = vpop.f32.mrb[0].mxu0
      %v3459 = vadd.f32 0.0, %v3458
      %3460 = vdwg.mxu0
      %v3461 = vadd.f32 %v2829, %v3244
      %v3462 = vadd.f32 %v2831, %v3246
      %v3463 = vadd.f32 %v2900, %v3315
      %v3464 = vadd.f32 %v2902, %v3317
      %v3465 = vadd.f32 %v2971, %v3386
      %v3466 = vadd.f32 %v2973, %v3388
      %v3467 = vadd.f32 %v3042, %v3457
      %v3468 = vadd.f32 %v3044, %v3459
      %v3469 = vrot.slane %v2191, 3
      %s3470 = vtos %v3469
      %v3471 = vstv %s3470
      %v3473 = vmul.f32 %v1516, %v3471
      %3474 = vrot.lane.b32.xlu0 %v3469, 127
      %v3475 = vpop.permute.xlu0 %3474
      %s3476 = vtos %v3475
      %v3477 = vstv %s3476
      %v3479 = vmul.f32 %v1851, %v3477
      %v3480 = vadd.f32 %v3473, %v3479
      %3481 = vrot.lane.b32.xlu0 %v3469, 126
      %v3482 = vpop.permute.xlu0 %3481
      %s3483 = vtos %v3482
      %v3484 = vstv %s3483
      %v3486 = vmul.f32 %v2186, %v3484
      %v3487 = vadd.f32 %v3480, %v3486
      %v3488 = vlaneseq
      %v3489 = vshrl.u32 %v3488, 7
      %v3490 = vsub.s32 3, %v3489
      %v3491 = vrot.slane %v2192, %v3490
      %v3492 = vadd.f32 %v3487, %v3491
      %v3493 = vmax.f32 %v3492, 0.0
      %3494 = vmatprep.subr.mxu0 0.0
      %3495 = vmatpush1.msra.mxu0 %v2193
      %3496 = vmatprep.subr.mxu0 0.0
      %3497 = vmatpush1.msra.mxu0 %v2194
      %3498 = vmatprep.subr.mxu0 0.0
      %3499 = vmatpush1.msra.mxu0 %v2195
      %3500 = vmatprep.subr.mxu0 0.0
      %3501 = vmatpush1.msra.mxu0 %v2196
      %3502 = vmatprep.subr.mxu0 0.0
      %3503 = vmatpush1.msra.mxu0 %v2197
      %3504 = vmatprep.subr.mxu0 0.0
      %3505 = vmatpush1.msra.mxu0 %v2198
      %3506 = vmatprep.subr.mxu0 0.0
      %3507 = vmatpush1.msra.mxu0 %v2199
      %3508 = vmatprep.subr.mxu0 0.0
      %3509 = vmatpush1.msra.mxu0 %v2200
      %3510 = vmatprep.subr.mxu0 0.0
      %3511 = vmatpush1.msra.mxu0 %v2201
      %3512 = vmatprep.subr.mxu0 0.0
      %3513 = vmatpush1.msra.mxu0 %v2202
      %3514 = vmatprep.subr.mxu0 0.0
      %3515 = vmatpush1.msra.mxu0 %v2203
      %3516 = vmatprep.subr.mxu0 0.0
      %3517 = vmatpush1.msra.mxu0 %v2204
      %3518 = vmatprep.subr.mxu0 0.0
      %3519 = vmatpush1.msra.mxu0 %v2205
      %3520 = vmatprep.subr.mxu0 0.0
      %3521 = vmatpush1.msra.mxu0 %v2206
      %3522 = vmatprep.subr.mxu0 0.0
      %3523 = vmatpush1.msra.mxu0 %v2207
      %3524 = vmatprep.subr.mxu0 0.0
      %3525 = vmatpush1.msra.mxu0 %v2208
      %3526 = vmatprep.subr.mxu0 0.0
      %3527 = vmatpush1.msra.mxu0 0.0
      %3528 = vmatprep.subr.mxu0 0.0
      %3529 = vmatpush1.msra.mxu0 0.0
      %3530 = vmatprep.subr.mxu0 0.0
      %3531 = vmatpush1.msra.mxu0 0.0
      %3532 = vmatprep.subr.mxu0 0.0
      %3533 = vmatpush1.msra.mxu0 0.0
      %3534 = vmatprep.subr.mxu0 0.0
      %3535 = vmatpush1.msra.mxu0 0.0
      %3536 = vmatprep.subr.mxu0 0.0
      %3537 = vmatpush1.msra.mxu0 0.0
      %3538 = vmatprep.subr.mxu0 0.0
      %3539 = vmatpush1.msra.mxu0 0.0
      %3540 = vmatprep.subr.mxu0 0.0
      %3541 = vmatpush1.msra.mxu0 0.0
      %3542 = vmatprep.subr.mxu0 0.0
      %3543 = vmatpush1.msra.mxu0 0.0
      %3544 = vmatprep.subr.mxu0 0.0
      %3545 = vmatpush1.msra.mxu0 0.0
      %3546 = vmatprep.subr.mxu0 0.0
      %3547 = vmatpush1.msra.mxu0 0.0
      %3548 = vmatprep.subr.mxu0 0.0
      %3549 = vmatpush1.msra.mxu0 0.0
      %3550 = vmatprep.subr.mxu0 0.0
      %3551 = vmatpush1.msra.mxu0 0.0
      %3552 = vmatprep.subr.mxu0 0.0
      %3553 = vmatpush1.msra.mxu0 0.0
      %3554 = vmatprep.subr.mxu0 0.0
      %3555 = vmatpush1.msra.mxu0 0.0
      %3556 = vmatprep.subr.mxu0 0.0
      %3557 = vmatpush1.msra.mxu0 0.0
      %3558 = vmatprep.mubr.f32.mxu0 0.0
      %3559 = vmatmul.mubr.f32.gmra.mrb[0].mxu0 %v3493
      %v3560 = vpop.f32.mrb[0].mxu0
      %v3561 = vadd.f32 %v2239, %v3560
      %v3562 = vpop.f32.mrb[0].mxu0
      %3563 = vdwg.mxu0
      %v3564 = vmax.f32 %v3561, 0.0
      %v3565 = vld [vmem:[%s8 + $0x300] sm:$0xff]
      %v3566 = vld [vmem:[%s8 + $0x308] sm:$0xff]
      %v3567 = vld [vmem:[%s8 + $0x310] sm:$0xff]
      %v3568 = vld [vmem:[%s8 + $0x318] sm:$0xff]
      %v3569 = vld [vmem:[%s8 + $0x320] sm:$0xff]
      %v3570 = vld [vmem:[%s8 + $0x328] sm:$0xff]
      %v3571 = vld [vmem:[%s8 + $0x330] sm:$0xff]
      %v3572 = vld [vmem:[%s8 + $0x338] sm:$0xff]
      %v3573 = vld [vmem:[%s8 + $0x340] sm:$0xff]
      %v3574 = vld [vmem:[%s8 + $0x348] sm:$0xff]
      %v3575 = vld [vmem:[%s8 + $0x350] sm:$0xff]
      %v3576 = vld [vmem:[%s8 + $0x358] sm:$0xff]
      %v3577 = vld [vmem:[%s8 + $0x360] sm:$0xff]
      %v3578 = vld [vmem:[%s8 + $0x368] sm:$0xff]
      %v3579 = vld [vmem:[%s8 + $0x370] sm:$0xff]
      %v3580 = vld [vmem:[%s8 + $0x378] sm:$0xff]
      %v3581 = vld [vmem:[%s8 + $0x380] sm:$0xff]
      %v3582 = vld [vmem:[%s8 + $0x388] sm:$0xff]
      %v3583 = vld [vmem:[%s8 + $0x390] sm:$0xff]
      %v3584 = vld [vmem:[%s8 + $0x398] sm:$0xff]
      %v3585 = vld [vmem:[%s8 + $0x3a0] sm:$0xff]
      %v3586 = vld [vmem:[%s8 + $0x3a8] sm:$0xff]
      %v3587 = vld [vmem:[%s8 + $0x3b0] sm:$0xff]
      %v3588 = vld [vmem:[%s8 + $0x3b8] sm:$0xff]
      %v3589 = vld [vmem:[%s8 + $0x3c0] sm:$0xff]
      %v3590 = vld [vmem:[%s8 + $0x3c8] sm:$0xff]
      %v3591 = vld [vmem:[%s8 + $0x3d0] sm:$0xff]
      %v3592 = vld [vmem:[%s8 + $0x3d8] sm:$0xff]
      %v3593 = vld [vmem:[%s8 + $0x3e0] sm:$0xff]
      %v3594 = vld [vmem:[%s8 + $0x3e8] sm:$0xff]
      %v3595 = vld [vmem:[%s8 + $0x3f0] sm:$0xff]
      %v3596 = vld [vmem:[%s8 + $0x3f8] sm:$0xff]
      %v3598 = vsel %vm1237, %v3564, 0
      %3600 = vmatprep.subr.mxu0 %v3566
      %3601 = vmatpush1.msra.mxu0 %v3565
      %3602 = vmatprep.subr.mxu0 %v3574
      %3603 = vmatpush1.msra.mxu0 %v3573
      %3604 = vmatprep.subr.mxu0 %v3582
      %3605 = vmatpush1.msra.mxu0 %v3581
      %3606 = vmatprep.subr.mxu0 %v3590
      %3607 = vmatpush1.msra.mxu0 %v3589
      %3608 = vmatprep.subr.mxu0 0.0
      %3609 = vmatpush1.msra.mxu0 0.0
      %3610 = vmatprep.subr.mxu0 0.0
      %3611 = vmatpush1.msra.mxu0 0.0
      %3612 = vmatprep.subr.mxu0 0.0
      %3613 = vmatpush1.msra.mxu0 0.0
      %3614 = vmatprep.subr.mxu0 0.0
      %3615 = vmatpush1.msra.mxu0 0.0
      %3616 = vmatprep.subr.mxu0 0.0
      %3617 = vmatpush1.msra.mxu0 0.0
      %3618 = vmatprep.subr.mxu0 0.0
      %3619 = vmatpush1.msra.mxu0 0.0
      %3620 = vmatprep.subr.mxu0 0.0
      %3621 = vmatpush1.msra.mxu0 0.0
      %3622 = vmatprep.subr.mxu0 0.0
      %3623 = vmatpush1.msra.mxu0 0.0
      %3624 = vmatprep.subr.mxu0 0.0
      %3625 = vmatpush1.msra.mxu0 0.0
      %3626 = vmatprep.subr.mxu0 0.0
      %3627 = vmatpush1.msra.mxu0 0.0
      %3628 = vmatprep.subr.mxu0 0.0
      %3629 = vmatpush1.msra.mxu0 0.0
      %3630 = vmatprep.subr.mxu0 0.0
      %3631 = vmatpush1.msra.mxu0 0.0
      %3632 = vmatprep.subr.mxu0 0.0
      %3633 = vmatpush1.msra.mxu0 0.0
      %3634 = vmatprep.subr.mxu0 0.0
      %3635 = vmatpush1.msra.mxu0 0.0
      %3636 = vmatprep.subr.mxu0 0.0
      %3637 = vmatpush1.msra.mxu0 0.0
      %3638 = vmatprep.subr.mxu0 0.0
      %3639 = vmatpush1.msra.mxu0 0.0
      %3640 = vmatprep.subr.mxu0 0.0
      %3641 = vmatpush1.msra.mxu0 0.0
      %3642 = vmatprep.subr.mxu0 0.0
      %3643 = vmatpush1.msra.mxu0 0.0
      %3644 = vmatprep.subr.mxu0 0.0
      %3645 = vmatpush1.msra.mxu0 0.0
      %3646 = vmatprep.subr.mxu0 0.0
      %3647 = vmatpush1.msra.mxu0 0.0
      %3648 = vmatprep.subr.mxu0 0.0
      %3649 = vmatpush1.msra.mxu0 0.0
      %3650 = vmatprep.subr.mxu0 0.0
      %3651 = vmatpush1.msra.mxu0 0.0
      %3652 = vmatprep.subr.mxu0 0.0
      %3653 = vmatpush1.msra.mxu0 0.0
      %3654 = vmatprep.subr.mxu0 0.0
      %3655 = vmatpush1.msra.mxu0 0.0
      %3656 = vmatprep.subr.mxu0 0.0
      %3657 = vmatpush1.msra.mxu0 0.0
      %3658 = vmatprep.subr.mxu0 0.0
      %3659 = vmatpush1.msra.mxu0 0.0
      %3660 = vmatprep.subr.mxu0 0.0
      %3661 = vmatpush1.msra.mxu0 0.0
      %3662 = vmatprep.subr.mxu0 0.0
      %3663 = vmatpush1.msra.mxu0 0.0
      %3664 = vmatprep.mubr.f32.mxu0 0.0
      %3665 = vmatmul.mubr.f32.gmra.mrb[0].mxu0 %v3598
      %v3666 = vpop.f32.mrb[0].mxu0
      %v3667 = vadd.f32 0.0, %v3666
      %v3668 = vpop.f32.mrb[0].mxu0
      %v3669 = vadd.f32 0.0, %v3668
      %3670 = vdwg.mxu0
      %3671 = vmatprep.subr.mxu0 %v3568
      %3672 = vmatpush1.msra.mxu0 %v3567
      %3673 = vmatprep.subr.mxu0 %v3576
      %3674 = vmatpush1.msra.mxu0 %v3575
      %3675 = vmatprep.subr.mxu0 %v3584
      %3676 = vmatpush1.msra.mxu0 %v3583
      %3677 = vmatprep.subr.mxu0 %v3592
      %3678 = vmatpush1.msra.mxu0 %v3591
      %3679 = vmatprep.subr.mxu0 0.0
      %3680 = vmatpush1.msra.mxu0 0.0
      %3681 = vmatprep.subr.mxu0 0.0
      %3682 = vmatpush1.msra.mxu0 0.0
      %3683 = vmatprep.subr.mxu0 0.0
      %3684 = vmatpush1.msra.mxu0 0.0
      %3685 = vmatprep.subr.mxu0 0.0
      %3686 = vmatpush1.msra.mxu0 0.0
      %3687 = vmatprep.subr.mxu0 0.0
      %3688 = vmatpush1.msra.mxu0 0.0
      %3689 = vmatprep.subr.mxu0 0.0
      %3690 = vmatpush1.msra.mxu0 0.0
      %3691 = vmatprep.subr.mxu0 0.0
      %3692 = vmatpush1.msra.mxu0 0.0
      %3693 = vmatprep.subr.mxu0 0.0
      %3694 = vmatpush1.msra.mxu0 0.0
      %3695 = vmatprep.subr.mxu0 0.0
      %3696 = vmatpush1.msra.mxu0 0.0
      %3697 = vmatprep.subr.mxu0 0.0
      %3698 = vmatpush1.msra.mxu0 0.0
      %3699 = vmatprep.subr.mxu0 0.0
      %3700 = vmatpush1.msra.mxu0 0.0
      %3701 = vmatprep.subr.mxu0 0.0
      %3702 = vmatpush1.msra.mxu0 0.0
      %3703 = vmatprep.subr.mxu0 0.0
      %3704 = vmatpush1.msra.mxu0 0.0
      %3705 = vmatprep.subr.mxu0 0.0
      %3706 = vmatpush1.msra.mxu0 0.0
      %3707 = vmatprep.subr.mxu0 0.0
      %3708 = vmatpush1.msra.mxu0 0.0
      %3709 = vmatprep.subr.mxu0 0.0
      %3710 = vmatpush1.msra.mxu0 0.0
      %3711 = vmatprep.subr.mxu0 0.0
      %3712 = vmatpush1.msra.mxu0 0.0
      %3713 = vmatprep.subr.mxu0 0.0
      %3714 = vmatpush1.msra.mxu0 0.0
      %3715 = vmatprep.subr.mxu0 0.0
      %3716 = vmatpush1.msra.mxu0 0.0
      %3717 = vmatprep.subr.mxu0 0.0
      %3718 = vmatpush1.msra.mxu0 0.0
      %3719 = vmatprep.subr.mxu0 0.0
      %3720 = vmatpush1.msra.mxu0 0.0
      %3721 = vmatprep.subr.mxu0 0.0
      %3722 = vmatpush1.msra.mxu0 0.0
      %3723 = vmatprep.subr.mxu0 0.0
      %3724 = vmatpush1.msra.mxu0 0.0
      %3725 = vmatprep.subr.mxu0 0.0
      %3726 = vmatpush1.msra.mxu0 0.0
      %3727 = vmatprep.subr.mxu0 0.0
      %3728 = vmatpush1.msra.mxu0 0.0
      %3729 = vmatprep.subr.mxu0 0.0
      %3730 = vmatpush1.msra.mxu0 0.0
      %3731 = vmatprep.subr.mxu0 0.0
      %3732 = vmatpush1.msra.mxu0 0.0
      %3733 = vmatprep.subr.mxu0 0.0
      %3734 = vmatpush1.msra.mxu0 0.0
      %3735 = vmatprep.mubr.f32.mxu0 0.0
      %3736 = vmatmul.mubr.f32.gmra.mrb[0].mxu0 %v3598
      %v3737 = vpop.f32.mrb[0].mxu0
      %v3738 = vadd.f32 0.0, %v3737
      %v3739 = vpop.f32.mrb[0].mxu0
      %v3740 = vadd.f32 0.0, %v3739
      %3741 = vdwg.mxu0
      %3742 = vmatprep.subr.mxu0 %v3570
      %3743 = vmatpush1.msra.mxu0 %v3569
      %3744 = vmatprep.subr.mxu0 %v3578
      %3745 = vmatpush1.msra.mxu0 %v3577
      %3746 = vmatprep.subr.mxu0 %v3586
      %3747 = vmatpush1.msra.mxu0 %v3585
      %3748 = vmatprep.subr.mxu0 %v3594
      %3749 = vmatpush1.msra.mxu0 %v3593
      %3750 = vmatprep.subr.mxu0 0.0
      %3751 = vmatpush1.msra.mxu0 0.0
      %3752 = vmatprep.subr.mxu0 0.0
      %3753 = vmatpush1.msra.mxu0 0.0
      %3754 = vmatprep.subr.mxu0 0.0
      %3755 = vmatpush1.msra.mxu0 0.0
      %3756 = vmatprep.subr.mxu0 0.0
      %3757 = vmatpush1.msra.mxu0 0.0
      %3758 = vmatprep.subr.mxu0 0.0
      %3759 = vmatpush1.msra.mxu0 0.0
      %3760 = vmatprep.subr.mxu0 0.0
      %3761 = vmatpush1.msra.mxu0 0.0
      %3762 = vmatprep.subr.mxu0 0.0
      %3763 = vmatpush1.msra.mxu0 0.0
      %3764 = vmatprep.subr.mxu0 0.0
      %3765 = vmatpush1.msra.mxu0 0.0
      %3766 = vmatprep.subr.mxu0 0.0
      %3767 = vmatpush1.msra.mxu0 0.0
      %3768 = vmatprep.subr.mxu0 0.0
      %3769 = vmatpush1.msra.mxu0 0.0
      %3770 = vmatprep.subr.mxu0 0.0
      %3771 = vmatpush1.msra.mxu0 0.0
      %3772 = vmatprep.subr.mxu0 0.0
      %3773 = vmatpush1.msra.mxu0 0.0
      %3774 = vmatprep.subr.mxu0 0.0
      %3775 = vmatpush1.msra.mxu0 0.0
      %3776 = vmatprep.subr.mxu0 0.0
      %3777 = vmatpush1.msra.mxu0 0.0
      %3778 = vmatprep.subr.mxu0 0.0
      %3779 = vmatpush1.msra.mxu0 0.0
      %3780 = vmatprep.subr.mxu0 0.0
      %3781 = vmatpush1.msra.mxu0 0.0
      %3782 = vmatprep.subr.mxu0 0.0
      %3783 = vmatpush1.msra.mxu0 0.0
      %3784 = vmatprep.subr.mxu0 0.0
      %3785 = vmatpush1.msra.mxu0 0.0
      %3786 = vmatprep.subr.mxu0 0.0
      %3787 = vmatpush1.msra.mxu0 0.0
      %3788 = vmatprep.subr.mxu0 0.0
      %3789 = vmatpush1.msra.mxu0 0.0
      %3790 = vmatprep.subr.mxu0 0.0
      %3791 = vmatpush1.msra.mxu0 0.0
      %3792 = vmatprep.subr.mxu0 0.0
      %3793 = vmatpush1.msra.mxu0 0.0
      %3794 = vmatprep.subr.mxu0 0.0
      %3795 = vmatpush1.msra.mxu0 0.0
      %3796 = vmatprep.subr.mxu0 0.0
      %3797 = vmatpush1.msra.mxu0 0.0
      %3798 = vmatprep.subr.mxu0 0.0
      %3799 = vmatpush1.msra.mxu0 0.0
      %3800 = vmatprep.subr.mxu0 0.0
      %3801 = vmatpush1.msra.mxu0 0.0
      %3802 = vmatprep.subr.mxu0 0.0
      %3803 = vmatpush1.msra.mxu0 0.0
      %3804 = vmatprep.subr.mxu0 0.0
      %3805 = vmatpush1.msra.mxu0 0.0
      %3806 = vmatprep.mubr.f32.mxu0 0.0
      %3807 = vmatmul.mubr.f32.gmra.mrb[0].mxu0 %v3598
      %v3808 = vpop.f32.mrb[0].mxu0
      %v3809 = vadd.f32 0.0, %v3808
      %v3810 = vpop.f32.mrb[0].mxu0
      %v3811 = vadd.f32 0.0, %v3810
      %3812 = vdwg.mxu0
      %3813 = vmatprep.subr.mxu0 %v3572
      %3814 = vmatpush1.msra.mxu0 %v3571
      %3815 = vmatprep.subr.mxu0 %v3580
      %3816 = vmatpush1.msra.mxu0 %v3579
      %3817 = vmatprep.subr.mxu0 %v3588
      %3818 = vmatpush1.msra.mxu0 %v3587
      %3819 = vmatprep.subr.mxu0 %v3596
      %3820 = vmatpush1.msra.mxu0 %v3595
      %3821 = vmatprep.subr.mxu0 0.0
      %3822 = vmatpush1.msra.mxu0 0.0
      %3823 = vmatprep.subr.mxu0 0.0
      %3824 = vmatpush1.msra.mxu0 0.0
      %3825 = vmatprep.subr.mxu0 0.0
      %3826 = vmatpush1.msra.mxu0 0.0
      %3827 = vmatprep.subr.mxu0 0.0
      %3828 = vmatpush1.msra.mxu0 0.0
      %3829 = vmatprep.subr.mxu0 0.0
      %3830 = vmatpush1.msra.mxu0 0.0
      %3831 = vmatprep.subr.mxu0 0.0
      %3832 = vmatpush1.msra.mxu0 0.0
      %3833 = vmatprep.subr.mxu0 0.0
      %3834 = vmatpush1.msra.mxu0 0.0
      %3835 = vmatprep.subr.mxu0 0.0
      %3836 = vmatpush1.msra.mxu0 0.0
      %3837 = vmatprep.subr.mxu0 0.0
      %3838 = vmatpush1.msra.mxu0 0.0
      %3839 = vmatprep.subr.mxu0 0.0
      %3840 = vmatpush1.msra.mxu0 0.0
      %3841 = vmatprep.subr.mxu0 0.0
      %3842 = vmatpush1.msra.mxu0 0.0
      %3843 = vmatprep.subr.mxu0 0.0
      %3844 = vmatpush1.msra.mxu0 0.0
      %3845 = vmatprep.subr.mxu0 0.0
      %3846 = vmatpush1.msra.mxu0 0.0
      %3847 = vmatprep.subr.mxu0 0.0
      %3848 = vmatpush1.msra.mxu0 0.0
      %3849 = vmatprep.subr.mxu0 0.0
      %3850 = vmatpush1.msra.mxu0 0.0
      %3851 = vmatprep.subr.mxu0 0.0
      %3852 = vmatpush1.msra.mxu0 0.0
      %3853 = vmatprep.subr.mxu0 0.0
      %3854 = vmatpush1.msra.mxu0 0.0
      %3855 = vmatprep.subr.mxu0 0.0
      %3856 = vmatpush1.msra.mxu0 0.0
      %3857 = vmatprep.subr.mxu0 0.0
      %3858 = vmatpush1.msra.mxu0 0.0
      %3859 = vmatprep.subr.mxu0 0.0
      %3860 = vmatpush1.msra.mxu0 0.0
      %3861 = vmatprep.subr.mxu0 0.0
      %3862 = vmatpush1.msra.mxu0 0.0
      %3863 = vmatprep.subr.mxu0 0.0
      %3864 = vmatpush1.msra.mxu0 0.0
      %3865 = vmatprep.subr.mxu0 0.0
      %3866 = vmatpush1.msra.mxu0 0.0
      %3867 = vmatprep.subr.mxu0 0.0
      %3868 = vmatpush1.msra.mxu0 0.0
      %3869 = vmatprep.subr.mxu0 0.0
      %3870 = vmatpush1.msra.mxu0 0.0
      %3871 = vmatprep.subr.mxu0 0.0
      %3872 = vmatpush1.msra.mxu0 0.0
      %3873 = vmatprep.subr.mxu0 0.0
      %3874 = vmatpush1.msra.mxu0 0.0
      %3875 = vmatprep.subr.mxu0 0.0
      %3876 = vmatpush1.msra.mxu0 0.0
      %3877 = vmatprep.mubr.f32.mxu0 0.0
      %3878 = vmatmul.mubr.f32.gmra.mrb[0].mxu0 %v3598
      %v3879 = vpop.f32.mrb[0].mxu0
      %v3880 = vadd.f32 0.0, %v3879
      %v3881 = vpop.f32.mrb[0].mxu0
      %v3882 = vadd.f32 0.0, %v3881
      %3883 = vdwg.mxu0
      %v3884 = vadd.f32 %v3461, %v3667
      %v3885 = vadd.f32 %v3462, %v3669
      %v3886 = vadd.f32 %v3463, %v3738
      %v3887 = vadd.f32 %v3464, %v3740
      %v3888 = vadd.f32 %v3465, %v3809
      %v3889 = vadd.f32 %v3466, %v3811
      %v3890 = vadd.f32 %v3467, %v3880
      %v3891 = vadd.f32 %v3468, %v3882
      %v3892 = vrot.slane %v2191, 4
      %s3893 = vtos %v3892
      %v3894 = vstv %s3893
      %v3896 = vmul.f32 %v1516, %v3894
      %3897 = vrot.lane.b32.xlu0 %v3892, 127
      %v3898 = vpop.permute.xlu0 %3897
      %s3899 = vtos %v3898
      %v3900 = vstv %s3899
      %v3902 = vmul.f32 %v1851, %v3900
      %v3903 = vadd.f32 %v3896, %v3902
      %3904 = vrot.lane.b32.xlu0 %v3892, 126
      %v3905 = vpop.permute.xlu0 %3904
      %s3906 = vtos %v3905
      %v3907 = vstv %s3906
      %v3909 = vmul.f32 %v2186, %v3907
      %v3910 = vadd.f32 %v3903, %v3909
      %v3911 = vlaneseq
      %v3912 = vshrl.u32 %v3911, 7
      %v3913 = vsub.s32 4, %v3912
      %v3914 = vrot.slane %v2192, %v3913
      %v3915 = vadd.f32 %v3910, %v3914
      %v3916 = vmax.f32 %v3915, 0.0
      %3917 = vmatprep.subr.mxu0 0.0
      %3918 = vmatpush1.msra.mxu0 %v2193
      %3919 = vmatprep.subr.mxu0 0.0
      %3920 = vmatpush1.msra.mxu0 %v2194
      %3921 = vmatprep.subr.mxu0 0.0
      %3922 = vmatpush1.msra.mxu0 %v2195
      %3923 = vmatprep.subr.mxu0 0.0
      %3924 = vmatpush1.msra.mxu0 %v2196
      %3925 = vmatprep.subr.mxu0 0.0
      %3926 = vmatpush1.msra.mxu0 %v2197
      %3927 = vmatprep.subr.mxu0 0.0
      %3928 = vmatpush1.msra.mxu0 %v2198
      %3929 = vmatprep.subr.mxu0 0.0
      %3930 = vmatpush1.msra.mxu0 %v2199
      %3931 = vmatprep.subr.mxu0 0.0
      %3932 = vmatpush1.msra.mxu0 %v2200
      %3933 = vmatprep.subr.mxu0 0.0
      %3934 = vmatpush1.msra.mxu0 %v2201
      %3935 = vmatprep.subr.mxu0 0.0
      %3936 = vmatpush1.msra.mxu0 %v2202
      %3937 = vmatprep.subr.mxu0 0.0
      %3938 = vmatpush1.msra.mxu0 %v2203
      %3939 = vmatprep.subr.mxu0 0.0
      %3940 = vmatpush1.msra.mxu0 %v2204
      %3941 = vmatprep.subr.mxu0 0.0
      %3942 = vmatpush1.msra.mxu0 %v2205
      %3943 = vmatprep.subr.mxu0 0.0
      %3944 = vmatpush1.msra.mxu0 %v2206
      %3945 = vmatprep.subr.mxu0 0.0
      %3946 = vmatpush1.msra.mxu0 %v2207
      %3947 = vmatprep.subr.mxu0 0.0
      %3948 = vmatpush1.msra.mxu0 %v2208
      %3949 = vmatprep.subr.mxu0 0.0
      %3950 = vmatpush1.msra.mxu0 0.0
      %3951 = vmatprep.subr.mxu0 0.0
      %3952 = vmatpush1.msra.mxu0 0.0
      %3953 = vmatprep.subr.mxu0 0.0
      %3954 = vmatpush1.msra.mxu0 0.0
      %3955 = vmatprep.subr.mxu0 0.0
      %3956 = vmatpush1.msra.mxu0 0.0
      %3957 = vmatprep.subr.mxu0 0.0
      %3958 = vmatpush1.msra.mxu0 0.0
      %3959 = vmatprep.subr.mxu0 0.0
      %3960 = vmatpush1.msra.mxu0 0.0
      %3961 = vmatprep.subr.mxu0 0.0
      %3962 = vmatpush1.msra.mxu0 0.0
      %3963 = vmatprep.subr.mxu0 0.0
      %3964 = vmatpush1.msra.mxu0 0.0
      %3965 = vmatprep.subr.mxu0 0.0
      %3966 = vmatpush1.msra.mxu0 0.0
      %3967 = vmatprep.subr.mxu0 0.0
      %3968 = vmatpush1.msra.mxu0 0.0
      %3969 = vmatprep.subr.mxu0 0.0
      %3970 = vmatpush1.msra.mxu0 0.0
      %3971 = vmatprep.subr.mxu0 0.0
      %3972 = vmatpush1.msra.mxu0 0.0
      %3973 = vmatprep.subr.mxu0 0.0
      %3974 = vmatpush1.msra.mxu0 0.0
      %3975 = vmatprep.subr.mxu0 0.0
      %3976 = vmatpush1.msra.mxu0 0.0
      %3977 = vmatprep.subr.mxu0 0.0
      %3978 = vmatpush1.msra.mxu0 0.0
      %3979 = vmatprep.subr.mxu0 0.0
      %3980 = vmatpush1.msra.mxu0 0.0
      %3981 = vmatprep.mubr.f32.mxu0 0.0
      %3982 = vmatmul.mubr.f32.gmra.mrb[0].mxu0 %v3916
      %v3983 = vpop.f32.mrb[0].mxu0
      %v3984 = vadd.f32 %v2239, %v3983
      %v3985 = vpop.f32.mrb[0].mxu0
      %3986 = vdwg.mxu0
      %v3987 = vmax.f32 %v3984, 0.0
      %v3988 = vld [vmem:[%s8 + $0x400] sm:$0xff]
      %v3989 = vld [vmem:[%s8 + $0x408] sm:$0xff]
      %v3990 = vld [vmem:[%s8 + $0x410] sm:$0xff]
      %v3991 = vld [vmem:[%s8 + $0x418] sm:$0xff]
      %v3992 = vld [vmem:[%s8 + $0x420] sm:$0xff]
      %v3993 = vld [vmem:[%s8 + $0x428] sm:$0xff]
      %v3994 = vld [vmem:[%s8 + $0x430] sm:$0xff]
      %v3995 = vld [vmem:[%s8 + $0x438] sm:$0xff]
      %v3996 = vld [vmem:[%s8 + $0x440] sm:$0xff]
      %v3997 = vld [vmem:[%s8 + $0x448] sm:$0xff]
      %v3998 = vld [vmem:[%s8 + $0x450] sm:$0xff]
      %v3999 = vld [vmem:[%s8 + $0x458] sm:$0xff]
      %v4000 = vld [vmem:[%s8 + $0x460] sm:$0xff]
      %v4001 = vld [vmem:[%s8 + $0x468] sm:$0xff]
      %v4002 = vld [vmem:[%s8 + $0x470] sm:$0xff]
      %v4003 = vld [vmem:[%s8 + $0x478] sm:$0xff]
      %v4004 = vld [vmem:[%s8 + $0x480] sm:$0xff]
      %v4005 = vld [vmem:[%s8 + $0x488] sm:$0xff]
      %v4006 = vld [vmem:[%s8 + $0x490] sm:$0xff]
      %v4007 = vld [vmem:[%s8 + $0x498] sm:$0xff]
      %v4008 = vld [vmem:[%s8 + $0x4a0] sm:$0xff]
      %v4009 = vld [vmem:[%s8 + $0x4a8] sm:$0xff]
      %v4010 = vld [vmem:[%s8 + $0x4b0] sm:$0xff]
      %v4011 = vld [vmem:[%s8 + $0x4b8] sm:$0xff]
      %v4012 = vld [vmem:[%s8 + $0x4c0] sm:$0xff]
      %v4013 = vld [vmem:[%s8 + $0x4c8] sm:$0xff]
      %v4014 = vld [vmem:[%s8 + $0x4d0] sm:$0xff]
      %v4015 = vld [vmem:[%s8 + $0x4d8] sm:$0xff]
      %v4016 = vld [vmem:[%s8 + $0x4e0] sm:$0xff]
      %v4017 = vld [vmem:[%s8 + $0x4e8] sm:$0xff]
      %v4018 = vld [vmem:[%s8 + $0x4f0] sm:$0xff]
      %v4019 = vld [vmem:[%s8 + $0x4f8] sm:$0xff]
      %v4021 = vsel %vm1237, %v3987, 0
      %4023 = vmatprep.subr.mxu0 %v3989
      %4024 = vmatpush1.msra.mxu0 %v3988
      %4025 = vmatprep.subr.mxu0 %v3997
      %4026 = vmatpush1.msra.mxu0 %v3996
      %4027 = vmatprep.subr.mxu0 %v4005
      %4028 = vmatpush1.msra.mxu0 %v4004
      %4029 = vmatprep.subr.mxu0 %v4013
      %4030 = vmatpush1.msra.mxu0 %v4012
      %4031 = vmatprep.subr.mxu0 0.0
      %4032 = vmatpush1.msra.mxu0 0.0
      %4033 = vmatprep.subr.mxu0 0.0
      %4034 = vmatpush1.msra.mxu0 0.0
      %4035 = vmatprep.subr.mxu0 0.0
      %4036 = vmatpush1.msra.mxu0 0.0
      %4037 = vmatprep.subr.mxu0 0.0
      %4038 = vmatpush1.msra.mxu0 0.0
      %4039 = vmatprep.subr.mxu0 0.0
      %4040 = vmatpush1.msra.mxu0 0.0
      %4041 = vmatprep.subr.mxu0 0.0
      %4042 = vmatpush1.msra.mxu0 0.0
      %4043 = vmatprep.subr.mxu0 0.0
      %4044 = vmatpush1.msra.mxu0 0.0
      %4045 = vmatprep.subr.mxu0 0.0
      %4046 = vmatpush1.msra.mxu0 0.0
      %4047 = vmatprep.subr.mxu0 0.0
      %4048 = vmatpush1.msra.mxu0 0.0
      %4049 = vmatprep.subr.mxu0 0.0
      %4050 = vmatpush1.msra.mxu0 0.0
      %4051 = vmatprep.subr.mxu0 0.0
      %4052 = vmatpush1.msra.mxu0 0.0
      %4053 = vmatprep.subr.mxu0 0.0
      %4054 = vmatpush1.msra.mxu0 0.0
      %4055 = vmatprep.subr.mxu0 0.0
      %4056 = vmatpush1.msra.mxu0 0.0
      %4057 = vmatprep.subr.mxu0 0.0
      %4058 = vmatpush1.msra.mxu0 0.0
      %4059 = vmatprep.subr.mxu0 0.0
      %4060 = vmatpush1.msra.mxu0 0.0
      %4061 = vmatprep.subr.mxu0 0.0
      %4062 = vmatpush1.msra.mxu0 0.0
      %4063 = vmatprep.subr.mxu0 0.0
      %4064 = vmatpush1.msra.mxu0 0.0
      %4065 = vmatprep.subr.mxu0 0.0
      %4066 = vmatpush1.msra.mxu0 0.0
      %4067 = vmatprep.subr.mxu0 0.0
      %4068 = vmatpush1.msra.mxu0 0.0
      %4069 = vmatprep.subr.mxu0 0.0
      %4070 = vmatpush1.msra.mxu0 0.0
      %4071 = vmatprep.subr.mxu0 0.0
      %4072 = vmatpush1.msra.mxu0 0.0
      %4073 = vmatprep.subr.mxu0 0.0
      %4074 = vmatpush1.msra.mxu0 0.0
      %4075 = vmatprep.subr.mxu0 0.0
      %4076 = vmatpush1.msra.mxu0 0.0
      %4077 = vmatprep.subr.mxu0 0.0
      %4078 = vmatpush1.msra.mxu0 0.0
      %4079 = vmatprep.subr.mxu0 0.0
      %4080 = vmatpush1.msra.mxu0 0.0
      %4081 = vmatprep.subr.mxu0 0.0
      %4082 = vmatpush1.msra.mxu0 0.0
      %4083 = vmatprep.subr.mxu0 0.0
      %4084 = vmatpush1.msra.mxu0 0.0
      %4085 = vmatprep.subr.mxu0 0.0
      %4086 = vmatpush1.msra.mxu0 0.0
      %4087 = vmatprep.mubr.f32.mxu0 0.0
      %4088 = vmatmul.mubr.f32.gmra.mrb[0].mxu0 %v4021
      %v4089 = vpop.f32.mrb[0].mxu0
      %v4090 = vadd.f32 0.0, %v4089
      %v4091 = vpop.f32.mrb[0].mxu0
      %v4092 = vadd.f32 0.0, %v4091
      %4093 = vdwg.mxu0
      %4094 = vmatprep.subr.mxu0 %v3991
      %4095 = vmatpush1.msra.mxu0 %v3990
      %4096 = vmatprep.subr.mxu0 %v3999
      %4097 = vmatpush1.msra.mxu0 %v3998
      %4098 = vmatprep.subr.mxu0 %v4007
      %4099 = vmatpush1.msra.mxu0 %v4006
      %4100 = vmatprep.subr.mxu0 %v4015
      %4101 = vmatpush1.msra.mxu0 %v4014
      %4102 = vmatprep.subr.mxu0 0.0
      %4103 = vmatpush1.msra.mxu0 0.0
      %4104 = vmatprep.subr.mxu0 0.0
      %4105 = vmatpush1.msra.mxu0 0.0
      %4106 = vmatprep.subr.mxu0 0.0
      %4107 = vmatpush1.msra.mxu0 0.0
      %4108 = vmatprep.subr.mxu0 0.0
      %4109 = vmatpush1.msra.mxu0 0.0
      %4110 = vmatprep.subr.mxu0 0.0
      %4111 = vmatpush1.msra.mxu0 0.0
      %4112 = vmatprep.subr.mxu0 0.0
      %4113 = vmatpush1.msra.mxu0 0.0
      %4114 = vmatprep.subr.mxu0 0.0
      %4115 = vmatpush1.msra.mxu0 0.0
      %4116 = vmatprep.subr.mxu0 0.0
      %4117 = vmatpush1.msra.mxu0 0.0
      %4118 = vmatprep.subr.mxu0 0.0
      %4119 = vmatpush1.msra.mxu0 0.0
      %4120 = vmatprep.subr.mxu0 0.0
      %4121 = vmatpush1.msra.mxu0 0.0
      %4122 = vmatprep.subr.mxu0 0.0
      %4123 = vmatpush1.msra.mxu0 0.0
      %4124 = vmatprep.subr.mxu0 0.0
      %4125 = vmatpush1.msra.mxu0 0.0
      %4126 = vmatprep.subr.mxu0 0.0
      %4127 = vmatpush1.msra.mxu0 0.0
      %4128 = vmatprep.subr.mxu0 0.0
      %4129 = vmatpush1.msra.mxu0 0.0
      %4130 = vmatprep.subr.mxu0 0.0
      %4131 = vmatpush1.msra.mxu0 0.0
      %4132 = vmatprep.subr.mxu0 0.0
      %4133 = vmatpush1.msra.mxu0 0.0
      %4134 = vmatprep.subr.mxu0 0.0
      %4135 = vmatpush1.msra.mxu0 0.0
      %4136 = vmatprep.subr.mxu0 0.0
      %4137 = vmatpush1.msra.mxu0 0.0
      %4138 = vmatprep.subr.mxu0 0.0
      %4139 = vmatpush1.msra.mxu0 0.0
      %4140 = vmatprep.subr.mxu0 0.0
      %4141 = vmatpush1.msra.mxu0 0.0
      %4142 = vmatprep.subr.mxu0 0.0
      %4143 = vmatpush1.msra.mxu0 0.0
      %4144 = vmatprep.subr.mxu0 0.0
      %4145 = vmatpush1.msra.mxu0 0.0
      %4146 = vmatprep.subr.mxu0 0.0
      %4147 = vmatpush1.msra.mxu0 0.0
      %4148 = vmatprep.subr.mxu0 0.0
      %4149 = vmatpush1.msra.mxu0 0.0
      %4150 = vmatprep.subr.mxu0 0.0
      %4151 = vmatpush1.msra.mxu0 0.0
      %4152 = vmatprep.subr.mxu0 0.0
      %4153 = vmatpush1.msra.mxu0 0.0
      %4154 = vmatprep.subr.mxu0 0.0
      %4155 = vmatpush1.msra.mxu0 0.0
      %4156 = vmatprep.subr.mxu0 0.0
      %4157 = vmatpush1.msra.mxu0 0.0
      %4158 = vmatprep.mubr.f32.mxu0 0.0
      %4159 = vmatmul.mubr.f32.gmra.mrb[0].mxu0 %v4021
      %v4160 = vpop.f32.mrb[0].mxu0
      %v4161 = vadd.f32 0.0, %v4160
      %v4162 = vpop.f32.mrb[0].mxu0
      %v4163 = vadd.f32 0.0, %v4162
      %4164 = vdwg.mxu0
      %4165 = vmatprep.subr.mxu0 %v3993
      %4166 = vmatpush1.msra.mxu0 %v3992
      %4167 = vmatprep.subr.mxu0 %v4001
      %4168 = vmatpush1.msra.mxu0 %v4000
      %4169 = vmatprep.subr.mxu0 %v4009
      %4170 = vmatpush1.msra.mxu0 %v4008
      %4171 = vmatprep.subr.mxu0 %v4017
      %4172 = vmatpush1.msra.mxu0 %v4016
      %4173 = vmatprep.subr.mxu0 0.0
      %4174 = vmatpush1.msra.mxu0 0.0
      %4175 = vmatprep.subr.mxu0 0.0
      %4176 = vmatpush1.msra.mxu0 0.0
      %4177 = vmatprep.subr.mxu0 0.0
      %4178 = vmatpush1.msra.mxu0 0.0
      %4179 = vmatprep.subr.mxu0 0.0
      %4180 = vmatpush1.msra.mxu0 0.0
      %4181 = vmatprep.subr.mxu0 0.0
      %4182 = vmatpush1.msra.mxu0 0.0
      %4183 = vmatprep.subr.mxu0 0.0
      %4184 = vmatpush1.msra.mxu0 0.0
      %4185 = vmatprep.subr.mxu0 0.0
      %4186 = vmatpush1.msra.mxu0 0.0
      %4187 = vmatprep.subr.mxu0 0.0
      %4188 = vmatpush1.msra.mxu0 0.0
      %4189 = vmatprep.subr.mxu0 0.0
      %4190 = vmatpush1.msra.mxu0 0.0
      %4191 = vmatprep.subr.mxu0 0.0
      %4192 = vmatpush1.msra.mxu0 0.0
      %4193 = vmatprep.subr.mxu0 0.0
      %4194 = vmatpush1.msra.mxu0 0.0
      %4195 = vmatprep.subr.mxu0 0.0
      %4196 = vmatpush1.msra.mxu0 0.0
      %4197 = vmatprep.subr.mxu0 0.0
      %4198 = vmatpush1.msra.mxu0 0.0
      %4199 = vmatprep.subr.mxu0 0.0
      %4200 = vmatpush1.msra.mxu0 0.0
      %4201 = vmatprep.subr.mxu0 0.0
      %4202 = vmatpush1.msra.mxu0 0.0
      %4203 = vmatprep.subr.mxu0 0.0
      %4204 = vmatpush1.msra.mxu0 0.0
      %4205 = vmatprep.subr.mxu0 0.0
      %4206 = vmatpush1.msra.mxu0 0.0
      %4207 = vmatprep.subr.mxu0 0.0
      %4208 = vmatpush1.msra.mxu0 0.0
      %4209 = vmatprep.subr.mxu0 0.0
      %4210 = vmatpush1.msra.mxu0 0.0
      %4211 = vmatprep.subr.mxu0 0.0
      %4212 = vmatpush1.msra.mxu0 0.0
      %4213 = vmatprep.subr.mxu0 0.0
      %4214 = vmatpush1.msra.mxu0 0.0
      %4215 = vmatprep.subr.mxu0 0.0
      %4216 = vmatpush1.msra.mxu0 0.0
      %4217 = vmatprep.subr.mxu0 0.0
      %4218 = vmatpush1.msra.mxu0 0.0
      %4219 = vmatprep.subr.mxu0 0.0
      %4220 = vmatpush1.msra.mxu0 0.0
      %4221 = vmatprep.subr.mxu0 0.0
      %4222 = vmatpush1.msra.mxu0 0.0
      %4223 = vmatprep.subr.mxu0 0.0
      %4224 = vmatpush1.msra.mxu0 0.0
      %4225 = vmatprep.subr.mxu0 0.0
      %4226 = vmatpush1.msra.mxu0 0.0
      %4227 = vmatprep.subr.mxu0 0.0
      %4228 = vmatpush1.msra.mxu0 0.0
      %4229 = vmatprep.mubr.f32.mxu0 0.0
      %4230 = vmatmul.mubr.f32.gmra.mrb[0].mxu0 %v4021
      %v4231 = vpop.f32.mrb[0].mxu0
      %v4232 = vadd.f32 0.0, %v4231
      %v4233 = vpop.f32.mrb[0].mxu0
      %v4234 = vadd.f32 0.0, %v4233
      %4235 = vdwg.mxu0
      %4236 = vmatprep.subr.mxu0 %v3995
      %4237 = vmatpush1.msra.mxu0 %v3994
      %4238 = vmatprep.subr.mxu0 %v4003
      %4239 = vmatpush1.msra.mxu0 %v4002
      %4240 = vmatprep.subr.mxu0 %v4011
      %4241 = vmatpush1.msra.mxu0 %v4010
      %4242 = vmatprep.subr.mxu0 %v4019
      %4243 = vmatpush1.msra.mxu0 %v4018
      %4244 = vmatprep.subr.mxu0 0.0
      %4245 = vmatpush1.msra.mxu0 0.0
      %4246 = vmatprep.subr.mxu0 0.0
      %4247 = vmatpush1.msra.mxu0 0.0
      %4248 = vmatprep.subr.mxu0 0.0
      %4249 = vmatpush1.msra.mxu0 0.0
      %4250 = vmatprep.subr.mxu0 0.0
      %4251 = vmatpush1.msra.mxu0 0.0
      %4252 = vmatprep.subr.mxu0 0.0
      %4253 = vmatpush1.msra.mxu0 0.0
      %4254 = vmatprep.subr.mxu0 0.0
      %4255 = vmatpush1.msra.mxu0 0.0
      %4256 = vmatprep.subr.mxu0 0.0
      %4257 = vmatpush1.msra.mxu0 0.0
      %4258 = vmatprep.subr.mxu0 0.0
      %4259 = vmatpush1.msra.mxu0 0.0
      %4260 = vmatprep.subr.mxu0 0.0
      %4261 = vmatpush1.msra.mxu0 0.0
      %4262 = vmatprep.subr.mxu0 0.0
      %4263 = vmatpush1.msra.mxu0 0.0
      %4264 = vmatprep.subr.mxu0 0.0
      %4265 = vmatpush1.msra.mxu0 0.0
      %4266 = vmatprep.subr.mxu0 0.0
      %4267 = vmatpush1.msra.mxu0 0.0
      %4268 = vmatprep.subr.mxu0 0.0
      %4269 = vmatpush1.msra.mxu0 0.0
      %4270 = vmatprep.subr.mxu0 0.0
      %4271 = vmatpush1.msra.mxu0 0.0
      %4272 = vmatprep.subr.mxu0 0.0
      %4273 = vmatpush1.msra.mxu0 0.0
      %4274 = vmatprep.subr.mxu0 0.0
      %4275 = vmatpush1.msra.mxu0 0.0
      %4276 = vmatprep.subr.mxu0 0.0
      %4277 = vmatpush1.msra.mxu0 0.0
      %4278 = vmatprep.subr.mxu0 0.0
      %4279 = vmatpush1.msra.mxu0 0.0
      %4280 = vmatprep.subr.mxu0 0.0
      %4281 = vmatpush1.msra.mxu0 0.0
      %4282 = vmatprep.subr.mxu0 0.0
      %4283 = vmatpush1.msra.mxu0 0.0
      %4284 = vmatprep.subr.mxu0 0.0
      %4285 = vmatpush1.msra.mxu0 0.0
      %4286 = vmatprep.subr.mxu0 0.0
      %4287 = vmatpush1.msra.mxu0 0.0
      %4288 = vmatprep.subr.mxu0 0.0
      %4289 = vmatpush1.msra.mxu0 0.0
      %4290 = vmatprep.subr.mxu0 0.0
      %4291 = vmatpush1.msra.mxu0 0.0
      %4292 = vmatprep.subr.mxu0 0.0
      %4293 = vmatpush1.msra.mxu0 0.0
      %4294 = vmatprep.subr.mxu0 0.0
      %4295 = vmatpush1.msra.mxu0 0.0
      %4296 = vmatprep.subr.mxu0 0.0
      %4297 = vmatpush1.msra.mxu0 0.0
      %4298 = vmatprep.subr.mxu0 0.0
      %4299 = vmatpush1.msra.mxu0 0.0
      %4300 = vmatprep.mubr.f32.mxu0 0.0
      %4301 = vmatmul.mubr.f32.gmra.mrb[0].mxu0 %v4021
      %v4302 = vpop.f32.mrb[0].mxu0
      %v4303 = vadd.f32 0.0, %v4302
      %v4304 = vpop.f32.mrb[0].mxu0
      %v4305 = vadd.f32 0.0, %v4304
      %4306 = vdwg.mxu0
      %v4307 = vadd.f32 %v3884, %v4090
      %v4308 = vadd.f32 %v3885, %v4092
      %v4309 = vadd.f32 %v3886, %v4161
      %v4310 = vadd.f32 %v3887, %v4163
      %v4311 = vadd.f32 %v3888, %v4232
      %v4312 = vadd.f32 %v3889, %v4234
      %v4313 = vadd.f32 %v3890, %v4303
      %v4314 = vadd.f32 %v3891, %v4305
      %v4315 = vrot.slane %v2191, 5
      %s4316 = vtos %v4315
      %v4317 = vstv %s4316
      %v4319 = vmul.f32 %v1516, %v4317
      %4320 = vrot.lane.b32.xlu0 %v4315, 127
      %v4321 = vpop.permute.xlu0 %4320
      %s4322 = vtos %v4321
      %v4323 = vstv %s4322
      %v4325 = vmul.f32 %v1851, %v4323
      %v4326 = vadd.f32 %v4319, %v4325
      %4327 = vrot.lane.b32.xlu0 %v4315, 126
      %v4328 = vpop.permute.xlu0 %4327
      %s4329 = vtos %v4328
      %v4330 = vstv %s4329
      %v4332 = vmul.f32 %v2186, %v4330
      %v4333 = vadd.f32 %v4326, %v4332
      %v4334 = vlaneseq
      %v4335 = vshrl.u32 %v4334, 7
      %v4336 = vsub.s32 5, %v4335
      %v4337 = vrot.slane %v2192, %v4336
      %v4338 = vadd.f32 %v4333, %v4337
      %v4339 = vmax.f32 %v4338, 0.0
      %4340 = vmatprep.subr.mxu0 0.0
      %4341 = vmatpush1.msra.mxu0 %v2193
      %4342 = vmatprep.subr.mxu0 0.0
      %4343 = vmatpush1.msra.mxu0 %v2194
      %4344 = vmatprep.subr.mxu0 0.0
      %4345 = vmatpush1.msra.mxu0 %v2195
      %4346 = vmatprep.subr.mxu0 0.0
      %4347 = vmatpush1.msra.mxu0 %v2196
      %4348 = vmatprep.subr.mxu0 0.0
      %4349 = vmatpush1.msra.mxu0 %v2197
      %4350 = vmatprep.subr.mxu0 0.0
      %4351 = vmatpush1.msra.mxu0 %v2198
      %4352 = vmatprep.subr.mxu0 0.0
      %4353 = vmatpush1.msra.mxu0 %v2199
      %4354 = vmatprep.subr.mxu0 0.0
      %4355 = vmatpush1.msra.mxu0 %v2200
      %4356 = vmatprep.subr.mxu0 0.0
      %4357 = vmatpush1.msra.mxu0 %v2201
      %4358 = vmatprep.subr.mxu0 0.0
      %4359 = vmatpush1.msra.mxu0 %v2202
      %4360 = vmatprep.subr.mxu0 0.0
      %4361 = vmatpush1.msra.mxu0 %v2203
      %4362 = vmatprep.subr.mxu0 0.0
      %4363 = vmatpush1.msra.mxu0 %v2204
      %4364 = vmatprep.subr.mxu0 0.0
      %4365 = vmatpush1.msra.mxu0 %v2205
      %4366 = vmatprep.subr.mxu0 0.0
      %4367 = vmatpush1.msra.mxu0 %v2206
      %4368 = vmatprep.subr.mxu0 0.0
      %4369 = vmatpush1.msra.mxu0 %v2207
      %4370 = vmatprep.subr.mxu0 0.0
      %4371 = vmatpush1.msra.mxu0 %v2208
      %4372 = vmatprep.subr.mxu0 0.0
      %4373 = vmatpush1.msra.mxu0 0.0
      %4374 = vmatprep.subr.mxu0 0.0
      %4375 = vmatpush1.msra.mxu0 0.0
      %4376 = vmatprep.subr.mxu0 0.0
      %4377 = vmatpush1.msra.mxu0 0.0
      %4378 = vmatprep.subr.mxu0 0.0
      %4379 = vmatpush1.msra.mxu0 0.0
      %4380 = vmatprep.subr.mxu0 0.0
      %4381 = vmatpush1.msra.mxu0 0.0
      %4382 = vmatprep.subr.mxu0 0.0
      %4383 = vmatpush1.msra.mxu0 0.0
      %4384 = vmatprep.subr.mxu0 0.0
      %4385 = vmatpush1.msra.mxu0 0.0
      %4386 = vmatprep.subr.mxu0 0.0
      %4387 = vmatpush1.msra.mxu0 0.0
      %4388 = vmatprep.subr.mxu0 0.0
      %4389 = vmatpush1.msra.mxu0 0.0
      %4390 = vmatprep.subr.mxu0 0.0
      %4391 = vmatpush1.msra.mxu0 0.0
      %4392 = vmatprep.subr.mxu0 0.0
      %4393 = vmatpush1.msra.mxu0 0.0
      %4394 = vmatprep.subr.mxu0 0.0
      %4395 = vmatpush1.msra.mxu0 0.0
      %4396 = vmatprep.subr.mxu0 0.0
      %4397 = vmatpush1.msra.mxu0 0.0
      %4398 = vmatprep.subr.mxu0 0.0
      %4399 = vmatpush1.msra.mxu0 0.0
      %4400 = vmatprep.subr.mxu0 0.0
      %4401 = vmatpush1.msra.mxu0 0.0
      %4402 = vmatprep.subr.mxu0 0.0
      %4403 = vmatpush1.msra.mxu0 0.0
      %4404 = vmatprep.mubr.f32.mxu0 0.0
      %4405 = vmatmul.mubr.f32.gmra.mrb[0].mxu0 %v4339
      %v4406 = vpop.f32.mrb[0].mxu0
      %v4407 = vadd.f32 %v2239, %v4406
      %v4408 = vpop.f32.mrb[0].mxu0
      %4409 = vdwg.mxu0
      %v4410 = vmax.f32 %v4407, 0.0
      %v4411 = vld [vmem:[%s8 + $0x500] sm:$0xff]
      %v4412 = vld [vmem:[%s8 + $0x508] sm:$0xff]
      %v4413 = vld [vmem:[%s8 + $0x510] sm:$0xff]
      %v4414 = vld [vmem:[%s8 + $0x518] sm:$0xff]
      %v4415 = vld [vmem:[%s8 + $0x520] sm:$0xff]
      %v4416 = vld [vmem:[%s8 + $0x528] sm:$0xff]
      %v4417 = vld [vmem:[%s8 + $0x530] sm:$0xff]
      %v4418 = vld [vmem:[%s8 + $0x538] sm:$0xff]
      %v4419 = vld [vmem:[%s8 + $0x540] sm:$0xff]
      %v4420 = vld [vmem:[%s8 + $0x548] sm:$0xff]
      %v4421 = vld [vmem:[%s8 + $0x550] sm:$0xff]
      %v4422 = vld [vmem:[%s8 + $0x558] sm:$0xff]
      %v4423 = vld [vmem:[%s8 + $0x560] sm:$0xff]
      %v4424 = vld [vmem:[%s8 + $0x568] sm:$0xff]
      %v4425 = vld [vmem:[%s8 + $0x570] sm:$0xff]
      %v4426 = vld [vmem:[%s8 + $0x578] sm:$0xff]
      %v4427 = vld [vmem:[%s8 + $0x580] sm:$0xff]
      %v4428 = vld [vmem:[%s8 + $0x588] sm:$0xff]
      %v4429 = vld [vmem:[%s8 + $0x590] sm:$0xff]
      %v4430 = vld [vmem:[%s8 + $0x598] sm:$0xff]
      %v4431 = vld [vmem:[%s8 + $0x5a0] sm:$0xff]
      %v4432 = vld [vmem:[%s8 + $0x5a8] sm:$0xff]
      %v4433 = vld [vmem:[%s8 + $0x5b0] sm:$0xff]
      %v4434 = vld [vmem:[%s8 + $0x5b8] sm:$0xff]
      %v4435 = vld [vmem:[%s8 + $0x5c0] sm:$0xff]
      %v4436 = vld [vmem:[%s8 + $0x5c8] sm:$0xff]
      %v4437 = vld [vmem:[%s8 + $0x5d0] sm:$0xff]
      %v4438 = vld [vmem:[%s8 + $0x5d8] sm:$0xff]
      %v4439 = vld [vmem:[%s8 + $0x5e0] sm:$0xff]
      %v4440 = vld [vmem:[%s8 + $0x5e8] sm:$0xff]
      %v4441 = vld [vmem:[%s8 + $0x5f0] sm:$0xff]
      %v4442 = vld [vmem:[%s8 + $0x5f8] sm:$0xff]
      %v4444 = vsel %vm1237, %v4410, 0
      %4446 = vmatprep.subr.mxu0 %v4412
      %4447 = vmatpush1.msra.mxu0 %v4411
      %4448 = vmatprep.subr.mxu0 %v4420
      %4449 = vmatpush1.msra.mxu0 %v4419
      %4450 = vmatprep.subr.mxu0 %v4428
      %4451 = vmatpush1.msra.mxu0 %v4427
      %4452 = vmatprep.subr.mxu0 %v4436
      %4453 = vmatpush1.msra.mxu0 %v4435
      %4454 = vmatprep.subr.mxu0 0.0
      %4455 = vmatpush1.msra.mxu0 0.0
      %4456 = vmatprep.subr.mxu0 0.0
      %4457 = vmatpush1.msra.mxu0 0.0
      %4458 = vmatprep.subr.mxu0 0.0
      %4459 = vmatpush1.msra.mxu0 0.0
      %4460 = vmatprep.subr.mxu0 0.0
      %4461 = vmatpush1.msra.mxu0 0.0
      %4462 = vmatprep.subr.mxu0 0.0
      %4463 = vmatpush1.msra.mxu0 0.0
      %4464 = vmatprep.subr.mxu0 0.0
      %4465 = vmatpush1.msra.mxu0 0.0
      %4466 = vmatprep.subr.mxu0 0.0
      %4467 = vmatpush1.msra.mxu0 0.0
      %4468 = vmatprep.subr.mxu0 0.0
      %4469 = vmatpush1.msra.mxu0 0.0
      %4470 = vmatprep.subr.mxu0 0.0
      %4471 = vmatpush1.msra.mxu0 0.0
      %4472 = vmatprep.subr.mxu0 0.0
      %4473 = vmatpush1.msra.mxu0 0.0
      %4474 = vmatprep.subr.mxu0 0.0
      %4475 = vmatpush1.msra.mxu0 0.0
      %4476 = vmatprep.subr.mxu0 0.0
      %4477 = vmatpush1.msra.mxu0 0.0
      %4478 = vmatprep.subr.mxu0 0.0
      %4479 = vmatpush1.msra.mxu0 0.0
      %4480 = vmatprep.subr.mxu0 0.0
      %4481 = vmatpush1.msra.mxu0 0.0
      %4482 = vmatprep.subr.mxu0 0.0
      %4483 = vmatpush1.msra.mxu0 0.0
      %4484 = vmatprep.subr.mxu0 0.0
      %4485 = vmatpush1.msra.mxu0 0.0
      %4486 = vmatprep.subr.mxu0 0.0
      %4487 = vmatpush1.msra.mxu0 0.0
      %4488 = vmatprep.subr.mxu0 0.0
      %4489 = vmatpush1.msra.mxu0 0.0
      %4490 = vmatprep.subr.mxu0 0.0
      %4491 = vmatpush1.msra.mxu0 0.0
      %4492 = vmatprep.subr.mxu0 0.0
      %4493 = vmatpush1.msra.mxu0 0.0
      %4494 = vmatprep.subr.mxu0 0.0
      %4495 = vmatpush1.msra.mxu0 0.0
      %4496 = vmatprep.subr.mxu0 0.0
      %4497 = vmatpush1.msra.mxu0 0.0
      %4498 = vmatprep.subr.mxu0 0.0
      %4499 = vmatpush1.msra.mxu0 0.0
      %4500 = vmatprep.subr.mxu0 0.0
      %4501 = vmatpush1.msra.mxu0 0.0
      %4502 = vmatprep.subr.mxu0 0.0
      %4503 = vmatpush1.msra.mxu0 0.0
      %4504 = vmatprep.subr.mxu0 0.0
      %4505 = vmatpush1.msra.mxu0 0.0
      %4506 = vmatprep.subr.mxu0 0.0
      %4507 = vmatpush1.msra.mxu0 0.0
      %4508 = vmatprep.subr.mxu0 0.0
      %4509 = vmatpush1.msra.mxu0 0.0
      %4510 = vmatprep.mubr.f32.mxu0 0.0
      %4511 = vmatmul.mubr.f32.gmra.mrb[0].mxu0 %v4444
      %v4512 = vpop.f32.mrb[0].mxu0
      %v4513 = vadd.f32 0.0, %v4512
      %v4514 = vpop.f32.mrb[0].mxu0
      %v4515 = vadd.f32 0.0, %v4514
      %4516 = vdwg.mxu0
      %4517 = vmatprep.subr.mxu0 %v4414
      %4518 = vmatpush1.msra.mxu0 %v4413
      %4519 = vmatprep.subr.mxu0 %v4422
      %4520 = vmatpush1.msra.mxu0 %v4421
      %4521 = vmatprep.subr.mxu0 %v4430
      %4522 = vmatpush1.msra.mxu0 %v4429
      %4523 = vmatprep.subr.mxu0 %v4438
      %4524 = vmatpush1.msra.mxu0 %v4437
      %4525 = vmatprep.subr.mxu0 0.0
      %4526 = vmatpush1.msra.mxu0 0.0
      %4527 = vmatprep.subr.mxu0 0.0
      %4528 = vmatpush1.msra.mxu0 0.0
      %4529 = vmatprep.subr.mxu0 0.0
      %4530 = vmatpush1.msra.mxu0 0.0
      %4531 = vmatprep.subr.mxu0 0.0
      %4532 = vmatpush1.msra.mxu0 0.0
      %4533 = vmatprep.subr.mxu0 0.0
      %4534 = vmatpush1.msra.mxu0 0.0
      %4535 = vmatprep.subr.mxu0 0.0
      %4536 = vmatpush1.msra.mxu0 0.0
      %4537 = vmatprep.subr.mxu0 0.0
      %4538 = vmatpush1.msra.mxu0 0.0
      %4539 = vmatprep.subr.mxu0 0.0
      %4540 = vmatpush1.msra.mxu0 0.0
      %4541 = vmatprep.subr.mxu0 0.0
      %4542 = vmatpush1.msra.mxu0 0.0
      %4543 = vmatprep.subr.mxu0 0.0
      %4544 = vmatpush1.msra.mxu0 0.0
      %4545 = vmatprep.subr.mxu0 0.0
      %4546 = vmatpush1.msra.mxu0 0.0
      %4547 = vmatprep.subr.mxu0 0.0
      %4548 = vmatpush1.msra.mxu0 0.0
      %4549 = vmatprep.subr.mxu0 0.0
      %4550 = vmatpush1.msra.mxu0 0.0
      %4551 = vmatprep.subr.mxu0 0.0
      %4552 = vmatpush1.msra.mxu0 0.0
      %4553 = vmatprep.subr.mxu0 0.0
      %4554 = vmatpush1.msra.mxu0 0.0
      %4555 = vmatprep.subr.mxu0 0.0
      %4556 = vmatpush1.msra.mxu0 0.0
      %4557 = vmatprep.subr.mxu0 0.0
      %4558 = vmatpush1.msra.mxu0 0.0
      %4559 = vmatprep.subr.mxu0 0.0
      %4560 = vmatpush1.msra.mxu0 0.0
      %4561 = vmatprep.subr.mxu0 0.0
      %4562 = vmatpush1.msra.mxu0 0.0
      %4563 = vmatprep.subr.mxu0 0.0
      %4564 = vmatpush1.msra.mxu0 0.0
      %4565 = vmatprep.subr.mxu0 0.0
      %4566 = vmatpush1.msra.mxu0 0.0
      %4567 = vmatprep.subr.mxu0 0.0
      %4568 = vmatpush1.msra.mxu0 0.0
      %4569 = vmatprep.subr.mxu0 0.0
      %4570 = vmatpush1.msra.mxu0 0.0
      %4571 = vmatprep.subr.mxu0 0.0
      %4572 = vmatpush1.msra.mxu0 0.0
      %4573 = vmatprep.subr.mxu0 0.0
      %4574 = vmatpush1.msra.mxu0 0.0
      %4575 = vmatprep.subr.mxu0 0.0
      %4576 = vmatpush1.msra.mxu0 0.0
      %4577 = vmatprep.subr.mxu0 0.0
      %4578 = vmatpush1.msra.mxu0 0.0
      %4579 = vmatprep.subr.mxu0 0.0
      %4580 = vmatpush1.msra.mxu0 0.0
      %4581 = vmatprep.mubr.f32.mxu0 0.0
      %4582 = vmatmul.mubr.f32.gmra.mrb[0].mxu0 %v4444
      %v4583 = vpop.f32.mrb[0].mxu0
      %v4584 = vadd.f32 0.0, %v4583
      %v4585 = vpop.f32.mrb[0].mxu0
      %v4586 = vadd.f32 0.0, %v4585
      %4587 = vdwg.mxu0
      %4588 = vmatprep.subr.mxu0 %v4416
      %4589 = vmatpush1.msra.mxu0 %v4415
      %4590 = vmatprep.subr.mxu0 %v4424
      %4591 = vmatpush1.msra.mxu0 %v4423
      %4592 = vmatprep.subr.mxu0 %v4432
      %4593 = vmatpush1.msra.mxu0 %v4431
      %4594 = vmatprep.subr.mxu0 %v4440
      %4595 = vmatpush1.msra.mxu0 %v4439
      %4596 = vmatprep.subr.mxu0 0.0
      %4597 = vmatpush1.msra.mxu0 0.0
      %4598 = vmatprep.subr.mxu0 0.0
      %4599 = vmatpush1.msra.mxu0 0.0
      %4600 = vmatprep.subr.mxu0 0.0
      %4601 = vmatpush1.msra.mxu0 0.0
      %4602 = vmatprep.subr.mxu0 0.0
      %4603 = vmatpush1.msra.mxu0 0.0
      %4604 = vmatprep.subr.mxu0 0.0
      %4605 = vmatpush1.msra.mxu0 0.0
      %4606 = vmatprep.subr.mxu0 0.0
      %4607 = vmatpush1.msra.mxu0 0.0
      %4608 = vmatprep.subr.mxu0 0.0
      %4609 = vmatpush1.msra.mxu0 0.0
      %4610 = vmatprep.subr.mxu0 0.0
      %4611 = vmatpush1.msra.mxu0 0.0
      %4612 = vmatprep.subr.mxu0 0.0
      %4613 = vmatpush1.msra.mxu0 0.0
      %4614 = vmatprep.subr.mxu0 0.0
      %4615 = vmatpush1.msra.mxu0 0.0
      %4616 = vmatprep.subr.mxu0 0.0
      %4617 = vmatpush1.msra.mxu0 0.0
      %4618 = vmatprep.subr.mxu0 0.0
      %4619 = vmatpush1.msra.mxu0 0.0
      %4620 = vmatprep.subr.mxu0 0.0
      %4621 = vmatpush1.msra.mxu0 0.0
      %4622 = vmatprep.subr.mxu0 0.0
      %4623 = vmatpush1.msra.mxu0 0.0
      %4624 = vmatprep.subr.mxu0 0.0
      %4625 = vmatpush1.msra.mxu0 0.0
      %4626 = vmatprep.subr.mxu0 0.0
      %4627 = vmatpush1.msra.mxu0 0.0
      %4628 = vmatprep.subr.mxu0 0.0
      %4629 = vmatpush1.msra.mxu0 0.0
      %4630 = vmatprep.subr.mxu0 0.0
      %4631 = vmatpush1.msra.mxu0 0.0
      %4632 = vmatprep.subr.mxu0 0.0
      %4633 = vmatpush1.msra.mxu0 0.0
      %4634 = vmatprep.subr.mxu0 0.0
      %4635 = vmatpush1.msra.mxu0 0.0
      %4636 = vmatprep.subr.mxu0 0.0
      %4637 = vmatpush1.msra.mxu0 0.0
      %4638 = vmatprep.subr.mxu0 0.0
      %4639 = vmatpush1.msra.mxu0 0.0
      %4640 = vmatprep.subr.mxu0 0.0
      %4641 = vmatpush1.msra.mxu0 0.0
      %4642 = vmatprep.subr.mxu0 0.0
      %4643 = vmatpush1.msra.mxu0 0.0
      %4644 = vmatprep.subr.mxu0 0.0
      %4645 = vmatpush1.msra.mxu0 0.0
      %4646 = vmatprep.subr.mxu0 0.0
      %4647 = vmatpush1.msra.mxu0 0.0
      %4648 = vmatprep.subr.mxu0 0.0
      %4649 = vmatpush1.msra.mxu0 0.0
      %4650 = vmatprep.subr.mxu0 0.0
      %4651 = vmatpush1.msra.mxu0 0.0
      %4652 = vmatprep.mubr.f32.mxu0 0.0
      %4653 = vmatmul.mubr.f32.gmra.mrb[0].mxu0 %v4444
      %v4654 = vpop.f32.mrb[0].mxu0
      %v4655 = vadd.f32 0.0, %v4654
      %v4656 = vpop.f32.mrb[0].mxu0
      %v4657 = vadd.f32 0.0, %v4656
      %4658 = vdwg.mxu0
      %4659 = vmatprep.subr.mxu0 %v4418
      %4660 = vmatpush1.msra.mxu0 %v4417
      %4661 = vmatprep.subr.mxu0 %v4426
      %4662 = vmatpush1.msra.mxu0 %v4425
      %4663 = vmatprep.subr.mxu0 %v4434
      %4664 = vmatpush1.msra.mxu0 %v4433
      %4665 = vmatprep.subr.mxu0 %v4442
      %4666 = vmatpush1.msra.mxu0 %v4441
      %4667 = vmatprep.subr.mxu0 0.0
      %4668 = vmatpush1.msra.mxu0 0.0
      %4669 = vmatprep.subr.mxu0 0.0
      %4670 = vmatpush1.msra.mxu0 0.0
      %4671 = vmatprep.subr.mxu0 0.0
      %4672 = vmatpush1.msra.mxu0 0.0
      %4673 = vmatprep.subr.mxu0 0.0
      %4674 = vmatpush1.msra.mxu0 0.0
      %4675 = vmatprep.subr.mxu0 0.0
      %4676 = vmatpush1.msra.mxu0 0.0
      %4677 = vmatprep.subr.mxu0 0.0
      %4678 = vmatpush1.msra.mxu0 0.0
      %4679 = vmatprep.subr.mxu0 0.0
      %4680 = vmatpush1.msra.mxu0 0.0
      %4681 = vmatprep.subr.mxu0 0.0
      %4682 = vmatpush1.msra.mxu0 0.0
      %4683 = vmatprep.subr.mxu0 0.0
      %4684 = vmatpush1.msra.mxu0 0.0
      %4685 = vmatprep.subr.mxu0 0.0
      %4686 = vmatpush1.msra.mxu0 0.0
      %4687 = vmatprep.subr.mxu0 0.0
      %4688 = vmatpush1.msra.mxu0 0.0
      %4689 = vmatprep.subr.mxu0 0.0
      %4690 = vmatpush1.msra.mxu0 0.0
      %4691 = vmatprep.subr.mxu0 0.0
      %4692 = vmatpush1.msra.mxu0 0.0
      %4693 = vmatprep.subr.mxu0 0.0
      %4694 = vmatpush1.msra.mxu0 0.0
      %4695 = vmatprep.subr.mxu0 0.0
      %4696 = vmatpush1.msra.mxu0 0.0
      %4697 = vmatprep.subr.mxu0 0.0
      %4698 = vmatpush1.msra.mxu0 0.0
      %4699 = vmatprep.subr.mxu0 0.0
      %4700 = vmatpush1.msra.mxu0 0.0
      %4701 = vmatprep.subr.mxu0 0.0
      %4702 = vmatpush1.msra.mxu0 0.0
      %4703 = vmatprep.subr.mxu0 0.0
      %4704 = vmatpush1.msra.mxu0 0.0
      %4705 = vmatprep.subr.mxu0 0.0
      %4706 = vmatpush1.msra.mxu0 0.0
      %4707 = vmatprep.subr.mxu0 0.0
      %4708 = vmatpush1.msra.mxu0 0.0
      %4709 = vmatprep.subr.mxu0 0.0
      %4710 = vmatpush1.msra.mxu0 0.0
      %4711 = vmatprep.subr.mxu0 0.0
      %4712 = vmatpush1.msra.mxu0 0.0
      %4713 = vmatprep.subr.mxu0 0.0
      %4714 = vmatpush1.msra.mxu0 0.0
      %4715 = vmatprep.subr.mxu0 0.0
      %4716 = vmatpush1.msra.mxu0 0.0
      %4717 = vmatprep.subr.mxu0 0.0
      %4718 = vmatpush1.msra.mxu0 0.0
      %4719 = vmatprep.subr.mxu0 0.0
      %4720 = vmatpush1.msra.mxu0 0.0
      %4721 = vmatprep.subr.mxu0 0.0
      %4722 = vmatpush1.msra.mxu0 0.0
      %4723 = vmatprep.mubr.f32.mxu0 0.0
      %4724 = vmatmul.mubr.f32.gmra.mrb[0].mxu0 %v4444
      %v4725 = vpop.f32.mrb[0].mxu0
      %v4726 = vadd.f32 0.0, %v4725
      %v4727 = vpop.f32.mrb[0].mxu0
      %v4728 = vadd.f32 0.0, %v4727
      %4729 = vdwg.mxu0
      %v4730 = vadd.f32 %v4307, %v4513
      %v4731 = vadd.f32 %v4308, %v4515
      %v4732 = vadd.f32 %v4309, %v4584
      %v4733 = vadd.f32 %v4310, %v4586
      %v4734 = vadd.f32 %v4311, %v4655
      %v4735 = vadd.f32 %v4312, %v4657
      %v4736 = vadd.f32 %v4313, %v4726
      %v4737 = vadd.f32 %v4314, %v4728
      %v4738 = vrot.slane %v2191, 6
      %s4739 = vtos %v4738
      %v4740 = vstv %s4739
      %v4742 = vmul.f32 %v1516, %v4740
      %4743 = vrot.lane.b32.xlu0 %v4738, 127
      %v4744 = vpop.permute.xlu0 %4743
      %s4745 = vtos %v4744
      %v4746 = vstv %s4745
      %v4748 = vmul.f32 %v1851, %v4746
      %v4749 = vadd.f32 %v4742, %v4748
      %4750 = vrot.lane.b32.xlu0 %v4738, 126
      %v4751 = vpop.permute.xlu0 %4750
      %s4752 = vtos %v4751
      %v4753 = vstv %s4752
      %v4755 = vmul.f32 %v2186, %v4753
      %v4756 = vadd.f32 %v4749, %v4755
      %v4757 = vlaneseq
      %v4758 = vshrl.u32 %v4757, 7
      %v4759 = vsub.s32 6, %v4758
      %v4760 = vrot.slane %v2192, %v4759
      %v4761 = vadd.f32 %v4756, %v4760
      %v4762 = vmax.f32 %v4761, 0.0
      %4763 = vmatprep.subr.mxu0 0.0
      %4764 = vmatpush1.msra.mxu0 %v2193
      %4765 = vmatprep.subr.mxu0 0.0
      %4766 = vmatpush1.msra.mxu0 %v2194
      %4767 = vmatprep.subr.mxu0 0.0
      %4768 = vmatpush1.msra.mxu0 %v2195
      %4769 = vmatprep.subr.mxu0 0.0
      %4770 = vmatpush1.msra.mxu0 %v2196
      %4771 = vmatprep.subr.mxu0 0.0
      %4772 = vmatpush1.msra.mxu0 %v2197
      %4773 = vmatprep.subr.mxu0 0.0
      %4774 = vmatpush1.msra.mxu0 %v2198
      %4775 = vmatprep.subr.mxu0 0.0
      %4776 = vmatpush1.msra.mxu0 %v2199
      %4777 = vmatprep.subr.mxu0 0.0
      %4778 = vmatpush1.msra.mxu0 %v2200
      %4779 = vmatprep.subr.mxu0 0.0
      %4780 = vmatpush1.msra.mxu0 %v2201
      %4781 = vmatprep.subr.mxu0 0.0
      %4782 = vmatpush1.msra.mxu0 %v2202
      %4783 = vmatprep.subr.mxu0 0.0
      %4784 = vmatpush1.msra.mxu0 %v2203
      %4785 = vmatprep.subr.mxu0 0.0
      %4786 = vmatpush1.msra.mxu0 %v2204
      %4787 = vmatprep.subr.mxu0 0.0
      %4788 = vmatpush1.msra.mxu0 %v2205
      %4789 = vmatprep.subr.mxu0 0.0
      %4790 = vmatpush1.msra.mxu0 %v2206
      %4791 = vmatprep.subr.mxu0 0.0
      %4792 = vmatpush1.msra.mxu0 %v2207
      %4793 = vmatprep.subr.mxu0 0.0
      %4794 = vmatpush1.msra.mxu0 %v2208
      %4795 = vmatprep.subr.mxu0 0.0
      %4796 = vmatpush1.msra.mxu0 0.0
      %4797 = vmatprep.subr.mxu0 0.0
      %4798 = vmatpush1.msra.mxu0 0.0
      %4799 = vmatprep.subr.mxu0 0.0
      %4800 = vmatpush1.msra.mxu0 0.0
      %4801 = vmatprep.subr.mxu0 0.0
      %4802 = vmatpush1.msra.mxu0 0.0
      %4803 = vmatprep.subr.mxu0 0.0
      %4804 = vmatpush1.msra.mxu0 0.0
      %4805 = vmatprep.subr.mxu0 0.0
      %4806 = vmatpush1.msra.mxu0 0.0
      %4807 = vmatprep.subr.mxu0 0.0
      %4808 = vmatpush1.msra.mxu0 0.0
      %4809 = vmatprep.subr.mxu0 0.0
      %4810 = vmatpush1.msra.mxu0 0.0
      %4811 = vmatprep.subr.mxu0 0.0
      %4812 = vmatpush1.msra.mxu0 0.0
      %4813 = vmatprep.subr.mxu0 0.0
      %4814 = vmatpush1.msra.mxu0 0.0
      %4815 = vmatprep.subr.mxu0 0.0
      %4816 = vmatpush1.msra.mxu0 0.0
      %4817 = vmatprep.subr.mxu0 0.0
      %4818 = vmatpush1.msra.mxu0 0.0
      %4819 = vmatprep.subr.mxu0 0.0
      %4820 = vmatpush1.msra.mxu0 0.0
      %4821 = vmatprep.subr.mxu0 0.0
      %4822 = vmatpush1.msra.mxu0 0.0
      %4823 = vmatprep.subr.mxu0 0.0
      %4824 = vmatpush1.msra.mxu0 0.0
      %4825 = vmatprep.subr.mxu0 0.0
      %4826 = vmatpush1.msra.mxu0 0.0
      %4827 = vmatprep.mubr.f32.mxu0 0.0
      %4828 = vmatmul.mubr.f32.gmra.mrb[0].mxu0 %v4762
      %v4829 = vpop.f32.mrb[0].mxu0
      %v4830 = vadd.f32 %v2239, %v4829
      %v4831 = vpop.f32.mrb[0].mxu0
      %4832 = vdwg.mxu0
      %v4833 = vmax.f32 %v4830, 0.0
      %v4834 = vld [vmem:[%s8 + $0x600] sm:$0xff]
      %v4835 = vld [vmem:[%s8 + $0x608] sm:$0xff]
      %v4836 = vld [vmem:[%s8 + $0x610] sm:$0xff]
      %v4837 = vld [vmem:[%s8 + $0x618] sm:$0xff]
      %v4838 = vld [vmem:[%s8 + $0x620] sm:$0xff]
      %v4839 = vld [vmem:[%s8 + $0x628] sm:$0xff]
      %v4840 = vld [vmem:[%s8 + $0x630] sm:$0xff]
      %v4841 = vld [vmem:[%s8 + $0x638] sm:$0xff]
      %v4842 = vld [vmem:[%s8 + $0x640] sm:$0xff]
      %v4843 = vld [vmem:[%s8 + $0x648] sm:$0xff]
      %v4844 = vld [vmem:[%s8 + $0x650] sm:$0xff]
      %v4845 = vld [vmem:[%s8 + $0x658] sm:$0xff]
      %v4846 = vld [vmem:[%s8 + $0x660] sm:$0xff]
      %v4847 = vld [vmem:[%s8 + $0x668] sm:$0xff]
      %v4848 = vld [vmem:[%s8 + $0x670] sm:$0xff]
      %v4849 = vld [vmem:[%s8 + $0x678] sm:$0xff]
      %v4850 = vld [vmem:[%s8 + $0x680] sm:$0xff]
      %v4851 = vld [vmem:[%s8 + $0x688] sm:$0xff]
      %v4852 = vld [vmem:[%s8 + $0x690] sm:$0xff]
      %v4853 = vld [vmem:[%s8 + $0x698] sm:$0xff]
      %v4854 = vld [vmem:[%s8 + $0x6a0] sm:$0xff]
      %v4855 = vld [vmem:[%s8 + $0x6a8] sm:$0xff]
      %v4856 = vld [vmem:[%s8 + $0x6b0] sm:$0xff]
      %v4857 = vld [vmem:[%s8 + $0x6b8] sm:$0xff]
      %v4858 = vld [vmem:[%s8 + $0x6c0] sm:$0xff]
      %v4859 = vld [vmem:[%s8 + $0x6c8] sm:$0xff]
      %v4860 = vld [vmem:[%s8 + $0x6d0] sm:$0xff]
      %v4861 = vld [vmem:[%s8 + $0x6d8] sm:$0xff]
      %v4862 = vld [vmem:[%s8 + $0x6e0] sm:$0xff]
      %v4863 = vld [vmem:[%s8 + $0x6e8] sm:$0xff]
      %v4864 = vld [vmem:[%s8 + $0x6f0] sm:$0xff]
      %v4865 = vld [vmem:[%s8 + $0x6f8] sm:$0xff]
      %v4867 = vsel %vm1237, %v4833, 0
      %4869 = vmatprep.subr.mxu0 %v4835
      %4870 = vmatpush1.msra.mxu0 %v4834
      %4871 = vmatprep.subr.mxu0 %v4843
      %4872 = vmatpush1.msra.mxu0 %v4842
      %4873 = vmatprep.subr.mxu0 %v4851
      %4874 = vmatpush1.msra.mxu0 %v4850
      %4875 = vmatprep.subr.mxu0 %v4859
      %4876 = vmatpush1.msra.mxu0 %v4858
      %4877 = vmatprep.subr.mxu0 0.0
      %4878 = vmatpush1.msra.mxu0 0.0
      %4879 = vmatprep.subr.mxu0 0.0
      %4880 = vmatpush1.msra.mxu0 0.0
      %4881 = vmatprep.subr.mxu0 0.0
      %4882 = vmatpush1.msra.mxu0 0.0
      %4883 = vmatprep.subr.mxu0 0.0
      %4884 = vmatpush1.msra.mxu0 0.0
      %4885 = vmatprep.subr.mxu0 0.0
      %4886 = vmatpush1.msra.mxu0 0.0
      %4887 = vmatprep.subr.mxu0 0.0
      %4888 = vmatpush1.msra.mxu0 0.0
      %4889 = vmatprep.subr.mxu0 0.0
      %4890 = vmatpush1.msra.mxu0 0.0
      %4891 = vmatprep.subr.mxu0 0.0
      %4892 = vmatpush1.msra.mxu0 0.0
      %4893 = vmatprep.subr.mxu0 0.0
      %4894 = vmatpush1.msra.mxu0 0.0
      %4895 = vmatprep.subr.mxu0 0.0
      %4896 = vmatpush1.msra.mxu0 0.0
      %4897 = vmatprep.subr.mxu0 0.0
      %4898 = vmatpush1.msra.mxu0 0.0
      %4899 = vmatprep.subr.mxu0 0.0
      %4900 = vmatpush1.msra.mxu0 0.0
      %4901 = vmatprep.subr.mxu0 0.0
      %4902 = vmatpush1.msra.mxu0 0.0
      %4903 = vmatprep.subr.mxu0 0.0
      %4904 = vmatpush1.msra.mxu0 0.0
      %4905 = vmatprep.subr.mxu0 0.0
      %4906 = vmatpush1.msra.mxu0 0.0
      %4907 = vmatprep.subr.mxu0 0.0
      %4908 = vmatpush1.msra.mxu0 0.0
      %4909 = vmatprep.subr.mxu0 0.0
      %4910 = vmatpush1.msra.mxu0 0.0
      %4911 = vmatprep.subr.mxu0 0.0
      %4912 = vmatpush1.msra.mxu0 0.0
      %4913 = vmatprep.subr.mxu0 0.0
      %4914 = vmatpush1.msra.mxu0 0.0
      %4915 = vmatprep.subr.mxu0 0.0
      %4916 = vmatpush1.msra.mxu0 0.0
      %4917 = vmatprep.subr.mxu0 0.0
      %4918 = vmatpush1.msra.mxu0 0.0
      %4919 = vmatprep.subr.mxu0 0.0
      %4920 = vmatpush1.msra.mxu0 0.0
      %4921 = vmatprep.subr.mxu0 0.0
      %4922 = vmatpush1.msra.mxu0 0.0
      %4923 = vmatprep.subr.mxu0 0.0
      %4924 = vmatpush1.msra.mxu0 0.0
      %4925 = vmatprep.subr.mxu0 0.0
      %4926 = vmatpush1.msra.mxu0 0.0
      %4927 = vmatprep.subr.mxu0 0.0
      %4928 = vmatpush1.msra.mxu0 0.0
      %4929 = vmatprep.subr.mxu0 0.0
      %4930 = vmatpush1.msra.mxu0 0.0
      %4931 = vmatprep.subr.mxu0 0.0
      %4932 = vmatpush1.msra.mxu0 0.0
      %4933 = vmatprep.mubr.f32.mxu0 0.0
      %4934 = vmatmul.mubr.f32.gmra.mrb[0].mxu0 %v4867
      %v4935 = vpop.f32.mrb[0].mxu0
      %v4936 = vadd.f32 0.0, %v4935
      %v4937 = vpop.f32.mrb[0].mxu0
      %v4938 = vadd.f32 0.0, %v4937
      %4939 = vdwg.mxu0
      %4940 = vmatprep.subr.mxu0 %v4837
      %4941 = vmatpush1.msra.mxu0 %v4836
      %4942 = vmatprep.subr.mxu0 %v4845
      %4943 = vmatpush1.msra.mxu0 %v4844
      %4944 = vmatprep.subr.mxu0 %v4853
      %4945 = vmatpush1.msra.mxu0 %v4852
      %4946 = vmatprep.subr.mxu0 %v4861
      %4947 = vmatpush1.msra.mxu0 %v4860
      %4948 = vmatprep.subr.mxu0 0.0
      %4949 = vmatpush1.msra.mxu0 0.0
      %4950 = vmatprep.subr.mxu0 0.0
      %4951 = vmatpush1.msra.mxu0 0.0
      %4952 = vmatprep.subr.mxu0 0.0
      %4953 = vmatpush1.msra.mxu0 0.0
      %4954 = vmatprep.subr.mxu0 0.0
      %4955 = vmatpush1.msra.mxu0 0.0
      %4956 = vmatprep.subr.mxu0 0.0
      %4957 = vmatpush1.msra.mxu0 0.0
      %4958 = vmatprep.subr.mxu0 0.0
      %4959 = vmatpush1.msra.mxu0 0.0
      %4960 = vmatprep.subr.mxu0 0.0
      %4961 = vmatpush1.msra.mxu0 0.0
      %4962 = vmatprep.subr.mxu0 0.0
      %4963 = vmatpush1.msra.mxu0 0.0
      %4964 = vmatprep.subr.mxu0 0.0
      %4965 = vmatpush1.msra.mxu0 0.0
      %4966 = vmatprep.subr.mxu0 0.0
      %4967 = vmatpush1.msra.mxu0 0.0
      %4968 = vmatprep.subr.mxu0 0.0
      %4969 = vmatpush1.msra.mxu0 0.0
      %4970 = vmatprep.subr.mxu0 0.0
      %4971 = vmatpush1.msra.mxu0 0.0
      %4972 = vmatprep.subr.mxu0 0.0
      %4973 = vmatpush1.msra.mxu0 0.0
      %4974 = vmatprep.subr.mxu0 0.0
      %4975 = vmatpush1.msra.mxu0 0.0
      %4976 = vmatprep.subr.mxu0 0.0
      %4977 = vmatpush1.msra.mxu0 0.0
      %4978 = vmatprep.subr.mxu0 0.0
      %4979 = vmatpush1.msra.mxu0 0.0
      %4980 = vmatprep.subr.mxu0 0.0
      %4981 = vmatpush1.msra.mxu0 0.0
      %4982 = vmatprep.subr.mxu0 0.0
      %4983 = vmatpush1.msra.mxu0 0.0
      %4984 = vmatprep.subr.mxu0 0.0
      %4985 = vmatpush1.msra.mxu0 0.0
      %4986 = vmatprep.subr.mxu0 0.0
      %4987 = vmatpush1.msra.mxu0 0.0
      %4988 = vmatprep.subr.mxu0 0.0
      %4989 = vmatpush1.msra.mxu0 0.0
      %4990 = vmatprep.subr.mxu0 0.0
      %4991 = vmatpush1.msra.mxu0 0.0
      %4992 = vmatprep.subr.mxu0 0.0
      %4993 = vmatpush1.msra.mxu0 0.0
      %4994 = vmatprep.subr.mxu0 0.0
      %4995 = vmatpush1.msra.mxu0 0.0
      %4996 = vmatprep.subr.mxu0 0.0
      %4997 = vmatpush1.msra.mxu0 0.0
      %4998 = vmatprep.subr.mxu0 0.0
      %4999 = vmatpush1.msra.mxu0 0.0
      %5000 = vmatprep.subr.mxu0 0.0
      %5001 = vmatpush1.msra.mxu0 0.0
      %5002 = vmatprep.subr.mxu0 0.0
      %5003 = vmatpush1.msra.mxu0 0.0
      %5004 = vmatprep.mubr.f32.mxu0 0.0
      %5005 = vmatmul.mubr.f32.gmra.mrb[0].mxu0 %v4867
      %v5006 = vpop.f32.mrb[0].mxu0
      %v5007 = vadd.f32 0.0, %v5006
      %v5008 = vpop.f32.mrb[0].mxu0
      %v5009 = vadd.f32 0.0, %v5008
      %5010 = vdwg.mxu0
      %5011 = vmatprep.subr.mxu0 %v4839
      %5012 = vmatpush1.msra.mxu0 %v4838
      %5013 = vmatprep.subr.mxu0 %v4847
      %5014 = vmatpush1.msra.mxu0 %v4846
      %5015 = vmatprep.subr.mxu0 %v4855
      %5016 = vmatpush1.msra.mxu0 %v4854
      %5017 = vmatprep.subr.mxu0 %v4863
      %5018 = vmatpush1.msra.mxu0 %v4862
      %5019 = vmatprep.subr.mxu0 0.0
      %5020 = vmatpush1.msra.mxu0 0.0
      %5021 = vmatprep.subr.mxu0 0.0
      %5022 = vmatpush1.msra.mxu0 0.0
      %5023 = vmatprep.subr.mxu0 0.0
      %5024 = vmatpush1.msra.mxu0 0.0
      %5025 = vmatprep.subr.mxu0 0.0
      %5026 = vmatpush1.msra.mxu0 0.0
      %5027 = vmatprep.subr.mxu0 0.0
      %5028 = vmatpush1.msra.mxu0 0.0
      %5029 = vmatprep.subr.mxu0 0.0
      %5030 = vmatpush1.msra.mxu0 0.0
      %5031 = vmatprep.subr.mxu0 0.0
      %5032 = vmatpush1.msra.mxu0 0.0
      %5033 = vmatprep.subr.mxu0 0.0
      %5034 = vmatpush1.msra.mxu0 0.0
      %5035 = vmatprep.subr.mxu0 0.0
      %5036 = vmatpush1.msra.mxu0 0.0
      %5037 = vmatprep.subr.mxu0 0.0
      %5038 = vmatpush1.msra.mxu0 0.0
      %5039 = vmatprep.subr.mxu0 0.0
      %5040 = vmatpush1.msra.mxu0 0.0
      %5041 = vmatprep.subr.mxu0 0.0
      %5042 = vmatpush1.msra.mxu0 0.0
      %5043 = vmatprep.subr.mxu0 0.0
      %5044 = vmatpush1.msra.mxu0 0.0
      %5045 = vmatprep.subr.mxu0 0.0
      %5046 = vmatpush1.msra.mxu0 0.0
      %5047 = vmatprep.subr.mxu0 0.0
      %5048 = vmatpush1.msra.mxu0 0.0
      %5049 = vmatprep.subr.mxu0 0.0
      %5050 = vmatpush1.msra.mxu0 0.0
      %5051 = vmatprep.subr.mxu0 0.0
      %5052 = vmatpush1.msra.mxu0 0.0
      %5053 = vmatprep.subr.mxu0 0.0
      %5054 = vmatpush1.msra.mxu0 0.0
      %5055 = vmatprep.subr.mxu0 0.0
      %5056 = vmatpush1.msra.mxu0 0.0
      %5057 = vmatprep.subr.mxu0 0.0
      %5058 = vmatpush1.msra.mxu0 0.0
      %5059 = vmatprep.subr.mxu0 0.0
      %5060 = vmatpush1.msra.mxu0 0.0
      %5061 = vmatprep.subr.mxu0 0.0
      %5062 = vmatpush1.msra.mxu0 0.0
      %5063 = vmatprep.subr.mxu0 0.0
      %5064 = vmatpush1.msra.mxu0 0.0
      %5065 = vmatprep.subr.mxu0 0.0
      %5066 = vmatpush1.msra.mxu0 0.0
      %5067 = vmatprep.subr.mxu0 0.0
      %5068 = vmatpush1.msra.mxu0 0.0
      %5069 = vmatprep.subr.mxu0 0.0
      %5070 = vmatpush1.msra.mxu0 0.0
      %5071 = vmatprep.subr.mxu0 0.0
      %5072 = vmatpush1.msra.mxu0 0.0
      %5073 = vmatprep.subr.mxu0 0.0
      %5074 = vmatpush1.msra.mxu0 0.0
      %5075 = vmatprep.mubr.f32.mxu0 0.0
      %5076 = vmatmul.mubr.f32.gmra.mrb[0].mxu0 %v4867
      %v5077 = vpop.f32.mrb[0].mxu0
      %v5078 = vadd.f32 0.0, %v5077
      %v5079 = vpop.f32.mrb[0].mxu0
      %v5080 = vadd.f32 0.0, %v5079
      %5081 = vdwg.mxu0
      %5082 = vmatprep.subr.mxu0 %v4841
      %5083 = vmatpush1.msra.mxu0 %v4840
      %5084 = vmatprep.subr.mxu0 %v4849
      %5085 = vmatpush1.msra.mxu0 %v4848
      %5086 = vmatprep.subr.mxu0 %v4857
      %5087 = vmatpush1.msra.mxu0 %v4856
      %5088 = vmatprep.subr.mxu0 %v4865
      %5089 = vmatpush1.msra.mxu0 %v4864
      %5090 = vmatprep.subr.mxu0 0.0
      %5091 = vmatpush1.msra.mxu0 0.0
      %5092 = vmatprep.subr.mxu0 0.0
      %5093 = vmatpush1.msra.mxu0 0.0
      %5094 = vmatprep.subr.mxu0 0.0
      %5095 = vmatpush1.msra.mxu0 0.0
      %5096 = vmatprep.subr.mxu0 0.0
      %5097 = vmatpush1.msra.mxu0 0.0
      %5098 = vmatprep.subr.mxu0 0.0
      %5099 = vmatpush1.msra.mxu0 0.0
      %5100 = vmatprep.subr.mxu0 0.0
      %5101 = vmatpush1.msra.mxu0 0.0
      %5102 = vmatprep.subr.mxu0 0.0
      %5103 = vmatpush1.msra.mxu0 0.0
      %5104 = vmatprep.subr.mxu0 0.0
      %5105 = vmatpush1.msra.mxu0 0.0
      %5106 = vmatprep.subr.mxu0 0.0
      %5107 = vmatpush1.msra.mxu0 0.0
      %5108 = vmatprep.subr.mxu0 0.0
      %5109 = vmatpush1.msra.mxu0 0.0
      %5110 = vmatprep.subr.mxu0 0.0
      %5111 = vmatpush1.msra.mxu0 0.0
      %5112 = vmatprep.subr.mxu0 0.0
      %5113 = vmatpush1.msra.mxu0 0.0
      %5114 = vmatprep.subr.mxu0 0.0
      %5115 = vmatpush1.msra.mxu0 0.0
      %5116 = vmatprep.subr.mxu0 0.0
      %5117 = vmatpush1.msra.mxu0 0.0
      %5118 = vmatprep.subr.mxu0 0.0
      %5119 = vmatpush1.msra.mxu0 0.0
      %5120 = vmatprep.subr.mxu0 0.0
      %5121 = vmatpush1.msra.mxu0 0.0
      %5122 = vmatprep.subr.mxu0 0.0
      %5123 = vmatpush1.msra.mxu0 0.0
      %5124 = vmatprep.subr.mxu0 0.0
      %5125 = vmatpush1.msra.mxu0 0.0
      %5126 = vmatprep.subr.mxu0 0.0
      %5127 = vmatpush1.msra.mxu0 0.0
      %5128 = vmatprep.subr.mxu0 0.0
      %5129 = vmatpush1.msra.mxu0 0.0
      %5130 = vmatprep.subr.mxu0 0.0
      %5131 = vmatpush1.msra.mxu0 0.0
      %5132 = vmatprep.subr.mxu0 0.0
      %5133 = vmatpush1.msra.mxu0 0.0
      %5134 = vmatprep.subr.mxu0 0.0
      %5135 = vmatpush1.msra.mxu0 0.0
      %5136 = vmatprep.subr.mxu0 0.0
      %5137 = vmatpush1.msra.mxu0 0.0
      %5138 = vmatprep.subr.mxu0 0.0
      %5139 = vmatpush1.msra.mxu0 0.0
      %5140 = vmatprep.subr.mxu0 0.0
      %5141 = vmatpush1.msra.mxu0 0.0
      %5142 = vmatprep.subr.mxu0 0.0
      %5143 = vmatpush1.msra.mxu0 0.0
      %5144 = vmatprep.subr.mxu0 0.0
      %5145 = vmatpush1.msra.mxu0 0.0
      %5146 = vmatprep.mubr.f32.mxu0 0.0
      %5147 = vmatmul.mubr.f32.gmra.mrb[0].mxu0 %v4867
      %v5148 = vpop.f32.mrb[0].mxu0
      %v5149 = vadd.f32 0.0, %v5148
      %v5150 = vpop.f32.mrb[0].mxu0
      %v5151 = vadd.f32 0.0, %v5150
      %5152 = vdwg.mxu0
      %v5153 = vadd.f32 %v4730, %v4936
      %v5154 = vadd.f32 %v4731, %v4938
      %v5155 = vadd.f32 %v4732, %v5007
      %v5156 = vadd.f32 %v4733, %v5009
      %v5157 = vadd.f32 %v4734, %v5078
      %v5158 = vadd.f32 %v4735, %v5080
      %v5159 = vadd.f32 %v4736, %v5149
      %v5160 = vadd.f32 %v4737, %v5151
      %v5161 = vrot.slane %v2191, 7
      %s5162 = vtos %v5161
      %v5163 = vstv %s5162
      %v5165 = vmul.f32 %v1516, %v5163
      %5166 = vrot.lane.b32.xlu0 %v5161, 127
      %v5167 = vpop.permute.xlu0 %5166
      %s5168 = vtos %v5167
      %v5169 = vstv %s5168
      %v5171 = vmul.f32 %v1851, %v5169
      %v5172 = vadd.f32 %v5165, %v5171
      %5173 = vrot.lane.b32.xlu0 %v5161, 126
      %v5174 = vpop.permute.xlu0 %5173
      %s5175 = vtos %v5174
      %v5176 = vstv %s5175
      %v5178 = vmul.f32 %v2186, %v5176
      %v5179 = vadd.f32 %v5172, %v5178
      %v5180 = vlaneseq
      %v5181 = vshrl.u32 %v5180, 7
      %v5182 = vsub.s32 7, %v5181
      %v5183 = vrot.slane %v2192, %v5182
      %v5184 = vadd.f32 %v5179, %v5183
      %v5185 = vmax.f32 %v5184, 0.0
      %5186 = vmatprep.subr.mxu0 0.0
      %5187 = vmatpush1.msra.mxu0 %v2193
      %5188 = vmatprep.subr.mxu0 0.0
      %5189 = vmatpush1.msra.mxu0 %v2194
      %5190 = vmatprep.subr.mxu0 0.0
      %5191 = vmatpush1.msra.mxu0 %v2195
      %5192 = vmatprep.subr.mxu0 0.0
      %5193 = vmatpush1.msra.mxu0 %v2196
      %5194 = vmatprep.subr.mxu0 0.0
      %5195 = vmatpush1.msra.mxu0 %v2197
      %5196 = vmatprep.subr.mxu0 0.0
      %5197 = vmatpush1.msra.mxu0 %v2198
      %5198 = vmatprep.subr.mxu0 0.0
      %5199 = vmatpush1.msra.mxu0 %v2199
      %5200 = vmatprep.subr.mxu0 0.0
      %5201 = vmatpush1.msra.mxu0 %v2200
      %5202 = vmatprep.subr.mxu0 0.0
      %5203 = vmatpush1.msra.mxu0 %v2201
      %5204 = vmatprep.subr.mxu0 0.0
      %5205 = vmatpush1.msra.mxu0 %v2202
      %5206 = vmatprep.subr.mxu0 0.0
      %5207 = vmatpush1.msra.mxu0 %v2203
      %5208 = vmatprep.subr.mxu0 0.0
      %5209 = vmatpush1.msra.mxu0 %v2204
      %5210 = vmatprep.subr.mxu0 0.0
      %5211 = vmatpush1.msra.mxu0 %v2205
      %5212 = vmatprep.subr.mxu0 0.0
      %5213 = vmatpush1.msra.mxu0 %v2206
      %5214 = vmatprep.subr.mxu0 0.0
      %5215 = vmatpush1.msra.mxu0 %v2207
      %5216 = vmatprep.subr.mxu0 0.0
      %5217 = vmatpush1.msra.mxu0 %v2208
      %5218 = vmatprep.subr.mxu0 0.0
      %5219 = vmatpush1.msra.mxu0 0.0
      %5220 = vmatprep.subr.mxu0 0.0
      %5221 = vmatpush1.msra.mxu0 0.0
      %5222 = vmatprep.subr.mxu0 0.0
      %5223 = vmatpush1.msra.mxu0 0.0
      %5224 = vmatprep.subr.mxu0 0.0
      %5225 = vmatpush1.msra.mxu0 0.0
      %5226 = vmatprep.subr.mxu0 0.0
      %5227 = vmatpush1.msra.mxu0 0.0
      %5228 = vmatprep.subr.mxu0 0.0
      %5229 = vmatpush1.msra.mxu0 0.0
      %5230 = vmatprep.subr.mxu0 0.0
      %5231 = vmatpush1.msra.mxu0 0.0
      %5232 = vmatprep.subr.mxu0 0.0
      %5233 = vmatpush1.msra.mxu0 0.0
      %5234 = vmatprep.subr.mxu0 0.0
      %5235 = vmatpush1.msra.mxu0 0.0
      %5236 = vmatprep.subr.mxu0 0.0
      %5237 = vmatpush1.msra.mxu0 0.0
      %5238 = vmatprep.subr.mxu0 0.0
      %5239 = vmatpush1.msra.mxu0 0.0
      %5240 = vmatprep.subr.mxu0 0.0
      %5241 = vmatpush1.msra.mxu0 0.0
      %5242 = vmatprep.subr.mxu0 0.0
      %5243 = vmatpush1.msra.mxu0 0.0
      %5244 = vmatprep.subr.mxu0 0.0
      %5245 = vmatpush1.msra.mxu0 0.0
      %5246 = vmatprep.subr.mxu0 0.0
      %5247 = vmatpush1.msra.mxu0 0.0
      %5248 = vmatprep.subr.mxu0 0.0
      %5249 = vmatpush1.msra.mxu0 0.0
      %5250 = vmatprep.mubr.f32.mxu0 0.0
      %5251 = vmatmul.mubr.f32.gmra.mrb[0].mxu0 %v5185
      %v5252 = vpop.f32.mrb[0].mxu0
      %v5253 = vadd.f32 %v2239, %v5252
      %v5254 = vpop.f32.mrb[0].mxu0
      %5255 = vdwg.mxu0
      %v5256 = vmax.f32 %v5253, 0.0
      %v5257 = vld [vmem:[%s8 + $0x700] sm:$0xff]
      %v5258 = vld [vmem:[%s8 + $0x708] sm:$0xff]
      %v5259 = vld [vmem:[%s8 + $0x710] sm:$0xff]
      %v5260 = vld [vmem:[%s8 + $0x718] sm:$0xff]
      %v5261 = vld [vmem:[%s8 + $0x720] sm:$0xff]
      %v5262 = vld [vmem:[%s8 + $0x728] sm:$0xff]
      %v5263 = vld [vmem:[%s8 + $0x730] sm:$0xff]
      %v5264 = vld [vmem:[%s8 + $0x738] sm:$0xff]
      %v5265 = vld [vmem:[%s8 + $0x740] sm:$0xff]
      %v5266 = vld [vmem:[%s8 + $0x748] sm:$0xff]
      %v5267 = vld [vmem:[%s8 + $0x750] sm:$0xff]
      %v5268 = vld [vmem:[%s8 + $0x758] sm:$0xff]
      %v5269 = vld [vmem:[%s8 + $0x760] sm:$0xff]
      %v5270 = vld [vmem:[%s8 + $0x768] sm:$0xff]
      %v5271 = vld [vmem:[%s8 + $0x770] sm:$0xff]
      %v5272 = vld [vmem:[%s8 + $0x778] sm:$0xff]
      %v5273 = vld [vmem:[%s8 + $0x780] sm:$0xff]
      %v5274 = vld [vmem:[%s8 + $0x788] sm:$0xff]
      %v5275 = vld [vmem:[%s8 + $0x790] sm:$0xff]
      %v5276 = vld [vmem:[%s8 + $0x798] sm:$0xff]
      %v5277 = vld [vmem:[%s8 + $0x7a0] sm:$0xff]
      %v5278 = vld [vmem:[%s8 + $0x7a8] sm:$0xff]
      %v5279 = vld [vmem:[%s8 + $0x7b0] sm:$0xff]
      %v5280 = vld [vmem:[%s8 + $0x7b8] sm:$0xff]
      %v5281 = vld [vmem:[%s8 + $0x7c0] sm:$0xff]
      %v5282 = vld [vmem:[%s8 + $0x7c8] sm:$0xff]
      %v5283 = vld [vmem:[%s8 + $0x7d0] sm:$0xff]
      %v5284 = vld [vmem:[%s8 + $0x7d8] sm:$0xff]
      %v5285 = vld [vmem:[%s8 + $0x7e0] sm:$0xff]
      %v5286 = vld [vmem:[%s8 + $0x7e8] sm:$0xff]
      %v5287 = vld [vmem:[%s8 + $0x7f0] sm:$0xff]
      %v5288 = vld [vmem:[%s8 + $0x7f8] sm:$0xff]
      %v5290 = vsel %vm1237, %v5256, 0
      %5292 = vmatprep.subr.mxu0 %v5258
      %5293 = vmatpush1.msra.mxu0 %v5257
      %5294 = vmatprep.subr.mxu0 %v5266
      %5295 = vmatpush1.msra.mxu0 %v5265
      %5296 = vmatprep.subr.mxu0 %v5274
      %5297 = vmatpush1.msra.mxu0 %v5273
      %5298 = vmatprep.subr.mxu0 %v5282
      %5299 = vmatpush1.msra.mxu0 %v5281
      %5300 = vmatprep.subr.mxu0 0.0
      %5301 = vmatpush1.msra.mxu0 0.0
      %5302 = vmatprep.subr.mxu0 0.0
      %5303 = vmatpush1.msra.mxu0 0.0
      %5304 = vmatprep.subr.mxu0 0.0
      %5305 = vmatpush1.msra.mxu0 0.0
      %5306 = vmatprep.subr.mxu0 0.0
      %5307 = vmatpush1.msra.mxu0 0.0
      %5308 = vmatprep.subr.mxu0 0.0
      %5309 = vmatpush1.msra.mxu0 0.0
      %5310 = vmatprep.subr.mxu0 0.0
      %5311 = vmatpush1.msra.mxu0 0.0
      %5312 = vmatprep.subr.mxu0 0.0
      %5313 = vmatpush1.msra.mxu0 0.0
      %5314 = vmatprep.subr.mxu0 0.0
      %5315 = vmatpush1.msra.mxu0 0.0
      %5316 = vmatprep.subr.mxu0 0.0
      %5317 = vmatpush1.msra.mxu0 0.0
      %5318 = vmatprep.subr.mxu0 0.0
      %5319 = vmatpush1.msra.mxu0 0.0
      %5320 = vmatprep.subr.mxu0 0.0
      %5321 = vmatpush1.msra.mxu0 0.0
      %5322 = vmatprep.subr.mxu0 0.0
      %5323 = vmatpush1.msra.mxu0 0.0
      %5324 = vmatprep.subr.mxu0 0.0
      %5325 = vmatpush1.msra.mxu0 0.0
      %5326 = vmatprep.subr.mxu0 0.0
      %5327 = vmatpush1.msra.mxu0 0.0
      %5328 = vmatprep.subr.mxu0 0.0
      %5329 = vmatpush1.msra.mxu0 0.0
      %5330 = vmatprep.subr.mxu0 0.0
      %5331 = vmatpush1.msra.mxu0 0.0
      %5332 = vmatprep.subr.mxu0 0.0
      %5333 = vmatpush1.msra.mxu0 0.0
      %5334 = vmatprep.subr.mxu0 0.0
      %5335 = vmatpush1.msra.mxu0 0.0
      %5336 = vmatprep.subr.mxu0 0.0
      %5337 = vmatpush1.msra.mxu0 0.0
      %5338 = vmatprep.subr.mxu0 0.0
      %5339 = vmatpush1.msra.mxu0 0.0
      %5340 = vmatprep.subr.mxu0 0.0
      %5341 = vmatpush1.msra.mxu0 0.0
      %5342 = vmatprep.subr.mxu0 0.0
      %5343 = vmatpush1.msra.mxu0 0.0
      %5344 = vmatprep.subr.mxu0 0.0
      %5345 = vmatpush1.msra.mxu0 0.0
      %5346 = vmatprep.subr.mxu0 0.0
      %5347 = vmatpush1.msra.mxu0 0.0
      %5348 = vmatprep.subr.mxu0 0.0
      %5349 = vmatpush1.msra.mxu0 0.0
      %5350 = vmatprep.subr.mxu0 0.0
      %5351 = vmatpush1.msra.mxu0 0.0
      %5352 = vmatprep.subr.mxu0 0.0
      %5353 = vmatpush1.msra.mxu0 0.0
      %5354 = vmatprep.subr.mxu0 0.0
      %5355 = vmatpush1.msra.mxu0 0.0
      %5356 = vmatprep.mubr.f32.mxu0 0.0
      %5357 = vmatmul.mubr.f32.gmra.mrb[0].mxu0 %v5290
      %v5358 = vpop.f32.mrb[0].mxu0
      %v5359 = vadd.f32 0.0, %v5358
      %v5360 = vpop.f32.mrb[0].mxu0
      %v5361 = vadd.f32 0.0, %v5360
      %5362 = vdwg.mxu0
      %5363 = vmatprep.subr.mxu0 %v5260
      %5364 = vmatpush1.msra.mxu0 %v5259
      %5365 = vmatprep.subr.mxu0 %v5268
      %5366 = vmatpush1.msra.mxu0 %v5267
      %5367 = vmatprep.subr.mxu0 %v5276
      %5368 = vmatpush1.msra.mxu0 %v5275
      %5369 = vmatprep.subr.mxu0 %v5284
      %5370 = vmatpush1.msra.mxu0 %v5283
      %5371 = vmatprep.subr.mxu0 0.0
      %5372 = vmatpush1.msra.mxu0 0.0
      %5373 = vmatprep.subr.mxu0 0.0
      %5374 = vmatpush1.msra.mxu0 0.0
      %5375 = vmatprep.subr.mxu0 0.0
      %5376 = vmatpush1.msra.mxu0 0.0
      %5377 = vmatprep.subr.mxu0 0.0
      %5378 = vmatpush1.msra.mxu0 0.0
      %5379 = vmatprep.subr.mxu0 0.0
      %5380 = vmatpush1.msra.mxu0 0.0
      %5381 = vmatprep.subr.mxu0 0.0
      %5382 = vmatpush1.msra.mxu0 0.0
      %5383 = vmatprep.subr.mxu0 0.0
      %5384 = vmatpush1.msra.mxu0 0.0
      %5385 = vmatprep.subr.mxu0 0.0
      %5386 = vmatpush1.msra.mxu0 0.0
      %5387 = vmatprep.subr.mxu0 0.0
      %5388 = vmatpush1.msra.mxu0 0.0
      %5389 = vmatprep.subr.mxu0 0.0
      %5390 = vmatpush1.msra.mxu0 0.0
      %5391 = vmatprep.subr.mxu0 0.0
      %5392 = vmatpush1.msra.mxu0 0.0
      %5393 = vmatprep.subr.mxu0 0.0
      %5394 = vmatpush1.msra.mxu0 0.0
      %5395 = vmatprep.subr.mxu0 0.0
      %5396 = vmatpush1.msra.mxu0 0.0
      %5397 = vmatprep.subr.mxu0 0.0
      %5398 = vmatpush1.msra.mxu0 0.0
      %5399 = vmatprep.subr.mxu0 0.0
      %5400 = vmatpush1.msra.mxu0 0.0
      %5401 = vmatprep.subr.mxu0 0.0
      %5402 = vmatpush1.msra.mxu0 0.0
      %5403 = vmatprep.subr.mxu0 0.0
      %5404 = vmatpush1.msra.mxu0 0.0
      %5405 = vmatprep.subr.mxu0 0.0
      %5406 = vmatpush1.msra.mxu0 0.0
      %5407 = vmatprep.subr.mxu0 0.0
      %5408 = vmatpush1.msra.mxu0 0.0
      %5409 = vmatprep.subr.mxu0 0.0
      %5410 = vmatpush1.msra.mxu0 0.0
      %5411 = vmatprep.subr.mxu0 0.0
      %5412 = vmatpush1.msra.mxu0 0.0
      %5413 = vmatprep.subr.mxu0 0.0
      %5414 = vmatpush1.msra.mxu0 0.0
      %5415 = vmatprep.subr.mxu0 0.0
      %5416 = vmatpush1.msra.mxu0 0.0
      %5417 = vmatprep.subr.mxu0 0.0
      %5418 = vmatpush1.msra.mxu0 0.0
      %5419 = vmatprep.subr.mxu0 0.0
      %5420 = vmatpush1.msra.mxu0 0.0
      %5421 = vmatprep.subr.mxu0 0.0
      %5422 = vmatpush1.msra.mxu0 0.0
      %5423 = vmatprep.subr.mxu0 0.0
      %5424 = vmatpush1.msra.mxu0 0.0
      %5425 = vmatprep.subr.mxu0 0.0
      %5426 = vmatpush1.msra.mxu0 0.0
      %5427 = vmatprep.mubr.f32.mxu0 0.0
      %5428 = vmatmul.mubr.f32.gmra.mrb[0].mxu0 %v5290
      %v5429 = vpop.f32.mrb[0].mxu0
      %v5430 = vadd.f32 0.0, %v5429
      %v5431 = vpop.f32.mrb[0].mxu0
      %v5432 = vadd.f32 0.0, %v5431
      %5433 = vdwg.mxu0
      %5434 = vmatprep.subr.mxu0 %v5262
      %5435 = vmatpush1.msra.mxu0 %v5261
      %5436 = vmatprep.subr.mxu0 %v5270
      %5437 = vmatpush1.msra.mxu0 %v5269
      %5438 = vmatprep.subr.mxu0 %v5278
      %5439 = vmatpush1.msra.mxu0 %v5277
      %5440 = vmatprep.subr.mxu0 %v5286
      %5441 = vmatpush1.msra.mxu0 %v5285
      %5442 = vmatprep.subr.mxu0 0.0
      %5443 = vmatpush1.msra.mxu0 0.0
      %5444 = vmatprep.subr.mxu0 0.0
      %5445 = vmatpush1.msra.mxu0 0.0
      %5446 = vmatprep.subr.mxu0 0.0
      %5447 = vmatpush1.msra.mxu0 0.0
      %5448 = vmatprep.subr.mxu0 0.0
      %5449 = vmatpush1.msra.mxu0 0.0
      %5450 = vmatprep.subr.mxu0 0.0
      %5451 = vmatpush1.msra.mxu0 0.0
      %5452 = vmatprep.subr.mxu0 0.0
      %5453 = vmatpush1.msra.mxu0 0.0
      %5454 = vmatprep.subr.mxu0 0.0
      %5455 = vmatpush1.msra.mxu0 0.0
      %5456 = vmatprep.subr.mxu0 0.0
      %5457 = vmatpush1.msra.mxu0 0.0
      %5458 = vmatprep.subr.mxu0 0.0
      %5459 = vmatpush1.msra.mxu0 0.0
      %5460 = vmatprep.subr.mxu0 0.0
      %5461 = vmatpush1.msra.mxu0 0.0
      %5462 = vmatprep.subr.mxu0 0.0
      %5463 = vmatpush1.msra.mxu0 0.0
      %5464 = vmatprep.subr.mxu0 0.0
      %5465 = vmatpush1.msra.mxu0 0.0
      %5466 = vmatprep.subr.mxu0 0.0
      %5467 = vmatpush1.msra.mxu0 0.0
      %5468 = vmatprep.subr.mxu0 0.0
      %5469 = vmatpush1.msra.mxu0 0.0
      %5470 = vmatprep.subr.mxu0 0.0
      %5471 = vmatpush1.msra.mxu0 0.0
      %5472 = vmatprep.subr.mxu0 0.0
      %5473 = vmatpush1.msra.mxu0 0.0
      %5474 = vmatprep.subr.mxu0 0.0
      %5475 = vmatpush1.msra.mxu0 0.0
      %5476 = vmatprep.subr.mxu0 0.0
      %5477 = vmatpush1.msra.mxu0 0.0
      %5478 = vmatprep.subr.mxu0 0.0
      %5479 = vmatpush1.msra.mxu0 0.0
      %5480 = vmatprep.subr.mxu0 0.0
      %5481 = vmatpush1.msra.mxu0 0.0
      %5482 = vmatprep.subr.mxu0 0.0
      %5483 = vmatpush1.msra.mxu0 0.0
      %5484 = vmatprep.subr.mxu0 0.0
      %5485 = vmatpush1.msra.mxu0 0.0
      %5486 = vmatprep.subr.mxu0 0.0
      %5487 = vmatpush1.msra.mxu0 0.0
      %5488 = vmatprep.subr.mxu0 0.0
      %5489 = vmatpush1.msra.mxu0 0.0
      %5490 = vmatprep.subr.mxu0 0.0
      %5491 = vmatpush1.msra.mxu0 0.0
      %5492 = vmatprep.subr.mxu0 0.0
      %5493 = vmatpush1.msra.mxu0 0.0
      %5494 = vmatprep.subr.mxu0 0.0
      %5495 = vmatpush1.msra.mxu0 0.0
      %5496 = vmatprep.subr.mxu0 0.0
      %5497 = vmatpush1.msra.mxu0 0.0
      %5498 = vmatprep.mubr.f32.mxu0 0.0
      %5499 = vmatmul.mubr.f32.gmra.mrb[0].mxu0 %v5290
      %v5500 = vpop.f32.mrb[0].mxu0
      %v5501 = vadd.f32 0.0, %v5500
      %v5502 = vpop.f32.mrb[0].mxu0
      %v5503 = vadd.f32 0.0, %v5502
      %5504 = vdwg.mxu0
      %5505 = vmatprep.subr.mxu0 %v5264
      %5506 = vmatpush1.msra.mxu0 %v5263
      %5507 = vmatprep.subr.mxu0 %v5272
      %5508 = vmatpush1.msra.mxu0 %v5271
      %5509 = vmatprep.subr.mxu0 %v5280
      %5510 = vmatpush1.msra.mxu0 %v5279
      %5511 = vmatprep.subr.mxu0 %v5288
      %5512 = vmatpush1.msra.mxu0 %v5287
      %5513 = vmatprep.subr.mxu0 0.0
      %5514 = vmatpush1.msra.mxu0 0.0
      %5515 = vmatprep.subr.mxu0 0.0
      %5516 = vmatpush1.msra.mxu0 0.0
      %5517 = vmatprep.subr.mxu0 0.0
      %5518 = vmatpush1.msra.mxu0 0.0
      %5519 = vmatprep.subr.mxu0 0.0
      %5520 = vmatpush1.msra.mxu0 0.0
      %5521 = vmatprep.subr.mxu0 0.0
      %5522 = vmatpush1.msra.mxu0 0.0
      %5523 = vmatprep.subr.mxu0 0.0
      %5524 = vmatpush1.msra.mxu0 0.0
      %5525 = vmatprep.subr.mxu0 0.0
      %5526 = vmatpush1.msra.mxu0 0.0
      %5527 = vmatprep.subr.mxu0 0.0
      %5528 = vmatpush1.msra.mxu0 0.0
      %5529 = vmatprep.subr.mxu0 0.0
      %5530 = vmatpush1.msra.mxu0 0.0
      %5531 = vmatprep.subr.mxu0 0.0
      %5532 = vmatpush1.msra.mxu0 0.0
      %5533 = vmatprep.subr.mxu0 0.0
      %5534 = vmatpush1.msra.mxu0 0.0
      %5535 = vmatprep.subr.mxu0 0.0
      %5536 = vmatpush1.msra.mxu0 0.0
      %5537 = vmatprep.subr.mxu0 0.0
      %5538 = vmatpush1.msra.mxu0 0.0
      %5539 = vmatprep.subr.mxu0 0.0
      %5540 = vmatpush1.msra.mxu0 0.0
      %5541 = vmatprep.subr.mxu0 0.0
      %5542 = vmatpush1.msra.mxu0 0.0
      %5543 = vmatprep.subr.mxu0 0.0
      %5544 = vmatpush1.msra.mxu0 0.0
      %5545 = vmatprep.subr.mxu0 0.0
      %5546 = vmatpush1.msra.mxu0 0.0
      %5547 = vmatprep.subr.mxu0 0.0
      %5548 = vmatpush1.msra.mxu0 0.0
      %5549 = vmatprep.subr.mxu0 0.0
      %5550 = vmatpush1.msra.mxu0 0.0
      %5551 = vmatprep.subr.mxu0 0.0
      %5552 = vmatpush1.msra.mxu0 0.0
      %5553 = vmatprep.subr.mxu0 0.0
      %5554 = vmatpush1.msra.mxu0 0.0
      %5555 = vmatprep.subr.mxu0 0.0
      %5556 = vmatpush1.msra.mxu0 0.0
      %5557 = vmatprep.subr.mxu0 0.0
      %5558 = vmatpush1.msra.mxu0 0.0
      %5559 = vmatprep.subr.mxu0 0.0
      %5560 = vmatpush1.msra.mxu0 0.0
      %5561 = vmatprep.subr.mxu0 0.0
      %5562 = vmatpush1.msra.mxu0 0.0
      %5563 = vmatprep.subr.mxu0 0.0
      %5564 = vmatpush1.msra.mxu0 0.0
      %5565 = vmatprep.subr.mxu0 0.0
      %5566 = vmatpush1.msra.mxu0 0.0
      %5567 = vmatprep.subr.mxu0 0.0
      %5568 = vmatpush1.msra.mxu0 0.0
      %5569 = vmatprep.mubr.f32.mxu0 0.0
      %5570 = vmatmul.mubr.f32.gmra.mrb[0].mxu0 %v5290
      %v5571 = vpop.f32.mrb[0].mxu0
      %v5572 = vadd.f32 0.0, %v5571
      %v5573 = vpop.f32.mrb[0].mxu0
      %v5574 = vadd.f32 0.0, %v5573
      %5575 = vdwg.mxu0
      %v5576 = vadd.f32 %v5153, %v5359
      %v5577 = vadd.f32 %v5154, %v5361
      %v5578 = vadd.f32 %v5155, %v5430
      %v5579 = vadd.f32 %v5156, %v5432
      %v5580 = vadd.f32 %v5157, %v5501
      %v5581 = vadd.f32 %v5158, %v5503
      %v5582 = vadd.f32 %v5159, %v5572
      %v5583 = vadd.f32 %v5160, %v5574
      %v5584 = vld [vmem:[%s9] sm:$0xff]
      %v5586 = vlaneseq
      %v5587 = vshrl.u32 %v5586, 7
      %v5588 = vsub.s32 0, %v5587
      %v5589 = vrot.slane %v5584, %v5588
      %v5590 = vlaneseq
      %v5591 = vshrl.u32 %v5590, 7
      %v5592 = vsub.s32 1, %v5591
      %v5593 = vrot.slane %v5584, %v5592
      %v5594 = vlaneseq
      %v5595 = vshrl.u32 %v5594, 7
      %v5596 = vsub.s32 2, %v5595
      %v5597 = vrot.slane %v5584, %v5596
      %v5598 = vlaneseq
      %v5599 = vshrl.u32 %v5598, 7
      %v5600 = vsub.s32 3, %v5599
      %v5601 = vrot.slane %v5584, %v5600
      %v5602 = vlaneseq
      %v5603 = vshrl.u32 %v5602, 7
      %v5604 = vsub.s32 4, %v5603
      %v5605 = vrot.slane %v5584, %v5604
      %v5606 = vlaneseq
      %v5607 = vshrl.u32 %v5606, 7
      %v5608 = vsub.s32 5, %v5607
      %v5609 = vrot.slane %v5584, %v5608
      %v5610 = vlaneseq
      %v5611 = vshrl.u32 %v5610, 7
      %v5612 = vsub.s32 6, %v5611
      %v5613 = vrot.slane %v5584, %v5612
      %v5614 = vlaneseq
      %v5615 = vshrl.u32 %v5614, 7
      %v5616 = vsub.s32 7, %v5615
      %v5617 = vrot.slane %v5584, %v5616
      %v5626 = vadd.f32 %v5576, %v5589
      %v5627 = vadd.f32 %v5577, %v5593
      %v5628 = vadd.f32 %v5578, %v5597
      %v5629 = vadd.f32 %v5579, %v5601
      %v5630 = vadd.f32 %v5580, %v5605
      %v5631 = vadd.f32 %v5581, %v5609
      %v5632 = vadd.f32 %v5582, %v5613
      %v5633 = vadd.f32 %v5583, %v5617
      %v5634 = vmax.f32 %v5626, 0.0
      %v5635 = vmax.f32 %v5627, 0.0
      %v5636 = vmax.f32 %v5628, 0.0
      %v5637 = vmax.f32 %v5629, 0.0
      %v5638 = vmax.f32 %v5630, 0.0
      %v5639 = vmax.f32 %v5631, 0.0
      %v5640 = vmax.f32 %v5632, 0.0
      %v5641 = vmax.f32 %v5633, 0.0
      %5642 = vst [vmem:[%s399] sm:$0xff] %v5634
      %5643 = vst [vmem:[%s399 + $0x8] sm:$0xff] %v5635
      %5644 = vst [vmem:[%s399 + $0x10] sm:$0xff] %v5636
      %5645 = vst [vmem:[%s399 + $0x18] sm:$0xff] %v5637
      %5646 = vst [vmem:[%s399 + $0x20] sm:$0xff] %v5638
      %5647 = vst [vmem:[%s399 + $0x28] sm:$0xff] %v5639
      %5648 = vst [vmem:[%s399 + $0x30] sm:$0xff] %v5640
      %5649 = vst [vmem:[%s399 + $0x38] sm:$0xff] %v5641
      %p5650 = scmp.lt.s32.totalorder %s21, 1
      %s5651 = scalar_select %p5650, %s21, 1
      %s5652 = smul.addr %s5651, 8
      %s5653 = smul.addr %s5652, 8
      %s5654 = scalar_lea.vmem %s10, %s5653
      // Predicated region
      $region61: #{linear_kernel_network.1} parent=59 // pred_check
        %p5655 = pneg %p264
      $region62: #{linear_kernel_network.1} parent=59 // pred_check_branch
        %5657 = sbr.rel (%p5655) target = $region64
      $region63: #{linear_kernel_network.1} parent=59 // pred_region
        _
      $region64: #{linear_kernel_network.1} parent=59 // pred_fallthru
        _
    $region60: #{linear_kernel_network.1} parent=5 // pred_fallthru
      _
    %p5658 = scmp.le.s32.totalorder 2, %s16
    // Predicated region
    $region65: #{linear_kernel_network.1} parent=5 // pred_check
      %p5659 = pneg %p5658
    $region66: #{linear_kernel_network.1} parent=5 // pred_check_branch
      %5661 = sbr.rel (%p5659) target = $region68
    $region67: #{linear_kernel_network.1} parent=5 // pred_region
      %s5662 = ssub.s32 %s16, 2
      // Predicated region
      $region69: #{linear_kernel_network.1} parent=67 // pred_check
        %p5663 = pneg %p270
      $region70: #{linear_kernel_network.1} parent=67 // pred_check_branch
        %5665 = sbr.rel (%p5663) target = $region72
      $region71: #{linear_kernel_network.1} parent=67 // pred_region
        %p5666 = scmp.lt.s32.totalorder %s22, 1
        %s5667 = scalar_select %p5666, %s22, 1
        %s5668 = smul.addr %s5667, 8
        %s5669 = smul.addr %s5668, 8
        %s5670 = scalar_lea.vmem %s10, %s5669
      $region72: #{linear_kernel_network.1} parent=67 // pred_fallthru
        _
    $region68: #{linear_kernel_network.1} parent=5 // pred_fallthru
      _
  $region6: #{linear_kernel_network.1} parent=0 // loop_footer
    %s20 = sadd.s32 1, %s16
  $region7: #{linear_kernel_network.1} parent=0 // loop_footer_branch
    %15 = sbr.rel target = $region3
  $region8: #{linear_kernel_network.1} parent=0 // loop_exit
    _

</llo_original>
